<compile_context>
chip_gen: v7x
topology: tpu7x:2x2x1
jax: 0.10.0
libtpu: 0.0.40
codegen_flags: <defaults>
</compile_context>

<pallas_src>
import functools

import jax
import jax.numpy as jnp
from jax.experimental import pallas as pl
from jax.experimental.pallas import tpu as pltpu


_VMEM_LIMIT = 32 * 1024 * 1024  # explicit scoped-VMEM cap, safe on v5e/v6e/v7x


def _round_up(x, m):
    return (x + m - 1) // m * m


# --------------------------------------------------------------------------
# Kernel 1: tiled GEMM + bias (used for ConvTranspose3d k=2 s=2)
# --------------------------------------------------------------------------
def _gemm_bias_kernel(x_ref, w_ref, b_ref, o_ref, acc_ref):
    k = pl.program_id(2)

    @pl.when(k == 0)
    def _init():
        acc_ref[...] = jnp.zeros_like(acc_ref)

    acc_ref[...] += jnp.dot(x_ref[...], w_ref[...],
                            preferred_element_type=jnp.float32)

    @pl.when(k == pl.num_programs(2) - 1)
    def _finalize():
        o_ref[...] = (acc_ref[...] + b_ref[...]).astype(o_ref.dtype)


def _tiled_gemm_bias(x, w, bias, out_dtype=jnp.bfloat16):
    """x: (M, K) bf16, w: (K, N) bf16, bias: (N,) -> (M, N) out_dtype."""
    m, k = x.shape
    n = w.shape[1]
    kp = _round_up(k, 128)
    n_p = _round_up(n, 128)
    # MXU-friendly, lane-dense tile sizes that divide the padded extents.
    tk = 512 if kp % 512 == 0 else (256 if kp % 256 == 0 else 128)
    tn = 256 if n_p % 256 == 0 else 128
    tm = min(512, _round_up(m, 8))
    mp = _round_up(m, tm)

    xp = jnp.pad(x, ((0, mp - m), (0, kp - k)))
    wp = jnp.pad(w, ((0, kp - k), (0, n_p - n)))
    bp = jnp.pad(bias.astype(jnp.float32), (0, n_p - n)).reshape(1, n_p)

    out = pl.pallas_call(
        _gemm_bias_kernel,
        out_shape=jax.ShapeDtypeStruct((mp, n_p), out_dtype),
        grid=(mp // tm, n_p // tn, kp // tk),
        in_specs=[
            pl.BlockSpec((tm, tk), lambda i, j, kk: (i, kk)),
            pl.BlockSpec((tk, tn), lambda i, j, kk: (kk, j)),
            pl.BlockSpec((1, tn), lambda i, j, kk: (0, j)),
        ],
        out_specs=pl.BlockSpec((tm, tn), lambda i, j, kk: (i, j)),
        scratch_shapes=[pltpu.VMEM((tm, tn), jnp.float32)],
        compiler_params=pltpu.CompilerParams(
            dimension_semantics=("parallel", "parallel", "arbitrary"),
            vmem_limit_bytes=_VMEM_LIMIT),
    )(xp, wp, bp)
    return out[:m, :n]


# --------------------------------------------------------------------------
# Kernel 2: direct Conv3d(k=3, p=1) + folded BN + ReLU (no HBM im2col)
# --------------------------------------------------------------------------
def _conv3x3_bn_relu_kernel(x_ref, w_ref, s_ref, b_ref, o_ref, acc_ref, *, H, W):
    # x_ref: (1, H+2, W+2, Cin)   one padded depth-plane (d_out + kd)
    # w_ref: (1, 9, Cin, Cout)    the 9 (kh, kw) taps for this kd
    # s_ref/b_ref: (1, Cout)      folded BN scale / shift
    # o_ref: (1, H*W, Cout)       output plane (revisited across kd)
    # acc_ref: (H*W, Cout) f32    accumulator scratch
    kd = pl.program_id(2)

    @pl.when(kd == 0)
    def _init():
        acc_ref[...] = jnp.zeros_like(acc_ref)

    cin = x_ref.shape[-1]
    for t in range(9):
        kh, kw = t // 3, t % 3
        win = x_ref[0, kh:kh + H, kw:kw + W, :].reshape(H * W, cin)
        acc_ref[...] += jnp.dot(win, w_ref[0, t],
                                preferred_element_type=jnp.float32)

    @pl.when(kd == pl.num_programs(2) - 1)
    def _finalize():
        y = acc_ref[...] * s_ref[...] + b_ref[...]   # f32 epilogue (v5e-safe)
        o_ref[0] = jnp.maximum(y, 0.0).astype(o_ref.dtype)


def _conv3x3_bn_relu(x_ndhwc, w_oikkk, scale, bias, out_dtype):
    """Conv3d(k=3, p=1) + folded BN + ReLU. x: (N,D,H,W,Cin) -> (N,D,H,W,Cout)."""
    n, d, h, w, cin = x_ndhwc.shape
    cout = w_oikkk.shape[0]
    cin_p = _round_up(cin, 128)
    cout_p = _round_up(cout, 128)
    dp, hp, wp = d + 2, h + 2, w + 2
    hw = h * w

    # Spatial halo pad + lane-dense channel pad, flatten (N, D+2) -> one axis.
    xp = jnp.pad(x_ndhwc.astype(jnp.bfloat16),
                 ((0, 0), (1, 1), (1, 1), (1, 1), (0, cin_p - cin)))
    xp = xp.reshape(n * dp, hp, wp, cin_p)

    # (Cout, Cin, kd, kh, kw) -> (kd, kh*kw, Cin, Cout), zero-padded channels.
    wt = jnp.transpose(w_oikkk, (2, 3, 4, 1, 0)).reshape(3, 9, cin, cout)
    wt = jnp.pad(wt, ((0, 0), (0, 0), (0, cin_p - cin), (0, cout_p - cout)))
    wt = wt.astype(jnp.bfloat16)
    s2 = jnp.pad(scale.astype(jnp.float32), (0, cout_p - cout)).reshape(1, cout_p)
    b2 = jnp.pad(bias.astype(jnp.float32), (0, cout_p - cout)).reshape(1, cout_p)

    kernel = functools.partial(_conv3x3_bn_relu_kernel, H=h, W=w)
    out = pl.pallas_call(
        kernel,
        out_shape=jax.ShapeDtypeStruct((n * d, hw, cout_p), out_dtype),
        grid=(n, d, 3),
        in_specs=[
            pl.BlockSpec((1, hp, wp, cin_p),
                         lambda i, j, kd: (i * dp + j + kd, 0, 0, 0)),
            pl.BlockSpec((1, 9, cin_p, cout_p),
                         lambda i, j, kd: (kd, 0, 0, 0)),
            pl.BlockSpec((1, cout_p), lambda i, j, kd: (0, 0)),
            pl.BlockSpec((1, cout_p), lambda i, j, kd: (0, 0)),
        ],
        out_specs=pl.BlockSpec((1, hw, cout_p),
                               lambda i, j, kd: (i * d + j, 0, 0)),
        scratch_shapes=[pltpu.VMEM((hw, cout_p), jnp.float32)],
        compiler_params=pltpu.CompilerParams(
            dimension_semantics=("parallel", "parallel", "arbitrary"),
            vmem_limit_bytes=_VMEM_LIMIT),
    )(xp, wt, s2, b2)
    return out.reshape(n, d, h, w, cout_p)[..., :cout]


# --------------------------------------------------------------------------
# ConvTranspose3d(k=2, s=2) via the tiled GEMM kernel
# --------------------------------------------------------------------------
def _conv_transpose_k2s2(x_ndhwc, wt_iokkk, b):
    """x: (N,D,H,W,Cin) -> (N,2D,2H,2W,Cout) in bf16."""
    n, d, h, w, cin = x_ndhwc.shape
    cout = wt_iokkk.shape[1]
    # (Cin, Cout, kd, kh, kw) -> (Cin, kd, kh, kw, Cout) -> (Cin, 8*Cout)
    w2 = jnp.transpose(wt_iokkk, (0, 2, 3, 4, 1)).reshape(cin, 8 * cout)
    b2 = jnp.tile(b, 8)                                    # co fastest
    y = _tiled_gemm_bias(
        x_ndhwc.reshape(n * d * h * w, cin).astype(jnp.bfloat16),
        w2.astype(jnp.bfloat16), b2, out_dtype=jnp.bfloat16)   # (M, 8*Cout)
    y = y.reshape(n, d, h, w, 2, 2, 2, cout)
    y = jnp.transpose(y, (0, 1, 4, 2, 5, 3, 6, 7))         # (N, D,2, H,2, W,2, Co)
    return y.reshape(n, 2 * d, 2 * h, 2 * w, cout)


# --------------------------------------------------------------------------
# Parameter init (deterministic, matching nn.Module shapes)
# --------------------------------------------------------------------------
def _fold_bn(conv_bias, gamma, beta, mean, var, eps=1e-5):
    scale = gamma / jnp.sqrt(var + eps)
    bias = (conv_bias - mean) * scale + beta
    return scale, bias


def init_params(key, in_ch, skip_ch, out_ch):
    ks = jax.random.split(key, 12)
    cat_ch = in_ch + skip_ch
    p = {}
    # ConvTranspose3d(in_ch, in_ch, k=2, s=2): weight (in_ch, in_ch, 2, 2, 2)
    p["up_w"] = 0.1 * jax.random.normal(ks[0], (in_ch, in_ch, 2, 2, 2), jnp.float32)
    p["up_b"] = 0.1 * jax.random.normal(ks[1], (in_ch,), jnp.float32)
    # DoubleConv conv1: Conv3d(cat_ch, out_ch, 3) + BN(out_ch)
    p["c1_w"] = 0.1 * jax.random.normal(ks[2], (out_ch, cat_ch, 3, 3, 3), jnp.float32)
    c1_b = 0.1 * jax.random.normal(ks[3], (out_ch,), jnp.float32)
    g1 = 1.0 + 0.05 * jax.random.normal(ks[4], (out_ch,), jnp.float32)
    be1 = 0.05 * jax.random.normal(ks[5], (out_ch,), jnp.float32)
    m1 = 0.05 * jax.random.normal(ks[6], (out_ch,), jnp.float32)
    v1 = 1.0 + 0.1 * jax.random.uniform(ks[7], (out_ch,), jnp.float32)
    p["c1_scale"], p["c1_bias"] = _fold_bn(c1_b, g1, be1, m1, v1)
    # DoubleConv conv2: Conv3d(out_ch, out_ch, 3) + BN(out_ch)
    p["c2_w"] = 0.1 * jax.random.normal(ks[8], (out_ch, out_ch, 3, 3, 3), jnp.float32)
    c2_b = 0.1 * jax.random.normal(ks[9], (out_ch,), jnp.float32)
    g2 = 1.0 + 0.05 * jax.random.normal(ks[10], (out_ch,), jnp.float32)
    be2 = 0.05 * jax.random.normal(ks[11], (out_ch,), jnp.float32)
    m2 = jnp.zeros((out_ch,), jnp.float32)
    v2 = jnp.ones((out_ch,), jnp.float32)
    p["c2_scale"], p["c2_bias"] = _fold_bn(c2_b, g2, be2, m2, v2)
    return p


# --------------------------------------------------------------------------
# Up.forward
# --------------------------------------------------------------------------
@jax.jit
def up_forward(params, x1_ncdhw, x2_ncdhw):
    # NCDHW -> NDHWC
    x1 = jnp.transpose(x1_ncdhw, (0, 2, 3, 4, 1))
    x2 = jnp.transpose(x2_ncdhw, (0, 2, 3, 4, 1))
    # x1 = self.up(x1)
    x1u = _conv_transpose_k2s2(x1, params["up_w"], params["up_b"])
    # x = torch.cat([x2, x1], dim=1)  (channel dim == last dim here)
    x = jnp.concatenate([x2.astype(jnp.bfloat16), x1u], axis=-1)
    # x = self.conv(x)  (DoubleConv); bf16 between the two convs, f32 out
    x = _conv3x3_bn_relu(x, params["c1_w"], params["c1_scale"], params["c1_bias"],
                         out_dtype=jnp.bfloat16)
    x = _conv3x3_bn_relu(x, params["c2_w"], params["c2_scale"], params["c2_bias"],
                         out_dtype=jnp.float32)
    # back to NCDHW
    return jnp.transpose(x, (0, 4, 1, 2, 3))


if __name__ == "__main__":
    key = jax.random.PRNGKey(0)
    kp, k1, k2 = jax.random.split(key, 3)

    batch, in_ch, skip_ch, out_ch = 2, 4, 4, 8
    d, h, w = 4, 4, 4  # x1 spatial; skip (x2) spatial is 2x along each axis

    params = init_params(kp, in_ch, skip_ch, out_ch)
    x1 = jax.random.normal(k1, (batch, in_ch, d, h, w), jnp.float32)
    x2 = jax.random.normal(k2, (batch, skip_ch, 2 * d, 2 * h, 2 * w), jnp.float32)

    out = up_forward(params, x1, x2)
    out = jax.block_until_ready(out)

    assert out.shape == (batch, out_ch, 2 * d, 2 * h, 2 * w), out.shape
    assert bool(jnp.all(jnp.isfinite(out)))
    assert bool(jnp.all(out >= 0.0))  # final ReLU
    print("KERNEL_OK")
</pallas_src>

<mosaic_0001>
module attributes {stable_mosaic.version = 11 : i64} {
  func.func @_gemm_bias_kernel(%arg0: i32, %arg1: i32, %arg2: i32, %arg3: memref<128x128xbf16, #tpu.memory_space<vmem>>, %arg4: memref<128x128xbf16, #tpu.memory_space<vmem>>, %arg5: memref<1x128xf32, #tpu.memory_space<vmem>>, %arg6: memref<128x128xbf16, #tpu.memory_space<vmem>>, %arg7: memref<128x128xf32, #tpu.memory_space<vmem>>) attributes {dimension_semantics = [#tpu.dimension_semantics<parallel>, #tpu.dimension_semantics<parallel>, #tpu.dimension_semantics<arbitrary>], iteration_bounds = array<i64: 1, 1, 1>, scalar_prefetch = 0 : i64, scratch_operands = 1 : i64, tpu.core_type = #tpu.core_type<tc>, window_params = [{transform_indices = @transform_0, window_bounds = array<i64: 128, 128>}, {transform_indices = @transform_1, window_bounds = array<i64: 128, 128>}, {transform_indices = @transform_2, window_bounds = array<i64: 1, 128>}, {transform_indices = @transform_3, window_bounds = array<i64: 128, 128>}]} {
    %c0_i32 = arith.constant 0 : i32
    %0 = arith.cmpi eq, %arg2, %c0_i32 : i32
    %1 = arith.extui %0 : i1 to i32
    %c0_i32_0 = arith.constant 0 : i32
    %2 = arith.cmpi ne, %1, %c0_i32_0 : i32
    scf.if %2 {
      %cst_10 = arith.constant 0.000000e+00 : f32
      %12 = vector.broadcast %cst_10 : f32 to vector<128x128xf32>
      %c0_11 = arith.constant 0 : index
      %c0_12 = arith.constant 0 : index
      %13 = vector.load %arg7[%c0_11, %c0_12] : memref<128x128xf32, #tpu.memory_space<vmem>>, vector<128x128xf32>
      tpu.vector_store %arg7[%c0_11, %c0_12], %12 {strides = array<i32>} : memref<128x128xf32, #tpu.memory_space<vmem>>, vector<128x128xf32>,
    } else {
    }
    %c0 = arith.constant 0 : index
    %c0_1 = arith.constant 0 : index
    %3 = vector.load %arg7[%c0, %c0_1] : memref<128x128xf32, #tpu.memory_space<vmem>>, vector<128x128xf32>
    %c0_2 = arith.constant 0 : index
    %c0_3 = arith.constant 0 : index
    %4 = vector.load %arg3[%c0_2, %c0_3] : memref<128x128xbf16, #tpu.memory_space<vmem>>, vector<128x128xbf16>
    %c0_4 = arith.constant 0 : index
    %c0_5 = arith.constant 0 : index
    %5 = vector.load %arg4[%c0_4, %c0_5] : memref<128x128xbf16, #tpu.memory_space<vmem>>, vector<128x128xbf16>
    %cst = arith.constant dense<0.000000e+00> : vector<128x128xf32>
    %6 = tpu.matmul %4, %5, %cst {dimension_numbers = #tpu.dot_dimension_numbers<[1], [0], [0], [1], [0, 0, 1, 1], [], []>} : vector<128x128xbf16>, vector<128x128xbf16>, vector<128x128xf32> -> vector<128x128xf32>
    %7 = arith.addf %3, %6 : vector<128x128xf32>
    %c0_6 = arith.constant 0 : index
    %c0_7 = arith.constant 0 : index
    %8 = vector.load %arg7[%c0_6, %c0_7] : memref<128x128xf32, #tpu.memory_space<vmem>>, vector<128x128xf32>
    tpu.vector_store %arg7[%c0_6, %c0_7], %7 {strides = array<i32>} : memref<128x128xf32, #tpu.memory_space<vmem>>, vector<128x128xf32>,
    %c0_i32_8 = arith.constant 0 : i32
    %9 = arith.cmpi eq, %arg2, %c0_i32_8 : i32
    %10 = arith.extui %9 : i1 to i32
    %c0_i32_9 = arith.constant 0 : i32
    %11 = arith.cmpi ne, %10, %c0_i32_9 : i32
    scf.if %11 {
      %c0_10 = arith.constant 0 : index
      %c0_11 = arith.constant 0 : index
      %12 = vector.load %arg7[%c0_10, %c0_11] : memref<128x128xf32, #tpu.memory_space<vmem>>, vector<128x128xf32>
      %c0_12 = arith.constant 0 : index
      %c0_13 = arith.constant 0 : index
      %13 = vector.load %arg5[%c0_12, %c0_13] : memref<1x128xf32, #tpu.memory_space<vmem>>, vector<1x128xf32>
      %14 = vector.broadcast %13 : vector<1x128xf32> to vector<128x128xf32>
      %15 = arith.addf %12, %14 : vector<128x128xf32>
      %16 = arith.truncf %15 : vector<128x128xf32> to vector<128x128xbf16>
      %c0_14 = arith.constant 0 : index
      %c0_15 = arith.constant 0 : index
      %17 = vector.load %arg6[%c0_14, %c0_15] : memref<128x128xbf16, #tpu.memory_space<vmem>>, vector<128x128xbf16>
      tpu.vector_store %arg6[%c0_14, %c0_15], %16 {strides = array<i32>} : memref<128x128xbf16, #tpu.memory_space<vmem>>, vector<128x128xbf16>,
    } else {
    }
    return
  }
  func.func @transform_0(%arg0: i32, %arg1: i32, %arg2: i32) -> (i32, i32) {
    %c0_i32 = arith.constant 0 : i32
    return %arg0, %arg2 : i32, i32
  }
  func.func @transform_1(%arg0: i32, %arg1: i32, %arg2: i32) -> (i32, i32) {
    %c0_i32 = arith.constant 0 : i32
    return %arg2, %arg1 : i32, i32
  }
  func.func @transform_2(%arg0: i32, %arg1: i32, %arg2: i32) -> (i32, i32) {
    %c0_i32 = arith.constant 0 : i32
    %c0_i32_0 = arith.constant 0 : i32
    return %c0_i32, %arg1 : i32, i32
  }
  func.func @transform_3(%arg0: i32, %arg1: i32, %arg2: i32) -> (i32, i32) {
    %c0_i32 = arith.constant 0 : i32
    return %arg0, %arg1 : i32, i32
  }
}

module attributes {stable_mosaic.version = 11 : i64} {
  func.func @_conv3x3_bn_relu_kernel(%arg0: i32, %arg1: i32, %arg2: i32, %arg3: memref<1x10x10x128xbf16, #tpu.memory_space<vmem>>, %arg4: memref<1x9x128x128xbf16, #tpu.memory_space<vmem>>, %arg5: memref<1x128xf32, #tpu.memory_space<vmem>>, %arg6: memref<1x128xf32, #tpu.memory_space<vmem>>, %arg7: memref<1x64x128xbf16, #tpu.memory_space<vmem>>, %arg8: memref<64x128xf32, #tpu.memory_space<vmem>>) attributes {dimension_semantics = [#tpu.dimension_semantics<parallel>, #tpu.dimension_semantics<parallel>, #tpu.dimension_semantics<arbitrary>], iteration_bounds = array<i64: 2, 8, 3>, scalar_prefetch = 0 : i64, scratch_operands = 1 : i64, tpu.core_type = #tpu.core_type<tc>, window_params = [{transform_indices = @transform_0, window_bounds = array<i64: 1, 10, 10, 128>}, {transform_indices = @transform_1, window_bounds = array<i64: 1, 9, 128, 128>}, {pipeline_mode = #tpu.pipeline_mode<synchronous>, transform_indices = @transform_2, window_bounds = array<i64: 1, 128>}, {pipeline_mode = #tpu.pipeline_mode<synchronous>, transform_indices = @transform_3, window_bounds = array<i64: 1, 128>}, {transform_indices = @transform_4, window_bounds = array<i64: 1, 64, 128>}]} {
    %c0_i32 = arith.constant 0 : i32
    %0 = arith.cmpi eq, %arg2, %c0_i32 : i32
    %1 = arith.extui %0 : i1 to i32
    %c0_i32_0 = arith.constant 0 : i32
    %2 = arith.cmpi ne, %1, %c0_i32_0 : i32
    scf.if %2 {
      %cst_109 = arith.constant 0.000000e+00 : f32
      %87 = vector.broadcast %cst_109 : f32 to vector<64x128xf32>
      %c0_110 = arith.constant 0 : index
      %c0_111 = arith.constant 0 : index
      %88 = vector.load %arg8[%c0_110, %c0_111] : memref<64x128xf32, #tpu.memory_space<vmem>>, vector<64x128xf32>
      tpu.vector_store %arg8[%c0_110, %c0_111], %87 {strides = array<i32>} : memref<64x128xf32, #tpu.memory_space<vmem>>, vector<64x128xf32>,
    } else {
    }
    %c0 = arith.constant 0 : index
    %c0_1 = arith.constant 0 : index
    %c0_2 = arith.constant 0 : index
    %c0_3 = arith.constant 0 : index
    %3 = vector.load %arg3[%c0, %c0_1, %c0_2, %c0_3] : memref<1x10x10x128xbf16, #tpu.memory_space<vmem>>, vector<1x8x8x128xbf16>
    %4 = vector.shape_cast %3 : vector<1x8x8x128xbf16> to vector<8x8x128xbf16>
    %5 = vector.shape_cast %4 : vector<8x8x128xbf16> to vector<64x128xbf16>
    %c0_4 = arith.constant 0 : index
    %c0_5 = arith.constant 0 : index
    %6 = vector.load %arg8[%c0_4, %c0_5] : memref<64x128xf32, #tpu.memory_space<vmem>>, vector<64x128xf32>
    %c0_6 = arith.constant 0 : index
    %c0_7 = arith.constant 0 : index
    %c0_8 = arith.constant 0 : index
    %c0_9 = arith.constant 0 : index
    %7 = vector.load %arg4[%c0_6, %c0_7, %c0_8, %c0_9] : memref<1x9x128x128xbf16, #tpu.memory_space<vmem>>, vector<1x1x128x128xbf16>
    %8 = vector.shape_cast %7 : vector<1x1x128x128xbf16> to vector<128x128xbf16>
    %cst = arith.constant dense<0.000000e+00> : vector<64x128xf32>
    %9 = tpu.matmul %5, %8, %cst {dimension_numbers = #tpu.dot_dimension_numbers<[1], [0], [0], [1], [0, 0, 1, 1], [], []>} : vector<64x128xbf16>, vector<128x128xbf16>, vector<64x128xf32> -> vector<64x128xf32>
    %10 = arith.addf %6, %9 : vector<64x128xf32>
    %c0_10 = arith.constant 0 : index
    %c0_11 = arith.constant 0 : index
    %11 = vector.load %arg8[%c0_10, %c0_11] : memref<64x128xf32, #tpu.memory_space<vmem>>, vector<64x128xf32>
    tpu.vector_store %arg8[%c0_10, %c0_11], %10 {strides = array<i32>} : memref<64x128xf32, #tpu.memory_space<vmem>>, vector<64x128xf32>,
    %c0_12 = arith.constant 0 : index
    %c0_13 = arith.constant 0 : index
    %c1 = arith.constant 1 : index
    %c0_14 = arith.constant 0 : index
    %12 = vector.load %arg3[%c0_12, %c0_13, %c1, %c0_14] : memref<1x10x10x128xbf16, #tpu.memory_space<vmem>>, vector<1x8x8x128xbf16>
    %13 = vector.shape_cast %12 : vector<1x8x8x128xbf16> to vector<8x8x128xbf16>
    %14 = vector.shape_cast %13 : vector<8x8x128xbf16> to vector<64x128xbf16>
    %c0_15 = arith.constant 0 : index
    %c0_16 = arith.constant 0 : index
    %15 = vector.load %arg8[%c0_15, %c0_16] : memref<64x128xf32, #tpu.memory_space<vmem>>, vector<64x128xf32>
    %c0_17 = arith.constant 0 : index
    %c1_18 = arith.constant 1 : index
    %c0_19 = arith.constant 0 : index
    %c0_20 = arith.constant 0 : index
    %16 = vector.load %arg4[%c0_17, %c1_18, %c0_19, %c0_20] : memref<1x9x128x128xbf16, #tpu.memory_space<vmem>>, vector<1x1x128x128xbf16>
    %17 = vector.shape_cast %16 : vector<1x1x128x128xbf16> to vector<128x128xbf16>
    %cst_21 = arith.constant dense<0.000000e+00> : vector<64x128xf32>
    %18 = tpu.matmul %14, %17, %cst_21 {dimension_numbers = #tpu.dot_dimension_numbers<[1], [0], [0], [1], [0, 0, 1, 1], [], []>} : vector<64x128xbf16>, vector<128x128xbf16>, vector<64x128xf32> -> vector<64x128xf32>
    %19 = arith.addf %15, %18 : vector<64x128xf32>
    %c0_22 = arith.constant 0 : index
    %c0_23 = arith.constant 0 : index
    %20 = vector.load %arg8[%c0_22, %c0_23] : memref<64x128xf32, #tpu.memory_space<vmem>>, vector<64x128xf32>
    tpu.vector_store %arg8[%c0_22, %c0_23], %19 {strides = array<i32>} : memref<64x128xf32, #tpu.memory_space<vmem>>, vector<64x128xf32>,
    %c0_24 = arith.constant 0 : index
    %c0_25 = arith.constant 0 : index
    %c2 = arith.constant 2 : index
    %c0_26 = arith.constant 0 : index
    %21 = vector.load %arg3[%c0_24, %c0_25, %c2, %c0_26] : memref<1x10x10x128xbf16, #tpu.memory_space<vmem>>, vector<1x8x8x128xbf16>
    %22 = vector.shape_cast %21 : vector<1x8x8x128xbf16> to vector<8x8x128xbf16>
    %23 = vector.shape_cast %22 : vector<8x8x128xbf16> to vector<64x128xbf16>
    %c0_27 = arith.constant 0 : index
    %c0_28 = arith.constant 0 : index
    %24 = vector.load %arg8[%c0_27, %c0_28] : memref<64x128xf32, #tpu.memory_space<vmem>>, vector<64x128xf32>
    %c0_29 = arith.constant 0 : index
    %c2_30 = arith.constant 2 : index
    %c0_31 = arith.constant 0 : index
    %c0_32 = arith.constant 0 : index
    %25 = vector.load %arg4[%c0_29, %c2_30, %c0_31, %c0_32] : memref<1x9x128x128xbf16, #tpu.memory_space<vmem>>, vector<1x1x128x128xbf16>
    %26 = vector.shape_cast %25 : vector<1x1x128x128xbf16> to vector<128x128xbf16>
    %cst_33 = arith.constant dense<0.000000e+00> : vector<64x128xf32>
    %27 = tpu.matmul %23, %26, %cst_33 {dimension_numbers = #tpu.dot_dimension_numbers<[1], [0], [0], [1], [0, 0, 1, 1], [], []>} : vector<64x128xbf16>, vector<128x128xbf16>, vector<64x128xf32> -> vector<64x128xf32>
    %28 = arith.addf %24, %27 : vector<64x128xf32>
    %c0_34 = arith.constant 0 : index
    %c0_35 = arith.constant 0 : index
    %29 = vector.load %arg8[%c0_34, %c0_35] : memref<64x128xf32, #tpu.memory_space<vmem>>, vector<64x128xf32>
    tpu.vector_store %arg8[%c0_34, %c0_35], %28 {strides = array<i32>} : memref<64x128xf32, #tpu.memory_space<vmem>>, vector<64x128xf32>,
    %c0_36 = arith.constant 0 : index
    %c1_37 = arith.constant 1 : index
    %c0_38 = arith.constant 0 : index
    %c0_39 = arith.constant 0 : index
    %30 = vector.load %arg3[%c0_36, %c1_37, %c0_38, %c0_39] : memref<1x10x10x128xbf16, #tpu.memory_space<vmem>>, vector<1x8x8x128xbf16>
    %31 = vector.shape_cast %30 : vector<1x8x8x128xbf16> to vector<8x8x128xbf16>
    %32 = vector.shape_cast %31 : vector<8x8x128xbf16> to vector<64x128xbf16>
    %c0_40 = arith.constant 0 : index
    %c0_41 = arith.constant 0 : index
    %33 = vector.load %arg8[%c0_40, %c0_41] : memref<64x128xf32, #tpu.memory_space<vmem>>, vector<64x128xf32>
    %c0_42 = arith.constant 0 : index
    %c3 = arith.constant 3 : index
    %c0_43 = arith.constant 0 : index
    %c0_44 = arith.constant 0 : index
    %34 = vector.load %arg4[%c0_42, %c3, %c0_43, %c0_44] : memref<1x9x128x128xbf16, #tpu.memory_space<vmem>>, vector<1x1x128x128xbf16>
    %35 = vector.shape_cast %34 : vector<1x1x128x128xbf16> to vector<128x128xbf16>
    %cst_45 = arith.constant dense<0.000000e+00> : vector<64x128xf32>
    %36 = tpu.matmul %32, %35, %cst_45 {dimension_numbers = #tpu.dot_dimension_numbers<[1], [0], [0], [1], [0, 0, 1, 1], [], []>} : vector<64x128xbf16>, vector<128x128xbf16>, vector<64x128xf32> -> vector<64x128xf32>
    %37 = arith.addf %33, %36 : vector<64x128xf32>
    %c0_46 = arith.constant 0 : index
    %c0_47 = arith.constant 0 : index
    %38 = vector.load %arg8[%c0_46, %c0_47] : memref<64x128xf32, #tpu.memory_space<vmem>>, vector<64x128xf32>
    tpu.vector_store %arg8[%c0_46, %c0_47], %37 {strides = array<i32>} : memref<64x128xf32, #tpu.memory_space<vmem>>, vector<64x128xf32>,
    %c0_48 = arith.constant 0 : index
    %c1_49 = arith.constant 1 : index
    %c1_50 = arith.constant 1 : index
    %c0_51 = arith.constant 0 : index
    %39 = vector.load %arg3[%c0_48, %c1_49, %c1_50, %c0_51] : memref<1x10x10x128xbf16, #tpu.memory_space<vmem>>, vector<1x8x8x128xbf16>
    %40 = vector.shape_cast %39 : vector<1x8x8x128xbf16> to vector<8x8x128xbf16>
    %41 = vector.shape_cast %40 : vector<8x8x128xbf16> to vector<64x128xbf16>
    %c0_52 = arith.constant 0 : index
    %c0_53 = arith.constant 0 : index
    %42 = vector.load %arg8[%c0_52, %c0_53] : memref<64x128xf32, #tpu.memory_space<vmem>>, vector<64x128xf32>
    %c0_54 = arith.constant 0 : index
    %c4 = arith.constant 4 : index
    %c0_55 = arith.constant 0 : index
    %c0_56 = arith.constant 0 : index
    %43 = vector.load %arg4[%c0_54, %c4, %c0_55, %c0_56] : memref<1x9x128x128xbf16, #tpu.memory_space<vmem>>, vector<1x1x128x128xbf16>
    %44 = vector.shape_cast %43 : vector<1x1x128x128xbf16> to vector<128x128xbf16>
    %cst_57 = arith.constant dense<0.000000e+00> : vector<64x128xf32>
    %45 = tpu.matmul %41, %44, %cst_57 {dimension_numbers = #tpu.dot_dimension_numbers<[1], [0], [0], [1], [0, 0, 1, 1], [], []>} : vector<64x128xbf16>, vector<128x128xbf16>, vector<64x128xf32> -> vector<64x128xf32>
    %46 = arith.addf %42, %45 : vector<64x128xf32>
    %c0_58 = arith.constant 0 : index
    %c0_59 = arith.constant 0 : index
    %47 = vector.load %arg8[%c0_58, %c0_59] : memref<64x128xf32, #tpu.memory_space<vmem>>, vector<64x128xf32>
    tpu.vector_store %arg8[%c0_58, %c0_59], %46 {strides = array<i32>} : memref<64x128xf32, #tpu.memory_space<vmem>>, vector<64x128xf32>,
    %c0_60 = arith.constant 0 : index
    %c1_61 = arith.constant 1 : index
    %c2_62 = arith.constant 2 : index
    %c0_63 = arith.constant 0 : index
    %48 = vector.load %arg3[%c0_60, %c1_61, %c2_62, %c0_63] : memref<1x10x10x128xbf16, #tpu.memory_space<vmem>>, vector<1x8x8x128xbf16>
    %49 = vector.shape_cast %48 : vector<1x8x8x128xbf16> to vector<8x8x128xbf16>
    %50 = vector.shape_cast %49 : vector<8x8x128xbf16> to vector<64x128xbf16>
    %c0_64 = arith.constant 0 : index
    %c0_65 = arith.constant 0 : index
    %51 = vector.load %arg8[%c0_64, %c0_65] : memref<64x128xf32, #tpu.memory_space<vmem>>, vector<64x128xf32>
    %c0_66 = arith.constant 0 : index
    %c5 = arith.constant 5 : index
    %c0_67 = arith.constant 0 : index
    %c0_68 = arith.constant 0 : index
    %52 = vector.load %arg4[%c0_66, %c5, %c0_67, %c0_68] : memref<1x9x128x128xbf16, #tpu.memory_space<vmem>>, vector<1x1x128x128xbf16>
    %53 = vector.shape_cast %52 : vector<1x1x128x128xbf16> to vector<128x128xbf16>
    %cst_69 = arith.constant dense<0.000000e+00> : vector<64x128xf32>
    %54 = tpu.matmul %50, %53, %cst_69 {dimension_numbers = #tpu.dot_dimension_numbers<[1], [0], [0], [1], [0, 0, 1, 1], [], []>} : vector<64x128xbf16>, vector<128x128xbf16>, vector<64x128xf32> -> vector<64x128xf32>
    %55 = arith.addf %51, %54 : vector<64x128xf32>
    %c0_70 = arith.constant 0 : index
    %c0_71 = arith.constant 0 : index
    %56 = vector.load %arg8[%c0_70, %c0_71] : memref<64x128xf32, #tpu.memory_space<vmem>>, vector<64x128xf32>
    tpu.vector_store %arg8[%c0_70, %c0_71], %55 {strides = array<i32>} : memref<64x128xf32, #tpu.memory_space<vmem>>, vector<64x128xf32>,
    %c0_72 = arith.constant 0 : index
    %c2_73 = arith.constant 2 : index
    %c0_74 = arith.constant 0 : index
    %c0_75 = arith.constant 0 : index
    %57 = vector.load %arg3[%c0_72, %c2_73, %c0_74, %c0_75] : memref<1x10x10x128xbf16, #tpu.memory_space<vmem>>, vector<1x8x8x128xbf16>
    %58 = vector.shape_cast %57 : vector<1x8x8x128xbf16> to vector<8x8x128xbf16>
    %59 = vector.shape_cast %58 : vector<8x8x128xbf16> to vector<64x128xbf16>
    %c0_76 = arith.constant 0 : index
    %c0_77 = arith.constant 0 : index
    %60 = vector.load %arg8[%c0_76, %c0_77] : memref<64x128xf32, #tpu.memory_space<vmem>>, vector<64x128xf32>
    %c0_78 = arith.constant 0 : index
    %c6 = arith.constant 6 : index
    %c0_79 = arith.constant 0 : index
    %c0_80 = arith.constant 0 : index
    %61 = vector.load %arg4[%c0_78, %c6, %c0_79, %c0_80] : memref<1x9x128x128xbf16, #tpu.memory_space<vmem>>, vector<1x1x128x128xbf16>
    %62 = vector.shape_cast %61 : vector<1x1x128x128xbf16> to vector<128x128xbf16>
    %cst_81 = arith.constant dense<0.000000e+00> : vector<64x128xf32>
    %63 = tpu.matmul %59, %62, %cst_81 {dimension_numbers = #tpu.dot_dimension_numbers<[1], [0], [0], [1], [0, 0, 1, 1], [], []>} : vector<64x128xbf16>, vector<128x128xbf16>, vector<64x128xf32> -> vector<64x128xf32>
    %64 = arith.addf %60, %63 : vector<64x128xf32>
    %c0_82 = arith.constant 0 : index
    %c0_83 = arith.constant 0 : index
    %65 = vector.load %arg8[%c0_82, %c0_83] : memref<64x128xf32, #tpu.memory_space<vmem>>, vector<64x128xf32>
    tpu.vector_store %arg8[%c0_82, %c0_83], %64 {strides = array<i32>} : memref<64x128xf32, #tpu.memory_space<vmem>>, vector<64x128xf32>,
    %c0_84 = arith.constant 0 : index
    %c2_85 = arith.constant 2 : index
    %c1_86 = arith.constant 1 : index
    %c0_87 = arith.constant 0 : index
    %66 = vector.load %arg3[%c0_84, %c2_85, %c1_86, %c0_87] : memref<1x10x10x128xbf16, #tpu.memory_space<vmem>>, vector<1x8x8x128xbf16>
    %67 = vector.shape_cast %66 : vector<1x8x8x128xbf16> to vector<8x8x128xbf16>
    %68 = vector.shape_cast %67 : vector<8x8x128xbf16> to vector<64x128xbf16>
    %c0_88 = arith.constant 0 : index
    %c0_89 = arith.constant 0 : index
    %69 = vector.load %arg8[%c0_88, %c0_89] : memref<64x128xf32, #tpu.memory_space<vmem>>, vector<64x128xf32>
    %c0_90 = arith.constant 0 : index
    %c7 = arith.constant 7 : index
    %c0_91 = arith.constant 0 : index
    %c0_92 = arith.constant 0 : index
    %70 = vector.load %arg4[%c0_90, %c7, %c0_91, %c0_92] : memref<1x9x128x128xbf16, #tpu.memory_space<vmem>>, vector<1x1x128x128xbf16>
    %71 = vector.shape_cast %70 : vector<1x1x128x128xbf16> to vector<128x128xbf16>
    %cst_93 = arith.constant dense<0.000000e+00> : vector<64x128xf32>
    %72 = tpu.matmul %68, %71, %cst_93 {dimension_numbers = #tpu.dot_dimension_numbers<[1], [0], [0], [1], [0, 0, 1, 1], [], []>} : vector<64x128xbf16>, vector<128x128xbf16>, vector<64x128xf32> -> vector<64x128xf32>
    %73 = arith.addf %69, %72 : vector<64x128xf32>
    %c0_94 = arith.constant 0 : index
    %c0_95 = arith.constant 0 : index
    %74 = vector.load %arg8[%c0_94, %c0_95] : memref<64x128xf32, #tpu.memory_space<vmem>>, vector<64x128xf32>
    tpu.vector_store %arg8[%c0_94, %c0_95], %73 {strides = array<i32>} : memref<64x128xf32, #tpu.memory_space<vmem>>, vector<64x128xf32>,
    %c0_96 = arith.constant 0 : index
    %c2_97 = arith.constant 2 : index
    %c2_98 = arith.constant 2 : index
    %c0_99 = arith.constant 0 : index
    %75 = vector.load %arg3[%c0_96, %c2_97, %c2_98, %c0_99] : memref<1x10x10x128xbf16, #tpu.memory_space<vmem>>, vector<1x8x8x128xbf16>
    %76 = vector.shape_cast %75 : vector<1x8x8x128xbf16> to vector<8x8x128xbf16>
    %77 = vector.shape_cast %76 : vector<8x8x128xbf16> to vector<64x128xbf16>
    %c0_100 = arith.constant 0 : index
    %c0_101 = arith.constant 0 : index
    %78 = vector.load %arg8[%c0_100, %c0_101] : memref<64x128xf32, #tpu.memory_space<vmem>>, vector<64x128xf32>
    %c0_102 = arith.constant 0 : index
    %c8 = arith.constant 8 : index
    %c0_103 = arith.constant 0 : index
    %c0_104 = arith.constant 0 : index
    %79 = vector.load %arg4[%c0_102, %c8, %c0_103, %c0_104] : memref<1x9x128x128xbf16, #tpu.memory_space<vmem>>, vector<1x1x128x128xbf16>
    %80 = vector.shape_cast %79 : vector<1x1x128x128xbf16> to vector<128x128xbf16>
    %cst_105 = arith.constant dense<0.000000e+00> : vector<64x128xf32>
    %81 = tpu.matmul %77, %80, %cst_105 {dimension_numbers = #tpu.dot_dimension_numbers<[1], [0], [0], [1], [0, 0, 1, 1], [], []>} : vector<64x128xbf16>, vector<128x128xbf16>, vector<64x128xf32> -> vector<64x128xf32>
    %82 = arith.addf %78, %81 : vector<64x128xf32>
    %c0_106 = arith.constant 0 : index
    %c0_107 = arith.constant 0 : index
    %83 = vector.load %arg8[%c0_106, %c0_107] : memref<64x128xf32, #tpu.memory_space<vmem>>, vector<64x128xf32>
    tpu.vector_store %arg8[%c0_106, %c0_107], %82 {strides = array<i32>} : memref<64x128xf32, #tpu.memory_space<vmem>>, vector<64x128xf32>,
    %c2_i32 = arith.constant 2 : i32
    %84 = arith.cmpi eq, %arg2, %c2_i32 : i32
    %85 = arith.extui %84 : i1 to i32
    %c0_i32_108 = arith.constant 0 : i32
    %86 = arith.cmpi ne, %85, %c0_i32_108 : i32
    scf.if %86 {
      %c0_109 = arith.constant 0 : index
      %c0_110 = arith.constant 0 : index
      %87 = vector.load %arg8[%c0_109, %c0_110] : memref<64x128xf32, #tpu.memory_space<vmem>>, vector<64x128xf32>
      %c0_111 = arith.constant 0 : index
      %c0_112 = arith.constant 0 : index
      %88 = vector.load %arg5[%c0_111, %c0_112] : memref<1x128xf32, #tpu.memory_space<vmem>>, vector<1x128xf32>
      %89 = vector.broadcast %88 : vector<1x128xf32> to vector<64x128xf32>
      %90 = arith.mulf %87, %89 : vector<64x128xf32>
      %c0_113 = arith.constant 0 : index
      %c0_114 = arith.constant 0 : index
      %91 = vector.load %arg6[%c0_113, %c0_114] : memref<1x128xf32, #tpu.memory_space<vmem>>, vector<1x128xf32>
      %92 = vector.broadcast %91 : vector<1x128xf32> to vector<64x128xf32>
      %93 = arith.addf %90, %92 : vector<64x128xf32>
      %cst_115 = arith.constant 0.000000e+00 : f32
      %94 = vector.broadcast %cst_115 : f32 to vector<64x128xf32>
      %95 = arith.maximumf %93, %94 : vector<64x128xf32>
      %96 = arith.truncf %95 : vector<64x128xf32> to vector<64x128xbf16>
      %c0_116 = arith.constant 0 : index
      %c0_117 = arith.constant 0 : index
      %c0_118 = arith.constant 0 : index
      %97 = vector.load %arg7[%c0_116, %c0_117, %c0_118] : memref<1x64x128xbf16, #tpu.memory_space<vmem>>, vector<1x64x128xbf16>
      %98 = vector.shape_cast %97 : vector<1x64x128xbf16> to vector<64x128xbf16>
      %99 = vector.shape_cast %96 : vector<64x128xbf16> to vector<1x64x128xbf16>
      tpu.vector_store %arg7[%c0_116, %c0_117, %c0_118], %99 {strides = array<i32>} : memref<1x64x128xbf16, #tpu.memory_space<vmem>>, vector<1x64x128xbf16>,
    } else {
    }
    return
  }
  func.func @transform_0(%arg0: i32, %arg1: i32, %arg2: i32) -> (i32, i32, i32, i32) {
    %c10_i32 = arith.constant 10 : i32
    %0 = arith.muli %arg0, %c10_i32 : i32
    %1 = arith.addi %0, %arg1 : i32
    %2 = arith.addi %1, %arg2 : i32
    %c0_i32 = arith.constant 0 : i32
    %c0_i32_0 = arith.constant 0 : i32
    %c0_i32_1 = arith.constant 0 : i32
    %c0_i32_2 = arith.constant 0 : i32
    return %2, %c0_i32, %c0_i32_0, %c0_i32_1 : i32, i32, i32, i32
  }
  func.func @transform_1(%arg0: i32, %arg1: i32, %arg2: i32) -> (i32, i32, i32, i32) {
    %c0_i32 = arith.constant 0 : i32
    %c0_i32_0 = arith.constant 0 : i32
    %c0_i32_1 = arith.constant 0 : i32
    %c0_i32_2 = arith.constant 0 : i32
    return %arg2, %c0_i32, %c0_i32_0, %c0_i32_1 : i32, i32, i32, i32
  }
  func.func @transform_2(%arg0: i32, %arg1: i32, %arg2: i32) -> (i32, i32) {
    %c0_i32 = arith.constant 0 : i32
    %c0_i32_0 = arith.constant 0 : i32
    %c0_i32_1 = arith.constant 0 : i32
    return %c0_i32, %c0_i32_0 : i32, i32
  }
  func.func @transform_3(%arg0: i32, %arg1: i32, %arg2: i32) -> (i32, i32) {
    %c0_i32 = arith.constant 0 : i32
    %c0_i32_0 = arith.constant 0 : i32
    %c0_i32_1 = arith.constant 0 : i32
    return %c0_i32, %c0_i32_0 : i32, i32
  }
  func.func @transform_4(%arg0: i32, %arg1: i32, %arg2: i32) -> (i32, i32, i32) {
    %c8_i32 = arith.constant 8 : i32
    %0 = arith.muli %arg0, %c8_i32 : i32
    %1 = arith.addi %0, %arg1 : i32
    %c0_i32 = arith.constant 0 : i32
    %c0_i32_0 = arith.constant 0 : i32
    %c0_i32_1 = arith.constant 0 : i32
    return %1, %c0_i32, %c0_i32_0 : i32, i32, i32
  }
}

module attributes {stable_mosaic.version = 11 : i64} {
  func.func @_conv3x3_bn_relu_kernel(%arg0: i32, %arg1: i32, %arg2: i32, %arg3: memref<1x10x10x128xbf16, #tpu.memory_space<vmem>>, %arg4: memref<1x9x128x128xbf16, #tpu.memory_space<vmem>>, %arg5: memref<1x128xf32, #tpu.memory_space<vmem>>, %arg6: memref<1x128xf32, #tpu.memory_space<vmem>>, %arg7: memref<1x64x128xf32, #tpu.memory_space<vmem>>, %arg8: memref<64x128xf32, #tpu.memory_space<vmem>>) attributes {dimension_semantics = [#tpu.dimension_semantics<parallel>, #tpu.dimension_semantics<parallel>, #tpu.dimension_semantics<arbitrary>], iteration_bounds = array<i64: 2, 8, 3>, scalar_prefetch = 0 : i64, scratch_operands = 1 : i64, tpu.core_type = #tpu.core_type<tc>, window_params = [{transform_indices = @transform_0, window_bounds = array<i64: 1, 10, 10, 128>}, {transform_indices = @transform_1, window_bounds = array<i64: 1, 9, 128, 128>}, {pipeline_mode = #tpu.pipeline_mode<synchronous>, transform_indices = @transform_2, window_bounds = array<i64: 1, 128>}, {pipeline_mode = #tpu.pipeline_mode<synchronous>, transform_indices = @transform_3, window_bounds = array<i64: 1, 128>}, {transform_indices = @transform_4, window_bounds = array<i64: 1, 64, 128>}]} {
    %c0_i32 = arith.constant 0 : i32
    %0 = arith.cmpi eq, %arg2, %c0_i32 : i32
    %1 = arith.extui %0 : i1 to i32
    %c0_i32_0 = arith.constant 0 : i32
    %2 = arith.cmpi ne, %1, %c0_i32_0 : i32
    scf.if %2 {
      %cst_109 = arith.constant 0.000000e+00 : f32
      %87 = vector.broadcast %cst_109 : f32 to vector<64x128xf32>
      %c0_110 = arith.constant 0 : index
      %c0_111 = arith.constant 0 : index
      %88 = vector.load %arg8[%c0_110, %c0_111] : memref<64x128xf32, #tpu.memory_space<vmem>>, vector<64x128xf32>
      tpu.vector_store %arg8[%c0_110, %c0_111], %87 {strides = array<i32>} : memref<64x128xf32, #tpu.memory_space<vmem>>, vector<64x128xf32>,
    } else {
    }
    %c0 = arith.constant 0 : index
    %c0_1 = arith.constant 0 : index
    %c0_2 = arith.constant 0 : index
    %c0_3 = arith.constant 0 : index
    %3 = vector.load %arg3[%c0, %c0_1, %c0_2, %c0_3] : memref<1x10x10x128xbf16, #tpu.memory_space<vmem>>, vector<1x8x8x128xbf16>
    %4 = vector.shape_cast %3 : vector<1x8x8x128xbf16> to vector<8x8x128xbf16>
    %5 = vector.shape_cast %4 : vector<8x8x128xbf16> to vector<64x128xbf16>
    %c0_4 = arith.constant 0 : index
    %c0_5 = arith.constant 0 : index
    %6 = vector.load %arg8[%c0_4, %c0_5] : memref<64x128xf32, #tpu.memory_space<vmem>>, vector<64x128xf32>
    %c0_6 = arith.constant 0 : index
    %c0_7 = arith.constant 0 : index
    %c0_8 = arith.constant 0 : index
    %c0_9 = arith.constant 0 : index
    %7 = vector.load %arg4[%c0_6, %c0_7, %c0_8, %c0_9] : memref<1x9x128x128xbf16, #tpu.memory_space<vmem>>, vector<1x1x128x128xbf16>
    %8 = vector.shape_cast %7 : vector<1x1x128x128xbf16> to vector<128x128xbf16>
    %cst = arith.constant dense<0.000000e+00> : vector<64x128xf32>
    %9 = tpu.matmul %5, %8, %cst {dimension_numbers = #tpu.dot_dimension_numbers<[1], [0], [0], [1], [0, 0, 1, 1], [], []>} : vector<64x128xbf16>, vector<128x128xbf16>, vector<64x128xf32> -> vector<64x128xf32>
    %10 = arith.addf %6, %9 : vector<64x128xf32>
    %c0_10 = arith.constant 0 : index
    %c0_11 = arith.constant 0 : index
    %11 = vector.load %arg8[%c0_10, %c0_11] : memref<64x128xf32, #tpu.memory_space<vmem>>, vector<64x128xf32>
    tpu.vector_store %arg8[%c0_10, %c0_11], %10 {strides = array<i32>} : memref<64x128xf32, #tpu.memory_space<vmem>>, vector<64x128xf32>,
    %c0_12 = arith.constant 0 : index
    %c0_13 = arith.constant 0 : index
    %c1 = arith.constant 1 : index
    %c0_14 = arith.constant 0 : index
    %12 = vector.load %arg3[%c0_12, %c0_13, %c1, %c0_14] : memref<1x10x10x128xbf16, #tpu.memory_space<vmem>>, vector<1x8x8x128xbf16>
    %13 = vector.shape_cast %12 : vector<1x8x8x128xbf16> to vector<8x8x128xbf16>
    %14 = vector.shape_cast %13 : vector<8x8x128xbf16> to vector<64x128xbf16>
    %c0_15 = arith.constant 0 : index
    %c0_16 = arith.constant 0 : index
    %15 = vector.load %arg8[%c0_15, %c0_16] : memref<64x128xf32, #tpu.memory_space<vmem>>, vector<64x128xf32>
    %c0_17 = arith.constant 0 : index
    %c1_18 = arith.constant 1 : index
    %c0_19 = arith.constant 0 : index
    %c0_20 = arith.constant 0 : index
    %16 = vector.load %arg4[%c0_17, %c1_18, %c0_19, %c0_20] : memref<1x9x128x128xbf16, #tpu.memory_space<vmem>>, vector<1x1x128x128xbf16>
    %17 = vector.shape_cast %16 : vector<1x1x128x128xbf16> to vector<128x128xbf16>
    %cst_21 = arith.constant dense<0.000000e+00> : vector<64x128xf32>
    %18 = tpu.matmul %14, %17, %cst_21 {dimension_numbers = #tpu.dot_dimension_numbers<[1], [0], [0], [1], [0, 0, 1, 1], [], []>} : vector<64x128xbf16>, vector<128x128xbf16>, vector<64x128xf32> -> vector<64x128xf32>
    %19 = arith.addf %15, %18 : vector<64x128xf32>
    %c0_22 = arith.constant 0 : index
    %c0_23 = arith.constant 0 : index
    %20 = vector.load %arg8[%c0_22, %c0_23] : memref<64x128xf32, #tpu.memory_space<vmem>>, vector<64x128xf32>
    tpu.vector_store %arg8[%c0_22, %c0_23], %19 {strides = array<i32>} : memref<64x128xf32, #tpu.memory_space<vmem>>, vector<64x128xf32>,
    %c0_24 = arith.constant 0 : index
    %c0_25 = arith.constant 0 : index
    %c2 = arith.constant 2 : index
    %c0_26 = arith.constant 0 : index
    %21 = vector.load %arg3[%c0_24, %c0_25, %c2, %c0_26] : memref<1x10x10x128xbf16, #tpu.memory_space<vmem>>, vector<1x8x8x128xbf16>
    %22 = vector.shape_cast %21 : vector<1x8x8x128xbf16> to vector<8x8x128xbf16>
    %23 = vector.shape_cast %22 : vector<8x8x128xbf16> to vector<64x128xbf16>
    %c0_27 = arith.constant 0 : index
    %c0_28 = arith.constant 0 : index
    %24 = vector.load %arg8[%c0_27, %c0_28] : memref<64x128xf32, #tpu.memory_space<vmem>>, vector<64x128xf32>
    %c0_29 = arith.constant 0 : index
    %c2_30 = arith.constant 2 : index
    %c0_31 = arith.constant 0 : index
    %c0_32 = arith.constant 0 : index
    %25 = vector.load %arg4[%c0_29, %c2_30, %c0_31, %c0_32] : memref<1x9x128x128xbf16, #tpu.memory_space<vmem>>, vector<1x1x128x128xbf16>
    %26 = vector.shape_cast %25 : vector<1x1x128x128xbf16> to vector<128x128xbf16>
    %cst_33 = arith.constant dense<0.000000e+00> : vector<64x128xf32>
    %27 = tpu.matmul %23, %26, %cst_33 {dimension_numbers = #tpu.dot_dimension_numbers<[1], [0], [0], [1], [0, 0, 1, 1], [], []>} : vector<64x128xbf16>, vector<128x128xbf16>, vector<64x128xf32> -> vector<64x128xf32>
    %28 = arith.addf %24, %27 : vector<64x128xf32>
    %c0_34 = arith.constant 0 : index
    %c0_35 = arith.constant 0 : index
    %29 = vector.load %arg8[%c0_34, %c0_35] : memref<64x128xf32, #tpu.memory_space<vmem>>, vector<64x128xf32>
    tpu.vector_store %arg8[%c0_34, %c0_35], %28 {strides = array<i32>} : memref<64x128xf32, #tpu.memory_space<vmem>>, vector<64x128xf32>,
    %c0_36 = arith.constant 0 : index
    %c1_37 = arith.constant 1 : index
    %c0_38 = arith.constant 0 : index
    %c0_39 = arith.constant 0 : index
    %30 = vector.load %arg3[%c0_36, %c1_37, %c0_38, %c0_39] : memref<1x10x10x128xbf16, #tpu.memory_space<vmem>>, vector<1x8x8x128xbf16>
    %31 = vector.shape_cast %30 : vector<1x8x8x128xbf16> to vector<8x8x128xbf16>
    %32 = vector.shape_cast %31 : vector<8x8x128xbf16> to vector<64x128xbf16>
    %c0_40 = arith.constant 0 : index
    %c0_41 = arith.constant 0 : index
    %33 = vector.load %arg8[%c0_40, %c0_41] : memref<64x128xf32, #tpu.memory_space<vmem>>, vector<64x128xf32>
    %c0_42 = arith.constant 0 : index
    %c3 = arith.constant 3 : index
    %c0_43 = arith.constant 0 : index
    %c0_44 = arith.constant 0 : index
    %34 = vector.load %arg4[%c0_42, %c3, %c0_43, %c0_44] : memref<1x9x128x128xbf16, #tpu.memory_space<vmem>>, vector<1x1x128x128xbf16>
    %35 = vector.shape_cast %34 : vector<1x1x128x128xbf16> to vector<128x128xbf16>
    %cst_45 = arith.constant dense<0.000000e+00> : vector<64x128xf32>
    %36 = tpu.matmul %32, %35, %cst_45 {dimension_numbers = #tpu.dot_dimension_numbers<[1], [0], [0], [1], [0, 0, 1, 1], [], []>} : vector<64x128xbf16>, vector<128x128xbf16>, vector<64x128xf32> -> vector<64x128xf32>
    %37 = arith.addf %33, %36 : vector<64x128xf32>
    %c0_46 = arith.constant 0 : index
    %c0_47 = arith.constant 0 : index
    %38 = vector.load %arg8[%c0_46, %c0_47] : memref<64x128xf32, #tpu.memory_space<vmem>>, vector<64x128xf32>
    tpu.vector_store %arg8[%c0_46, %c0_47], %37 {strides = array<i32>} : memref<64x128xf32, #tpu.memory_space<vmem>>, vector<64x128xf32>,
    %c0_48 = arith.constant 0 : index
    %c1_49 = arith.constant 1 : index
    %c1_50 = arith.constant 1 : index
    %c0_51 = arith.constant 0 : index
    %39 = vector.load %arg3[%c0_48, %c1_49, %c1_50, %c0_51] : memref<1x10x10x128xbf16, #tpu.memory_space<vmem>>, vector<1x8x8x128xbf16>
    %40 = vector.shape_cast %39 : vector<1x8x8x128xbf16> to vector<8x8x128xbf16>
    %41 = vector.shape_cast %40 : vector<8x8x128xbf16> to vector<64x128xbf16>
    %c0_52 = arith.constant 0 : index
    %c0_53 = arith.constant 0 : index
    %42 = vector.load %arg8[%c0_52, %c0_53] : memref<64x128xf32, #tpu.memory_space<vmem>>, vector<64x128xf32>
    %c0_54 = arith.constant 0 : index
    %c4 = arith.constant 4 : index
    %c0_55 = arith.constant 0 : index
    %c0_56 = arith.constant 0 : index
    %43 = vector.load %arg4[%c0_54, %c4, %c0_55, %c0_56] : memref<1x9x128x128xbf16, #tpu.memory_space<vmem>>, vector<1x1x128x128xbf16>
    %44 = vector.shape_cast %43 : vector<1x1x128x128xbf16> to vector<128x128xbf16>
    %cst_57 = arith.constant dense<0.000000e+00> : vector<64x128xf32>
    %45 = tpu.matmul %41, %44, %cst_57 {dimension_numbers = #tpu.dot_dimension_numbers<[1], [0], [0], [1], [0, 0, 1, 1], [], []>} : vector<64x128xbf16>, vector<128x128xbf16>, vector<64x128xf32> -> vector<64x128xf32>
    %46 = arith.addf %42, %45 : vector<64x128xf32>
    %c0_58 = arith.constant 0 : index
    %c0_59 = arith.constant 0 : index
    %47 = vector.load %arg8[%c0_58, %c0_59] : memref<64x128xf32, #tpu.memory_space<vmem>>, vector<64x128xf32>
    tpu.vector_store %arg8[%c0_58, %c0_59], %46 {strides = array<i32>} : memref<64x128xf32, #tpu.memory_space<vmem>>, vector<64x128xf32>,
    %c0_60 = arith.constant 0 : index
    %c1_61 = arith.constant 1 : index
    %c2_62 = arith.constant 2 : index
    %c0_63 = arith.constant 0 : index
    %48 = vector.load %arg3[%c0_60, %c1_61, %c2_62, %c0_63] : memref<1x10x10x128xbf16, #tpu.memory_space<vmem>>, vector<1x8x8x128xbf16>
    %49 = vector.shape_cast %48 : vector<1x8x8x128xbf16> to vector<8x8x128xbf16>
    %50 = vector.shape_cast %49 : vector<8x8x128xbf16> to vector<64x128xbf16>
    %c0_64 = arith.constant 0 : index
    %c0_65 = arith.constant 0 : index
    %51 = vector.load %arg8[%c0_64, %c0_65] : memref<64x128xf32, #tpu.memory_space<vmem>>, vector<64x128xf32>
    %c0_66 = arith.constant 0 : index
    %c5 = arith.constant 5 : index
    %c0_67 = arith.constant 0 : index
    %c0_68 = arith.constant 0 : index
    %52 = vector.load %arg4[%c0_66, %c5, %c0_67, %c0_68] : memref<1x9x128x128xbf16, #tpu.memory_space<vmem>>, vector<1x1x128x128xbf16>
    %53 = vector.shape_cast %52 : vector<1x1x128x128xbf16> to vector<128x128xbf16>
    %cst_69 = arith.constant dense<0.000000e+00> : vector<64x128xf32>
    %54 = tpu.matmul %50, %53, %cst_69 {dimension_numbers = #tpu.dot_dimension_numbers<[1], [0], [0], [1], [0, 0, 1, 1], [], []>} : vector<64x128xbf16>, vector<128x128xbf16>, vector<64x128xf32> -> vector<64x128xf32>
    %55 = arith.addf %51, %54 : vector<64x128xf32>
    %c0_70 = arith.constant 0 : index
    %c0_71 = arith.constant 0 : index
    %56 = vector.load %arg8[%c0_70, %c0_71] : memref<64x128xf32, #tpu.memory_space<vmem>>, vector<64x128xf32>
    tpu.vector_store %arg8[%c0_70, %c0_71], %55 {strides = array<i32>} : memref<64x128xf32, #tpu.memory_space<vmem>>, vector<64x128xf32>,
    %c0_72 = arith.constant 0 : index
    %c2_73 = arith.constant 2 : index
    %c0_74 = arith.constant 0 : index
    %c0_75 = arith.constant 0 : index
    %57 = vector.load %arg3[%c0_72, %c2_73, %c0_74, %c0_75] : memref<1x10x10x128xbf16, #tpu.memory_space<vmem>>, vector<1x8x8x128xbf16>
    %58 = vector.shape_cast %57 : vector<1x8x8x128xbf16> to vector<8x8x128xbf16>
    %59 = vector.shape_cast %58 : vector<8x8x128xbf16> to vector<64x128xbf16>
    %c0_76 = arith.constant 0 : index
    %c0_77 = arith.constant 0 : index
    %60 = vector.load %arg8[%c0_76, %c0_77] : memref<64x128xf32, #tpu.memory_space<vmem>>, vector<64x128xf32>
    %c0_78 = arith.constant 0 : index
    %c6 = arith.constant 6 : index
    %c0_79 = arith.constant 0 : index
    %c0_80 = arith.constant 0 : index
    %61 = vector.load %arg4[%c0_78, %c6, %c0_79, %c0_80] : memref<1x9x128x128xbf16, #tpu.memory_space<vmem>>, vector<1x1x128x128xbf16>
    %62 = vector.shape_cast %61 : vector<1x1x128x128xbf16> to vector<128x128xbf16>
    %cst_81 = arith.constant dense<0.000000e+00> : vector<64x128xf32>
    %63 = tpu.matmul %59, %62, %cst_81 {dimension_numbers = #tpu.dot_dimension_numbers<[1], [0], [0], [1], [0, 0, 1, 1], [], []>} : vector<64x128xbf16>, vector<128x128xbf16>, vector<64x128xf32> -> vector<64x128xf32>
    %64 = arith.addf %60, %63 : vector<64x128xf32>
    %c0_82 = arith.constant 0 : index
    %c0_83 = arith.constant 0 : index
    %65 = vector.load %arg8[%c0_82, %c0_83] : memref<64x128xf32, #tpu.memory_space<vmem>>, vector<64x128xf32>
    tpu.vector_store %arg8[%c0_82, %c0_83], %64 {strides = array<i32>} : memref<64x128xf32, #tpu.memory_space<vmem>>, vector<64x128xf32>,
    %c0_84 = arith.constant 0 : index
    %c2_85 = arith.constant 2 : index
    %c1_86 = arith.constant 1 : index
    %c0_87 = arith.constant 0 : index
    %66 = vector.load %arg3[%c0_84, %c2_85, %c1_86, %c0_87] : memref<1x10x10x128xbf16, #tpu.memory_space<vmem>>, vector<1x8x8x128xbf16>
    %67 = vector.shape_cast %66 : vector<1x8x8x128xbf16> to vector<8x8x128xbf16>
    %68 = vector.shape_cast %67 : vector<8x8x128xbf16> to vector<64x128xbf16>
    %c0_88 = arith.constant 0 : index
    %c0_89 = arith.constant 0 : index
    %69 = vector.load %arg8[%c0_88, %c0_89] : memref<64x128xf32, #tpu.memory_space<vmem>>, vector<64x128xf32>
    %c0_90 = arith.constant 0 : index
    %c7 = arith.constant 7 : index
    %c0_91 = arith.constant 0 : index
    %c0_92 = arith.constant 0 : index
    %70 = vector.load %arg4[%c0_90, %c7, %c0_91, %c0_92] : memref<1x9x128x128xbf16, #tpu.memory_space<vmem>>, vector<1x1x128x128xbf16>
    %71 = vector.shape_cast %70 : vector<1x1x128x128xbf16> to vector<128x128xbf16>
    %cst_93 = arith.constant dense<0.000000e+00> : vector<64x128xf32>
    %72 = tpu.matmul %68, %71, %cst_93 {dimension_numbers = #tpu.dot_dimension_numbers<[1], [0], [0], [1], [0, 0, 1, 1], [], []>} : vector<64x128xbf16>, vector<128x128xbf16>, vector<64x128xf32> -> vector<64x128xf32>
    %73 = arith.addf %69, %72 : vector<64x128xf32>
    %c0_94 = arith.constant 0 : index
    %c0_95 = arith.constant 0 : index
    %74 = vector.load %arg8[%c0_94, %c0_95] : memref<64x128xf32, #tpu.memory_space<vmem>>, vector<64x128xf32>
    tpu.vector_store %arg8[%c0_94, %c0_95], %73 {strides = array<i32>} : memref<64x128xf32, #tpu.memory_space<vmem>>, vector<64x128xf32>,
    %c0_96 = arith.constant 0 : index
    %c2_97 = arith.constant 2 : index
    %c2_98 = arith.constant 2 : index
    %c0_99 = arith.constant 0 : index
    %75 = vector.load %arg3[%c0_96, %c2_97, %c2_98, %c0_99] : memref<1x10x10x128xbf16, #tpu.memory_space<vmem>>, vector<1x8x8x128xbf16>
    %76 = vector.shape_cast %75 : vector<1x8x8x128xbf16> to vector<8x8x128xbf16>
    %77 = vector.shape_cast %76 : vector<8x8x128xbf16> to vector<64x128xbf16>
    %c0_100 = arith.constant 0 : index
    %c0_101 = arith.constant 0 : index
    %78 = vector.load %arg8[%c0_100, %c0_101] : memref<64x128xf32, #tpu.memory_space<vmem>>, vector<64x128xf32>
    %c0_102 = arith.constant 0 : index
    %c8 = arith.constant 8 : index
    %c0_103 = arith.constant 0 : index
    %c0_104 = arith.constant 0 : index
    %79 = vector.load %arg4[%c0_102, %c8, %c0_103, %c0_104] : memref<1x9x128x128xbf16, #tpu.memory_space<vmem>>, vector<1x1x128x128xbf16>
    %80 = vector.shape_cast %79 : vector<1x1x128x128xbf16> to vector<128x128xbf16>
    %cst_105 = arith.constant dense<0.000000e+00> : vector<64x128xf32>
    %81 = tpu.matmul %77, %80, %cst_105 {dimension_numbers = #tpu.dot_dimension_numbers<[1], [0], [0], [1], [0, 0, 1, 1], [], []>} : vector<64x128xbf16>, vector<128x128xbf16>, vector<64x128xf32> -> vector<64x128xf32>
    %82 = arith.addf %78, %81 : vector<64x128xf32>
    %c0_106 = arith.constant 0 : index
    %c0_107 = arith.constant 0 : index
    %83 = vector.load %arg8[%c0_106, %c0_107] : memref<64x128xf32, #tpu.memory_space<vmem>>, vector<64x128xf32>
    tpu.vector_store %arg8[%c0_106, %c0_107], %82 {strides = array<i32>} : memref<64x128xf32, #tpu.memory_space<vmem>>, vector<64x128xf32>,
    %c2_i32 = arith.constant 2 : i32
    %84 = arith.cmpi eq, %arg2, %c2_i32 : i32
    %85 = arith.extui %84 : i1 to i32
    %c0_i32_108 = arith.constant 0 : i32
    %86 = arith.cmpi ne, %85, %c0_i32_108 : i32
    scf.if %86 {
      %c0_109 = arith.constant 0 : index
      %c0_110 = arith.constant 0 : index
      %87 = vector.load %arg8[%c0_109, %c0_110] : memref<64x128xf32, #tpu.memory_space<vmem>>, vector<64x128xf32>
      %c0_111 = arith.constant 0 : index
      %c0_112 = arith.constant 0 : index
      %88 = vector.load %arg5[%c0_111, %c0_112] : memref<1x128xf32, #tpu.memory_space<vmem>>, vector<1x128xf32>
      %89 = vector.broadcast %88 : vector<1x128xf32> to vector<64x128xf32>
      %90 = arith.mulf %87, %89 : vector<64x128xf32>
      %c0_113 = arith.constant 0 : index
      %c0_114 = arith.constant 0 : index
      %91 = vector.load %arg6[%c0_113, %c0_114] : memref<1x128xf32, #tpu.memory_space<vmem>>, vector<1x128xf32>
      %92 = vector.broadcast %91 : vector<1x128xf32> to vector<64x128xf32>
      %93 = arith.addf %90, %92 : vector<64x128xf32>
      %cst_115 = arith.constant 0.000000e+00 : f32
      %94 = vector.broadcast %cst_115 : f32 to vector<64x128xf32>
      %95 = arith.maximumf %93, %94 : vector<64x128xf32>
      %c0_116 = arith.constant 0 : index
      %c0_117 = arith.constant 0 : index
      %c0_118 = arith.constant 0 : index
      %96 = vector.load %arg7[%c0_116, %c0_117, %c0_118] : memref<1x64x128xf32, #tpu.memory_space<vmem>>, vector<1x64x128xf32>
      %97 = vector.shape_cast %96 : vector<1x64x128xf32> to vector<64x128xf32>
      %98 = vector.shape_cast %95 : vector<64x128xf32> to vector<1x64x128xf32>
      tpu.vector_store %arg7[%c0_116, %c0_117, %c0_118], %98 {strides = array<i32>} : memref<1x64x128xf32, #tpu.memory_space<vmem>>, vector<1x64x128xf32>,
    } else {
    }
    return
  }
  func.func @transform_0(%arg0: i32, %arg1: i32, %arg2: i32) -> (i32, i32, i32, i32) {
    %c10_i32 = arith.constant 10 : i32
    %0 = arith.muli %arg0, %c10_i32 : i32
    %1 = arith.addi %0, %arg1 : i32
    %2 = arith.addi %1, %arg2 : i32
    %c0_i32 = arith.constant 0 : i32
    %c0_i32_0 = arith.constant 0 : i32
    %c0_i32_1 = arith.constant 0 : i32
    %c0_i32_2 = arith.constant 0 : i32
    return %2, %c0_i32, %c0_i32_0, %c0_i32_1 : i32, i32, i32, i32
  }
  func.func @transform_1(%arg0: i32, %arg1: i32, %arg2: i32) -> (i32, i32, i32, i32) {
    %c0_i32 = arith.constant 0 : i32
    %c0_i32_0 = arith.constant 0 : i32
    %c0_i32_1 = arith.constant 0 : i32
    %c0_i32_2 = arith.constant 0 : i32
    return %arg2, %c0_i32, %c0_i32_0, %c0_i32_1 : i32, i32, i32, i32
  }
  func.func @transform_2(%arg0: i32, %arg1: i32, %arg2: i32) -> (i32, i32) {
    %c0_i32 = arith.constant 0 : i32
    %c0_i32_0 = arith.constant 0 : i32
    %c0_i32_1 = arith.constant 0 : i32
    return %c0_i32, %c0_i32_0 : i32, i32
  }
  func.func @transform_3(%arg0: i32, %arg1: i32, %arg2: i32) -> (i32, i32) {
    %c0_i32 = arith.constant 0 : i32
    %c0_i32_0 = arith.constant 0 : i32
    %c0_i32_1 = arith.constant 0 : i32
    return %c0_i32, %c0_i32_0 : i32, i32
  }
  func.func @transform_4(%arg0: i32, %arg1: i32, %arg2: i32) -> (i32, i32, i32) {
    %c8_i32 = arith.constant 8 : i32
    %0 = arith.muli %arg0, %c8_i32 : i32
    %1 = arith.addi %0, %arg1 : i32
    %c0_i32 = arith.constant 0 : i32
    %c0_i32_0 = arith.constant 0 : i32
    %c0_i32_1 = arith.constant 0 : i32
    return %1, %c0_i32, %c0_i32_0 : i32, i32, i32
  }
}

</mosaic_0001>

<llo_original>
// kernel: tile.8
$region0: #{tile.8}
  #allocation0 [shape = 's32[1]{0}', space=sflag, size = 0x4, scoped, tag = 'scoped memory for tile.8']
  %s0 = inlined_call_operand.vmem [shape: f32[4], index: 0, kind: input, shape index: {}]
  %s1 = inlined_call_operand.vmem [shape: f32[8,4], index: 1, kind: output, shape index: {}]
  // Predicated region
  $region2: #{tile.8} parent=0 // pred_check
    _
  $region3: #{tile.8} parent=0 // pred_check_branch
    %3 = sbr.rel (0) target = $region5
  $region4: #{tile.8} parent=0 // pred_region
    _
  $region5: #{tile.8} parent=0 // pred_fallthru
    _
  %v4 = vld [vmem:[%s0] ss:$0 sm:$0xff]
  %5 = vst [vmem:[%s1] sm:$0xff] %v4

// kernel: tile.9
$region0: #{tile.9}
  %s0 = inlined_call_operand.vmem [shape: f32[8,4], index: 0, kind: input, shape index: {}]
  %s1 = inlined_call_operand.vmem [shape: f32[32], index: 1, kind: output, shape index: {}]
  $region1: #{tile.9} parent=0
    #allocation0 [shape = 'u8[4096]{0}', space=vmem, size = 0x1000, scoped, tag = 'scoped mem for output reshape']
    %v2 = vld [vmem:[%s0] sm:$0x1]
    %vm3 = vcmask 31744
    %4 = vst.msk [vmem:[#allocation0] sm:$0x1] %vm3, %v2
    %s5 = scalar_lea.vmem %s0, 7
    %v6 = vld [vmem:[%s5] sm:$0x1]
    %7 = vrot.lane.b32.xlu0 %v6, 28
    %v8 = vpop.permute.xlu0 %7
    %vm9 = vcmask 261344
    %10 = vst.msk [vmem:[#allocation0] sm:$0x1] %vm9, %v8
    %s11 = scalar_lea.vmem %s0, 6
    %v12 = vld [vmem:[%s11] sm:$0x1]
    %13 = vrot.lane.b32.xlu0 %v12, 24
    %v14 = vpop.permute.xlu0 %13
    %vm15 = vcmask 228544
    %16 = vst.msk [vmem:[#allocation0] sm:$0x1] %vm15, %v14
    %s17 = scalar_lea.vmem %s0, 5
    %v18 = vld [vmem:[%s17] sm:$0x1]
    %19 = vrot.lane.b32.xlu0 %v18, 20
    %v20 = vpop.permute.xlu0 %19
    %vm21 = vcmask 195744
    %22 = vst.msk [vmem:[#allocation0] sm:$0x1] %vm21, %v20
    %s23 = scalar_lea.vmem %s0, 4
    %v24 = vld [vmem:[%s23] sm:$0x1]
    %25 = vrot.lane.b32.xlu0 %v24, 16
    %v26 = vpop.permute.xlu0 %25
    %vm27 = vcmask 162944
    %28 = vst.msk [vmem:[#allocation0] sm:$0x1] %vm27, %v26
    %s29 = scalar_lea.vmem %s0, 3
    %v30 = vld [vmem:[%s29] sm:$0x1]
    %31 = vrot.lane.b32.xlu0 %v30, 12
    %v32 = vpop.permute.xlu0 %31
    %vm33 = vcmask 130144
    %34 = vst.msk [vmem:[#allocation0] sm:$0x1] %vm33, %v32
    %s35 = scalar_lea.vmem %s0, 2
    %v36 = vld [vmem:[%s35] sm:$0x1]
    %37 = vrot.lane.b32.xlu0 %v36, 8
    %v38 = vpop.permute.xlu0 %37
    %vm39 = vcmask 97344
    %40 = vst.msk [vmem:[#allocation0] sm:$0x1] %vm39, %v38
    %s41 = scalar_lea.vmem %s0, 1
    %v42 = vld [vmem:[%s41] sm:$0x1]
    %43 = vrot.lane.b32.xlu0 %v42, 4
    %v44 = vpop.permute.xlu0 %43
    %vm45 = vcmask 64544
    %46 = vst.msk [vmem:[#allocation0] sm:$0x1] %vm45, %v44
    %s48 = sshllo.u32 0, 1
    %v50 = vld [vmem:[#allocation0] sm:%s48]
    %s51 = sshllo.u32 0, 1
    %52 = vst [vmem:[%s1] sm:%s51] %v50

// kernel: up_forward.3
$region0: #{up_forward.3}
  #allocation0 [shape = 'u32[]', space=smem, size = 0x4, offset = 0x4, fixed_abs, tag = 'smem constant byte address 0x4 - core index']
  #allocation1 [shape = 'u32[144,128]{1,0:T(1,128)}', space=vmem, size = 0x12000, scoped, tag = 'internal scratch']
  #allocation2 [shape = 'f32[128,128]{1,0:T(8,128)}', space=vmem, size = 0x10000, scoped, tag = 'scratch operand']
  %s0 = inlined_call_operand.vmem [shape: bf16[128,128], index: 0, kind: input, shape index: {}]
  %s1 = inlined_call_operand.vmem [shape: bf16[128,128], index: 1, kind: input, shape index: {}]
  %s2 = inlined_call_operand.vmem [shape: f32[1,128], index: 2, kind: input, shape index: {}]
  %s3 = inlined_call_operand.vmem [shape: bf16[128,128], index: 3, kind: output, shape index: {}]
  %s4 = sld [smem:[#allocation0]]
  $region30: #{up_forward.3} parent=0
    _
  %s6 = ssub.s32 1, %s4
  %s7 = scalar_select 0, %s6, %s4
  // Predicated region
  $region2: #{up_forward.3} parent=0 // pred_check
    _
  $region3: #{up_forward.3} parent=0 // pred_check_branch
    %9 = sbr.rel (0) target = $region5
  $region4: #{up_forward.3} parent=0 // pred_region
    _
  $region5: #{up_forward.3} parent=0 // pred_fallthru
    _
  // Predicated region
  $region6: #{up_forward.3} parent=0 // pred_check
    _
  $region7: #{up_forward.3} parent=0 // pred_check_branch
    %11 = sbr.rel (0) target = $region9
  $region8: #{up_forward.3} parent=0 // pred_region
    _
  $region9: #{up_forward.3} parent=0 // pred_fallthru
    _
  // Predicated region
  $region10: #{up_forward.3} parent=0 // pred_check
    _
  $region11: #{up_forward.3} parent=0 // pred_check_branch
    %13 = sbr.rel (0) target = $region13
  $region12: #{up_forward.3} parent=0 // pred_region
    _
  $region13: #{up_forward.3} parent=0 // pred_fallthru
    _
  %p15 = scmp.eq.s32.totalorder 0, 0
  // Predicated region
  $region14: #{up_forward.3} parent=0 // pred_check
    %p16 = pneg %p15
  $region15: #{up_forward.3} parent=0 // pred_check_branch
    %18 = sbr.rel (%p16) target = $region17
  $region16: #{up_forward.3} parent=0 // pred_region
    %19 = vst [vmem:[#allocation2] sm:$0xff] 0.0
    %20 = vst [vmem:[#allocation2 + $0x8] sm:$0xff] 0.0
    %21 = vst [vmem:[#allocation2 + $0x10] sm:$0xff] 0.0
    %22 = vst [vmem:[#allocation2 + $0x18] sm:$0xff] 0.0
    %23 = vst [vmem:[#allocation2 + $0x20] sm:$0xff] 0.0
    %24 = vst [vmem:[#allocation2 + $0x28] sm:$0xff] 0.0
    %25 = vst [vmem:[#allocation2 + $0x30] sm:$0xff] 0.0
    %26 = vst [vmem:[#allocation2 + $0x38] sm:$0xff] 0.0
    %27 = vst [vmem:[#allocation2 + $0x40] sm:$0xff] 0.0
    %28 = vst [vmem:[#allocation2 + $0x48] sm:$0xff] 0.0
    %29 = vst [vmem:[#allocation2 + $0x50] sm:$0xff] 0.0
    %30 = vst [vmem:[#allocation2 + $0x58] sm:$0xff] 0.0
    %31 = vst [vmem:[#allocation2 + $0x60] sm:$0xff] 0.0
    %32 = vst [vmem:[#allocation2 + $0x68] sm:$0xff] 0.0
    %33 = vst [vmem:[#allocation2 + $0x70] sm:$0xff] 0.0
    %34 = vst [vmem:[#allocation2 + $0x78] sm:$0xff] 0.0
  $region17: #{up_forward.3} parent=0 // pred_fallthru
    _
  %v35 = vld [vmem:[#allocation2] sm:$0xff]
  %v36 = vld [vmem:[#allocation2 + $0x8] sm:$0xff]
  %v37 = vld [vmem:[#allocation2 + $0x10] sm:$0xff]
  %v38 = vld [vmem:[#allocation2 + $0x18] sm:$0xff]
  %v39 = vld [vmem:[#allocation2 + $0x20] sm:$0xff]
  %v40 = vld [vmem:[#allocation2 + $0x28] sm:$0xff]
  %v41 = vld [vmem:[#allocation2 + $0x30] sm:$0xff]
  %v42 = vld [vmem:[#allocation2 + $0x38] sm:$0xff]
  %v43 = vld [vmem:[#allocation2 + $0x40] sm:$0xff]
  %v44 = vld [vmem:[#allocation2 + $0x48] sm:$0xff]
  %v45 = vld [vmem:[#allocation2 + $0x50] sm:$0xff]
  %v46 = vld [vmem:[#allocation2 + $0x58] sm:$0xff]
  %v47 = vld [vmem:[#allocation2 + $0x60] sm:$0xff]
  %v48 = vld [vmem:[#allocation2 + $0x68] sm:$0xff]
  %v49 = vld [vmem:[#allocation2 + $0x70] sm:$0xff]
  %v50 = vld [vmem:[#allocation2 + $0x78] sm:$0xff]
  %v51 = vld [vmem:[%s0] sm:$0xf]
  %v52 = vld [vmem:[%s0 + $0x4] sm:$0xf]
  %v53 = vld [vmem:[%s0 + $0x8] sm:$0xf]
  %v54 = vld [vmem:[%s0 + $0xc] sm:$0xf]
  %v55 = vld [vmem:[%s0 + $0x10] sm:$0xf]
  %v56 = vld [vmem:[%s0 + $0x14] sm:$0xf]
  %v57 = vld [vmem:[%s0 + $0x18] sm:$0xf]
  %v58 = vld [vmem:[%s0 + $0x1c] sm:$0xf]
  %v59 = vld [vmem:[%s0 + $0x20] sm:$0xf]
  %v60 = vld [vmem:[%s0 + $0x24] sm:$0xf]
  %v61 = vld [vmem:[%s0 + $0x28] sm:$0xf]
  %v62 = vld [vmem:[%s0 + $0x2c] sm:$0xf]
  %v63 = vld [vmem:[%s0 + $0x30] sm:$0xf]
  %v64 = vld [vmem:[%s0 + $0x34] sm:$0xf]
  %v65 = vld [vmem:[%s0 + $0x38] sm:$0xf]
  %v66 = vld [vmem:[%s0 + $0x3c] sm:$0xf]
  %v67 = vld [vmem:[%s1] sm:$0xf]
  %v68 = vld [vmem:[%s1 + $0x4] sm:$0xf]
  %v69 = vld [vmem:[%s1 + $0x8] sm:$0xf]
  %v70 = vld [vmem:[%s1 + $0xc] sm:$0xf]
  %v71 = vld [vmem:[%s1 + $0x10] sm:$0xf]
  %v72 = vld [vmem:[%s1 + $0x14] sm:$0xf]
  %v73 = vld [vmem:[%s1 + $0x18] sm:$0xf]
  %v74 = vld [vmem:[%s1 + $0x1c] sm:$0xf]
  %v75 = vld [vmem:[%s1 + $0x20] sm:$0xf]
  %v76 = vld [vmem:[%s1 + $0x24] sm:$0xf]
  %v77 = vld [vmem:[%s1 + $0x28] sm:$0xf]
  %v78 = vld [vmem:[%s1 + $0x2c] sm:$0xf]
  %v79 = vld [vmem:[%s1 + $0x30] sm:$0xf]
  %v80 = vld [vmem:[%s1 + $0x34] sm:$0xf]
  %v81 = vld [vmem:[%s1 + $0x38] sm:$0xf]
  %v82 = vld [vmem:[%s1 + $0x3c] sm:$0xf]
  %v99 = vunpack.c.l.b16 %v51
  %v100 = vunpack.c.l.b16 %v52
  %v101 = vunpack.c.l.b16 %v53
  %v102 = vunpack.c.l.b16 %v54
  %v103 = vunpack.c.l.b16 %v55
  %v104 = vunpack.c.l.b16 %v56
  %v105 = vunpack.c.l.b16 %v57
  %v106 = vunpack.c.l.b16 %v58
  %v107 = vunpack.c.l.b16 %v59
  %v108 = vunpack.c.l.b16 %v60
  %v109 = vunpack.c.l.b16 %v61
  %v110 = vunpack.c.l.b16 %v62
  %v111 = vunpack.c.l.b16 %v63
  %v112 = vunpack.c.l.b16 %v64
  %v113 = vunpack.c.l.b16 %v65
  %v114 = vunpack.c.l.b16 %v66
  %v115 = vpack.c.b16 %v100, %v99
  %v116 = vpack.c.b16 %v102, %v101
  %v117 = vpack.c.b16 %v104, %v103
  %v118 = vpack.c.b16 %v106, %v105
  %v119 = vpack.c.b16 %v108, %v107
  %v120 = vpack.c.b16 %v110, %v109
  %v121 = vpack.c.b16 %v112, %v111
  %v122 = vpack.c.b16 %v114, %v113
  %v147 = vunpack.c.l.b16 %v67
  %v148 = vunpack.c.l.b16 %v68
  %v149 = vunpack.c.l.b16 %v69
  %v150 = vunpack.c.l.b16 %v70
  %v151 = vunpack.c.l.b16 %v71
  %v152 = vunpack.c.l.b16 %v72
  %v153 = vunpack.c.l.b16 %v73
  %v154 = vunpack.c.l.b16 %v74
  %v155 = vunpack.c.l.b16 %v75
  %v156 = vunpack.c.l.b16 %v76
  %v157 = vunpack.c.l.b16 %v77
  %v158 = vunpack.c.l.b16 %v78
  %v159 = vunpack.c.l.b16 %v79
  %v160 = vunpack.c.l.b16 %v80
  %v161 = vunpack.c.l.b16 %v81
  %v162 = vunpack.c.l.b16 %v82
  %v163 = vpack.c.b16 %v148, %v147
  %v164 = vpack.c.b16 %v150, %v149
  %v165 = vpack.c.b16 %v152, %v151
  %v166 = vpack.c.b16 %v154, %v153
  %v167 = vpack.c.b16 %v156, %v155
  %v168 = vpack.c.b16 %v158, %v157
  %v169 = vpack.c.b16 %v160, %v159
  %v170 = vpack.c.b16 %v162, %v161
  %179 = vmatprep.subr.bf16.mxu0 0
  %180 = vmatpush1.bf16.msra.mxu0 %v163
  %181 = vmatprep.subr.bf16.mxu0 0
  %182 = vmatpush1.bf16.msra.mxu0 %v164
  %183 = vmatprep.subr.bf16.mxu0 0
  %184 = vmatpush1.bf16.msra.mxu0 %v165
  %185 = vmatprep.subr.bf16.mxu0 0
  %186 = vmatpush1.bf16.msra.mxu0 %v166
  %187 = vmatprep.subr.bf16.mxu0 0
  %188 = vmatpush1.bf16.msra.mxu0 %v167
  %189 = vmatprep.subr.bf16.mxu0 0
  %190 = vmatpush1.bf16.msra.mxu0 %v168
  %191 = vmatprep.subr.bf16.mxu0 0
  %192 = vmatpush1.bf16.msra.mxu0 %v169
  %193 = vmatprep.subr.bf16.mxu0 0
  %194 = vmatpush1.bf16.msra.mxu0 %v170
  %195 = vmatprep.subr.bf16.mxu0 0
  %196 = vmatpush1.bf16.msra.mxu0 0
  %197 = vmatprep.subr.bf16.mxu0 0
  %198 = vmatpush1.bf16.msra.mxu0 0
  %199 = vmatprep.subr.bf16.mxu0 0
  %200 = vmatpush1.bf16.msra.mxu0 0
  %201 = vmatprep.subr.bf16.mxu0 0
  %202 = vmatpush1.bf16.msra.mxu0 0
  %203 = vmatprep.subr.bf16.mxu0 0
  %204 = vmatpush1.bf16.msra.mxu0 0
  %205 = vmatprep.subr.bf16.mxu0 0
  %206 = vmatpush1.bf16.msra.mxu0 0
  %207 = vmatprep.subr.bf16.mxu0 0
  %208 = vmatpush1.bf16.msra.mxu0 0
  %209 = vmatprep.subr.bf16.mxu0 0
  %210 = vmatpush1.bf16.msra.mxu0 0
  %211 = vmatprep.mubr.bf16.mxu0 0
  %212 = vmatmul.mubr.bf16.gmra.mrb[0].mxu0 %v115
  %v213 = vpop.f32.mrb[0].mxu0
  %v214 = vadd.f32 0.0, %v213
  %v215 = vpop.f32.mrb[0].mxu0
  %v216 = vpop.f32.mrb[0].mxu0
  %v217 = vadd.f32 0.0, %v216
  %v218 = vpop.f32.mrb[0].mxu0
  %219 = vmatprep.mubr.bf16.mxu0 0
  %220 = vmatmul.mubr.bf16.gmra.mrb[0].mxu0 %v116
  %v221 = vpop.f32.mrb[0].mxu0
  %v222 = vadd.f32 0.0, %v221
  %v223 = vpop.f32.mrb[0].mxu0
  %v224 = vpop.f32.mrb[0].mxu0
  %v225 = vadd.f32 0.0, %v224
  %v226 = vpop.f32.mrb[0].mxu0
  %227 = vmatprep.mubr.bf16.mxu0 0
  %228 = vmatmul.mubr.bf16.gmra.mrb[0].mxu0 %v117
  %v229 = vpop.f32.mrb[0].mxu0
  %v230 = vadd.f32 0.0, %v229
  %v231 = vpop.f32.mrb[0].mxu0
  %v232 = vpop.f32.mrb[0].mxu0
  %v233 = vadd.f32 0.0, %v232
  %v234 = vpop.f32.mrb[0].mxu0
  %235 = vmatprep.mubr.bf16.mxu0 0
  %236 = vmatmul.mubr.bf16.gmra.mrb[0].mxu0 %v118
  %v237 = vpop.f32.mrb[0].mxu0
  %v238 = vadd.f32 0.0, %v237
  %v239 = vpop.f32.mrb[0].mxu0
  %v240 = vpop.f32.mrb[0].mxu0
  %v241 = vadd.f32 0.0, %v240
  %v242 = vpop.f32.mrb[0].mxu0
  %243 = vmatprep.mubr.bf16.mxu0 0
  %244 = vmatmul.mubr.bf16.gmra.mrb[0].mxu0 %v119
  %v245 = vpop.f32.mrb[0].mxu0
  %v246 = vadd.f32 0.0, %v245
  %v247 = vpop.f32.mrb[0].mxu0
  %v248 = vpop.f32.mrb[0].mxu0
  %v249 = vadd.f32 0.0, %v248
  %v250 = vpop.f32.mrb[0].mxu0
  %251 = vmatprep.mubr.bf16.mxu0 0
  %252 = vmatmul.mubr.bf16.gmra.mrb[0].mxu0 %v120
  %v253 = vpop.f32.mrb[0].mxu0
  %v254 = vadd.f32 0.0, %v253
  %v255 = vpop.f32.mrb[0].mxu0
  %v256 = vpop.f32.mrb[0].mxu0
  %v257 = vadd.f32 0.0, %v256
  %v258 = vpop.f32.mrb[0].mxu0
  %259 = vmatprep.mubr.bf16.mxu0 0
  %260 = vmatmul.mubr.bf16.gmra.mrb[0].mxu0 %v121
  %v261 = vpop.f32.mrb[0].mxu0
  %v262 = vadd.f32 0.0, %v261
  %v263 = vpop.f32.mrb[0].mxu0
  %v264 = vpop.f32.mrb[0].mxu0
  %v265 = vadd.f32 0.0, %v264
  %v266 = vpop.f32.mrb[0].mxu0
  %267 = vmatprep.mubr.bf16.mxu0 0
  %268 = vmatmul.mubr.bf16.gmra.mrb[0].mxu0 %v122
  %v269 = vpop.f32.mrb[0].mxu0
  %v270 = vadd.f32 0.0, %v269
  %v271 = vpop.f32.mrb[0].mxu0
  %v272 = vpop.f32.mrb[0].mxu0
  %v273 = vadd.f32 0.0, %v272
  %v274 = vpop.f32.mrb[0].mxu0
  %275 = vdwg.mxu0
  %v276 = vadd.f32 %v35, %v214
  %v277 = vadd.f32 %v36, %v217
  %v278 = vadd.f32 %v37, %v222
  %v279 = vadd.f32 %v38, %v225
  %v280 = vadd.f32 %v39, %v230
  %v281 = vadd.f32 %v40, %v233
  %v282 = vadd.f32 %v41, %v238
  %v283 = vadd.f32 %v42, %v241
  %v284 = vadd.f32 %v43, %v246
  %v285 = vadd.f32 %v44, %v249
  %v286 = vadd.f32 %v45, %v254
  %v287 = vadd.f32 %v46, %v257
  %v288 = vadd.f32 %v47, %v262
  %v289 = vadd.f32 %v48, %v265
  %v290 = vadd.f32 %v49, %v270
  %v291 = vadd.f32 %v50, %v273
  %292 = vst [vmem:[#allocation2] sm:$0xff] %v276
  %293 = vst [vmem:[#allocation2 + $0x8] sm:$0xff] %v277
  %294 = vst [vmem:[#allocation2 + $0x10] sm:$0xff] %v278
  %295 = vst [vmem:[#allocation2 + $0x18] sm:$0xff] %v279
  %296 = vst [vmem:[#allocation2 + $0x20] sm:$0xff] %v280
  %297 = vst [vmem:[#allocation2 + $0x28] sm:$0xff] %v281
  %298 = vst [vmem:[#allocation2 + $0x30] sm:$0xff] %v282
  %299 = vst [vmem:[#allocation2 + $0x38] sm:$0xff] %v283
  %300 = vst [vmem:[#allocation2 + $0x40] sm:$0xff] %v284
  %301 = vst [vmem:[#allocation2 + $0x48] sm:$0xff] %v285
  %302 = vst [vmem:[#allocation2 + $0x50] sm:$0xff] %v286
  %303 = vst [vmem:[#allocation2 + $0x58] sm:$0xff] %v287
  %304 = vst [vmem:[#allocation2 + $0x60] sm:$0xff] %v288
  %305 = vst [vmem:[#allocation2 + $0x68] sm:$0xff] %v289
  %306 = vst [vmem:[#allocation2 + $0x70] sm:$0xff] %v290
  %307 = vst [vmem:[#allocation2 + $0x78] sm:$0xff] %v291
  // Predicated region
  $region18: #{up_forward.3} parent=0 // pred_check
    %p308 = pneg %p15
  $region19: #{up_forward.3} parent=0 // pred_check_branch
    %310 = sbr.rel (%p308) target = $region21
  $region20: #{up_forward.3} parent=0 // pred_region
    %v311 = vld [vmem:[#allocation2] sm:$0xff]
    %v312 = vld [vmem:[#allocation2 + $0x8] sm:$0xff]
    %v313 = vld [vmem:[#allocation2 + $0x10] sm:$0xff]
    %v314 = vld [vmem:[#allocation2 + $0x18] sm:$0xff]
    %v315 = vld [vmem:[#allocation2 + $0x20] sm:$0xff]
    %v316 = vld [vmem:[#allocation2 + $0x28] sm:$0xff]
    %v317 = vld [vmem:[#allocation2 + $0x30] sm:$0xff]
    %v318 = vld [vmem:[#allocation2 + $0x38] sm:$0xff]
    %v319 = vld [vmem:[#allocation2 + $0x40] sm:$0xff]
    %v320 = vld [vmem:[#allocation2 + $0x48] sm:$0xff]
    %v321 = vld [vmem:[#allocation2 + $0x50] sm:$0xff]
    %v322 = vld [vmem:[#allocation2 + $0x58] sm:$0xff]
    %v323 = vld [vmem:[#allocation2 + $0x60] sm:$0xff]
    %v324 = vld [vmem:[#allocation2 + $0x68] sm:$0xff]
    %v325 = vld [vmem:[#allocation2 + $0x70] sm:$0xff]
    %v326 = vld [vmem:[#allocation2 + $0x78] sm:$0xff]
    %v327 = vld [vmem:[%s2] sm:$0x1]
    %v329 = vlaneseq
    %v330 = vshrl.u32 %v329, 7
    %v331 = vsub.s32 0, %v330
    %v332 = vrot.slane %v327, %v331
    %v334 = vadd.f32 %v311, %v332
    %v335 = vadd.f32 %v312, %v332
    %v336 = vadd.f32 %v313, %v332
    %v337 = vadd.f32 %v314, %v332
    %v338 = vadd.f32 %v315, %v332
    %v339 = vadd.f32 %v316, %v332
    %v340 = vadd.f32 %v317, %v332
    %v341 = vadd.f32 %v318, %v332
    %v342 = vadd.f32 %v319, %v332
    %v343 = vadd.f32 %v320, %v332
    %v344 = vadd.f32 %v321, %v332
    %v345 = vadd.f32 %v322, %v332
    %v346 = vadd.f32 %v323, %v332
    %v347 = vadd.f32 %v324, %v332
    %v348 = vadd.f32 %v325, %v332
    %v349 = vadd.f32 %v326, %v332
    %v350 = vpack.c.bf16 %v335, %v334
    %v351 = vpack.c.bf16 %v337, %v336
    %v352 = vpack.c.bf16 %v339, %v338
    %v353 = vpack.c.bf16 %v341, %v340
    %v354 = vpack.c.bf16 %v343, %v342
    %v355 = vpack.c.bf16 %v345, %v344
    %v356 = vpack.c.bf16 %v347, %v346
    %v357 = vpack.c.bf16 %v349, %v348
    %v366 = vunpack.c.l.b16 %v350
    %v367 = vunpack.c.h.b16 %v350
    %v368 = vunpack.c.l.b16 %v351
    %v369 = vunpack.c.h.b16 %v351
    %v370 = vunpack.c.l.b16 %v352
    %v371 = vunpack.c.h.b16 %v352
    %v372 = vunpack.c.l.b16 %v353
    %v373 = vunpack.c.h.b16 %v353
    %v374 = vunpack.c.l.b16 %v354
    %v375 = vunpack.c.h.b16 %v354
    %v376 = vunpack.c.l.b16 %v355
    %v377 = vunpack.c.h.b16 %v355
    %v378 = vunpack.c.l.b16 %v356
    %v379 = vunpack.c.h.b16 %v356
    %v380 = vunpack.c.l.b16 %v357
    %v381 = vunpack.c.h.b16 %v357
    %v382 = vpack.c.b16 %v366, %v366
    %v383 = vpack.c.b16 %v367, %v367
    %v384 = vpack.c.b16 %v368, %v368
    %v385 = vpack.c.b16 %v369, %v369
    %v386 = vpack.c.b16 %v370, %v370
    %v387 = vpack.c.b16 %v371, %v371
    %v388 = vpack.c.b16 %v372, %v372
    %v389 = vpack.c.b16 %v373, %v373
    %v390 = vpack.c.b16 %v374, %v374
    %v391 = vpack.c.b16 %v375, %v375
    %v392 = vpack.c.b16 %v376, %v376
    %v393 = vpack.c.b16 %v377, %v377
    %v394 = vpack.c.b16 %v378, %v378
    %v395 = vpack.c.b16 %v379, %v379
    %v396 = vpack.c.b16 %v380, %v380
    %v397 = vpack.c.b16 %v381, %v381
    %414 = vst [vmem:[%s3] sm:$0xf] %v382
    %415 = vst [vmem:[%s3 + $0x4] sm:$0xf] %v383
    %416 = vst [vmem:[%s3 + $0x8] sm:$0xf] %v384
    %417 = vst [vmem:[%s3 + $0xc] sm:$0xf] %v385
    %418 = vst [vmem:[%s3 + $0x10] sm:$0xf] %v386
    %419 = vst [vmem:[%s3 + $0x14] sm:$0xf] %v387
    %420 = vst [vmem:[%s3 + $0x18] sm:$0xf] %v388
    %421 = vst [vmem:[%s3 + $0x1c] sm:$0xf] %v389
    %422 = vst [vmem:[%s3 + $0x20] sm:$0xf] %v390
    %423 = vst [vmem:[%s3 + $0x24] sm:$0xf] %v391
    %424 = vst [vmem:[%s3 + $0x28] sm:$0xf] %v392
    %425 = vst [vmem:[%s3 + $0x2c] sm:$0xf] %v393
    %426 = vst [vmem:[%s3 + $0x30] sm:$0xf] %v394
    %427 = vst [vmem:[%s3 + $0x34] sm:$0xf] %v395
    %428 = vst [vmem:[%s3 + $0x38] sm:$0xf] %v396
    %429 = vst [vmem:[%s3 + $0x3c] sm:$0xf] %v397
  $region21: #{up_forward.3} parent=0 // pred_fallthru
    _
  // Predicated region
  $region22: #{up_forward.3} parent=0 // pred_check
    _
  $region23: #{up_forward.3} parent=0 // pred_check_branch
    %431 = sbr.rel (0) target = $region25
  $region24: #{up_forward.3} parent=0 // pred_region
    _
  $region25: #{up_forward.3} parent=0 // pred_fallthru
    _
  // Predicated region
  $region26: #{up_forward.3} parent=0 // pred_check
    _
  $region27: #{up_forward.3} parent=0 // pred_check_branch
    %433 = sbr.rel (0) target = $region29
  $region28: #{up_forward.3} parent=0 // pred_region
    _
  $region29: #{up_forward.3} parent=0 // pred_fallthru
    _

// kernel: up_forward.4
$region0: #{up_forward.4}
  #allocation0 [shape = 'u32[]', space=smem, size = 0x4, offset = 0x4, fixed_abs, tag = 'smem constant byte address 0x4 - core index']
  #allocation1 [shape = 'u32[144,128]{1,0:T(1,128)}', space=vmem, size = 0x12000, scoped, tag = 'internal scratch']
  #allocation2 [shape = 'f32[64,128]{1,0:T(8,128)}', space=vmem, size = 0x8000, scoped, tag = 'scratch operand']
  %s0 = inlined_call_operand.vmem [shape: bf16[20,10,10,128], index: 0, kind: input, shape index: {}]
  %s1 = inlined_call_operand.vmem [shape: bf16[3,9,128,128], index: 1, kind: input, shape index: {}]
  %s2 = inlined_call_operand.vmem [shape: f32[1,128], index: 2, kind: input, shape index: {}]
  %s3 = inlined_call_operand.vmem [shape: f32[1,128], index: 3, kind: input, shape index: {}]
  %s4 = inlined_call_operand.vmem [shape: bf16[16,64,128], index: 4, kind: output, shape index: {}]
  %s5 = sld [smem:[#allocation0]]
  $region57: #{up_forward.4} parent=0
    _
  %s7 = ssub.s32 1, %s5
  %s8 = scalar_select 0, %s7, %s5
  loop: start=0, step=1, limit=50
  $region2: #{up_forward.4} parent=0 // loop_pre_header
    _
  $region3: #{up_forward.4} parent=0 // loop_header
    %s10 = sphi 0, %s14
    %p11 = scmp.ge.s32.totalorder %s10, 50
    %s17 = sphi 0, %s36
    %s18 = sphi 0, %s32
    %s19 = sphi 0, %s28
    %s20 = sphi 0, %s17
    %s21 = sphi 0, %s18
    %s22 = sphi 0, %s19
    %s23 = sphi 0, %s20
    %s24 = sphi 0, %s21
    %s25 = sphi 0, %s22
    %s45 = sphi 0, %s47
    %s48 = sphi 0, %s45
    %s49 = sphi 0, %s48
    %s65 = sphi 0, %s49
    %s71 = sphi 0, %s73
    %s74 = sphi 0, %s71
    %s75 = sphi 0, %s74
    %s91 = sphi 0, %s75
    %s95 = sphi 0, %s95
    %s97 = sphi 0, %s95
    %s98 = sphi 0, %s97
    %s112 = sphi 0, %s98
    %s116 = sphi 0, %s116
    %s118 = sphi 0, %s116
    %s119 = sphi 0, %s118
    %s133 = sphi 0, %s119
    %s143 = sphi 0, %s145
    %s146 = sphi 0, %s143
    %s147 = sphi 0, %s146
    %s163 = sphi 0, %s147
  $region4: #{up_forward.4} parent=0 // loop_header_branch
    %13 = sbr.rel (%p11) target = $region8
  $region5: #{up_forward.4} parent=0 // loop_body
    %s15 = ssub.s32 %s10, 1
    %s16 = ssub.s32 %s10, 2
    %s26 = sadd.s32 1, %s19
    %p27 = scmp.ge.s32.totalorder %s26, 3
    %s28 = scalar_select %p27, 0, %s26
    %s29 = sadd.s32 1, %s18
    %s30 = scalar_select %p27, %s29, %s18
    %p31 = scmp.ge.s32.totalorder %s30, 8
    %s32 = scalar_select %p31, 0, %s30
    %s33 = sadd.s32 1, %s17
    %s34 = scalar_select %p31, %s33, %s17
    %p35 = scmp.ge.s32.totalorder %s34, 2
    %s36 = scalar_select %p35, 0, %s34
    %s37 = smul.u32 %s17, 10
    %s38 = sadd.s32 %s37, %s18
    %s39 = sadd.s32 %s38, %s19
    %s40 = smul.u32 %s36, 10
    %s41 = sadd.s32 %s40, %s32
    %s42 = sadd.s32 %s41, %s28
    %s43 = ssub.s32 %s39, %s42
    %p44 = scmp.eq.s32.totalorder %s43, 0
    %s46 = sadd.s32 %s45, 1
    %s47 = scalar_select %p44, %s45, %s46
    %p50 = pneg %p44
    %p51 = scmp.eq.s32.totalorder %s10, 47
    %p52 = por %p50, %p51
    %p53 = scmp.ne.s32.totalorder %s45, %s48
    %p54 = scmp.eq.s32.totalorder %s10, 0
    %p55 = por %p53, %p54
    %p56 = scmp.ne.s32.totalorder %s45, %s48
    %p57 = scmp.eq.s32.totalorder %s15, 47
    %p58 = por %p56, %p57
    %p59 = scmp.ne.s32.totalorder %s48, %s49
    %p60 = scmp.eq.s32.totalorder %s15, 0
    %p61 = por %p59, %p60
    %p62 = scmp.ne.s32.totalorder %s48, %s49
    %p63 = scmp.eq.s32.totalorder %s16, 47
    %p64 = por %p62, %p63
    %p66 = scmp.ne.s32.totalorder %s49, %s65
    %p67 = scmp.eq.s32.totalorder %s16, 0
    %p68 = por %p66, %p67
    %s69 = ssub.s32 %s19, %s28
    %p70 = scmp.eq.s32.totalorder %s69, 0
    %s72 = sadd.s32 %s71, 1
    %s73 = scalar_select %p70, %s71, %s72
    %p76 = pneg %p70
    %p77 = scmp.eq.s32.totalorder %s10, 47
    %p78 = por %p76, %p77
    %p79 = scmp.ne.s32.totalorder %s71, %s74
    %p80 = scmp.eq.s32.totalorder %s10, 0
    %p81 = por %p79, %p80
    %p82 = scmp.ne.s32.totalorder %s71, %s74
    %p83 = scmp.eq.s32.totalorder %s15, 47
    %p84 = por %p82, %p83
    %p85 = scmp.ne.s32.totalorder %s74, %s75
    %p86 = scmp.eq.s32.totalorder %s15, 0
    %p87 = por %p85, %p86
    %p88 = scmp.ne.s32.totalorder %s74, %s75
    %p89 = scmp.eq.s32.totalorder %s16, 47
    %p90 = por %p88, %p89
    %p92 = scmp.ne.s32.totalorder %s75, %s91
    %p93 = scmp.eq.s32.totalorder %s16, 0
    %p94 = por %p92, %p93
    %s96 = sadd.s32 %s95, 1
    %p99 = scmp.eq.s32.totalorder %s10, 47
    %p100 = scmp.ne.s32.totalorder %s95, %s97
    %p101 = scmp.eq.s32.totalorder %s10, 0
    %p102 = por %p100, %p101
    %p103 = scmp.ne.s32.totalorder %s95, %s97
    %p104 = scmp.eq.s32.totalorder %s15, 47
    %p105 = por %p103, %p104
    %p106 = scmp.ne.s32.totalorder %s97, %s98
    %p107 = scmp.eq.s32.totalorder %s15, 0
    %p108 = por %p106, %p107
    %p109 = scmp.ne.s32.totalorder %s97, %s98
    %p110 = scmp.eq.s32.totalorder %s16, 47
    %p111 = por %p109, %p110
    %p113 = scmp.ne.s32.totalorder %s98, %s112
    %p114 = scmp.eq.s32.totalorder %s16, 0
    %p115 = por %p113, %p114
    %s117 = sadd.s32 %s116, 1
    %p120 = scmp.eq.s32.totalorder %s10, 47
    %p121 = scmp.ne.s32.totalorder %s116, %s118
    %p122 = scmp.eq.s32.totalorder %s10, 0
    %p123 = por %p121, %p122
    %p124 = scmp.ne.s32.totalorder %s116, %s118
    %p125 = scmp.eq.s32.totalorder %s15, 47
    %p126 = por %p124, %p125
    %p127 = scmp.ne.s32.totalorder %s118, %s119
    %p128 = scmp.eq.s32.totalorder %s15, 0
    %p129 = por %p127, %p128
    %p130 = scmp.ne.s32.totalorder %s118, %s119
    %p131 = scmp.eq.s32.totalorder %s16, 47
    %p132 = por %p130, %p131
    %p134 = scmp.ne.s32.totalorder %s119, %s133
    %p135 = scmp.eq.s32.totalorder %s16, 0
    %p136 = por %p134, %p135
    %s137 = smul.u32 %s17, 8
    %s138 = sadd.s32 %s137, %s18
    %s139 = smul.u32 %s36, 8
    %s140 = sadd.s32 %s139, %s32
    %s141 = ssub.s32 %s138, %s140
    %p142 = scmp.eq.s32.totalorder %s141, 0
    %s144 = sadd.s32 %s143, 1
    %s145 = scalar_select %p142, %s143, %s144
    %p148 = pneg %p142
    %p149 = scmp.eq.s32.totalorder %s10, 47
    %p150 = por %p148, %p149
    %p151 = scmp.ne.s32.totalorder %s143, %s146
    %p152 = scmp.eq.s32.totalorder %s10, 0
    %p153 = por %p151, %p152
    %p154 = scmp.ne.s32.totalorder %s143, %s146
    %p155 = scmp.eq.s32.totalorder %s15, 47
    %p156 = por %p154, %p155
    %p157 = scmp.ne.s32.totalorder %s146, %s147
    %p158 = scmp.eq.s32.totalorder %s15, 0
    %p159 = por %p157, %p158
    %p160 = scmp.ne.s32.totalorder %s146, %s147
    %p161 = scmp.eq.s32.totalorder %s16, 47
    %p162 = por %p160, %p161
    %p164 = scmp.ne.s32.totalorder %s147, %s163
    %p165 = scmp.eq.s32.totalorder %s16, 0
    %p166 = por %p164, %p165
    %p167 = scmp.le.s32.totalorder 1, %s10
    %p168 = scmp.lt.s32.totalorder %s10, 49
    %p169 = pnand %p167, %p168
    %p170 = pneg %p169
    // Predicated region
    $region9: #{up_forward.4} parent=5 // pred_check
      _
    $region10: #{up_forward.4} parent=5 // pred_check_branch
      %172 = sbr.rel (%p169) target = $region12
    $region11: #{up_forward.4} parent=5 // pred_region
      %s173 = ssub.s32 %s10, 1
      // Predicated region
      $region13: #{up_forward.4} parent=11 // pred_check
        %p174 = pneg %p108
      $region14: #{up_forward.4} parent=11 // pred_check_branch
        %176 = sbr.rel (%p174) target = $region16
      $region15: #{up_forward.4} parent=11 // pred_region
        _
      $region16: #{up_forward.4} parent=11 // pred_fallthru
        _
      // Predicated region
      $region17: #{up_forward.4} parent=11 // pred_check
        %p177 = pneg %p129
      $region18: #{up_forward.4} parent=11 // pred_check_branch
        %179 = sbr.rel (%p177) target = $region20
      $region19: #{up_forward.4} parent=11 // pred_region
        _
      $region20: #{up_forward.4} parent=11 // pred_fallthru
        _
    $region12: #{up_forward.4} parent=5 // pred_fallthru
      _
    %p180 = scmp.lt.s32.totalorder %s10, 48
    // Predicated region
    $region21: #{up_forward.4} parent=5 // pred_check
      %p181 = pneg %p180
    $region22: #{up_forward.4} parent=5 // pred_check_branch
      %183 = sbr.rel (%p181) target = $region24
    $region23: #{up_forward.4} parent=5 // pred_region
      // Predicated region
      $region25: #{up_forward.4} parent=23 // pred_check
        %p184 = pneg %p55
      $region26: #{up_forward.4} parent=23 // pred_check_branch
        %186 = sbr.rel (%p184) target = $region28
      $region27: #{up_forward.4} parent=23 // pred_region
        %s187 = smul.u32 %s17, 10
        %s188 = sadd.s32 %s187, %s18
        %s189 = sadd.s32 %s188, %s19
        %p190 = scmp.lt.s32.totalorder %s189, 19
        %s191 = scalar_select %p190, %s189, 19
        %s192 = smul.addr %s191, 20
        %s193 = smul.addr %s192, 4
        %s194 = scalar_lea.vmem %s0, %s193
        %s195 = smul.u32 %s17, 10
        %s196 = sadd.s32 %s195, %s18
        %s197 = sadd.s32 %s196, %s19
      $region28: #{up_forward.4} parent=23 // pred_fallthru
        _
      // Predicated region
      $region29: #{up_forward.4} parent=23 // pred_check
        %p198 = pneg %p81
      $region30: #{up_forward.4} parent=23 // pred_check_branch
        %200 = sbr.rel (%p198) target = $region32
      $region31: #{up_forward.4} parent=23 // pred_region
        %p201 = scmp.lt.s32.totalorder %s19, 2
        %s202 = scalar_select %p201, %s19, 2
        %s203 = smul.addr %s202, 144
        %s204 = smul.addr %s203, 4
        %s205 = scalar_lea.vmem %s1, %s204
      $region32: #{up_forward.4} parent=23 // pred_fallthru
        _
    $region24: #{up_forward.4} parent=5 // pred_fallthru
      _
    %p206 = scmp.le.s32.totalorder 1, %s10
    %p207 = scmp.lt.s32.totalorder %s10, 49
    %p208 = pnand %p206, %p207
    %p209 = pneg %p208
    // Predicated region
    $region33: #{up_forward.4} parent=5 // pred_check
      _
    $region34: #{up_forward.4} parent=5 // pred_check_branch
      %211 = sbr.rel (%p208) target = $region36
    $region35: #{up_forward.4} parent=5 // pred_region
      %s212 = ssub.s32 %s10, 1
      %s213 = smul.u32 %s20, 10
      %s214 = sadd.s32 %s213, %s21
      %s215 = sadd.s32 %s214, %s22
      %p216 = scmp.lt.s32.totalorder %s215, 19
      %s217 = scalar_select %p216, %s215, 19
      %s218 = smul.addr %s217, 20
      %s219 = smul.addr %s218, 4
      %s220 = scalar_lea.vmem %s0, %s219
      %p221 = pneg %p61
      %p222 = pneg %p58
      %p223 = scmp.lt.s32.totalorder %s22, 2
      %s224 = scalar_select %p223, %s22, 2
      %s225 = smul.addr %s224, 144
      %s226 = smul.addr %s225, 4
      %s227 = scalar_lea.vmem %s1, %s226
      %p228 = pneg %p87
      %p229 = pneg %p84
      %p230 = pneg %p108
      %p231 = pneg %p105
      %p232 = pneg %p129
      %p233 = pneg %p126
      %p234 = pneg %p159
      %p235 = pneg %p156
      %s236 = smul.u32 %s20, 8
      %s237 = sadd.s32 %s236, %s21
      %p238 = scmp.lt.s32.totalorder %s237, 15
      %s239 = scalar_select %p238, %s237, 15
      %s240 = smul.addr %s239, 8
      %s241 = smul.addr %s240, 4
      %s242 = scalar_lea.vmem %s4, %s241
      %s243 = smul.u32 %s20, 10
      %s244 = sadd.s32 %s243, %s21
      %s245 = sadd.s32 %s244, %s22
      %p246 = scmp.lt.s32.totalorder %s245, 19
      %s247 = scalar_select %p246, %s245, 19
      %s248 = smul.addr %s247, 20
      %s249 = smul.addr %s248, 4
      %s250 = scalar_lea.vmem %s0, %s249
      %s251 = smul.u32 %s20, 10
      %s252 = sadd.s32 %s251, %s21
      %s253 = sadd.s32 %s252, %s22
      %p254 = scmp.lt.s32.totalorder %s22, 2
      %s255 = scalar_select %p254, %s22, 2
      %s256 = smul.addr %s255, 144
      %s257 = smul.addr %s256, 4
      %s258 = scalar_lea.vmem %s1, %s257
      %s259 = smul.u32 %s20, 8
      %s260 = sadd.s32 %s259, %s21
      %p261 = scmp.lt.s32.totalorder %s260, 15
      %s262 = scalar_select %p261, %s260, 15
      %s263 = smul.addr %s262, 8
      %s264 = smul.addr %s263, 4
      %s265 = scalar_lea.vmem %s4, %s264
      %s266 = smul.u32 %s20, 8
      %s267 = sadd.s32 %s266, %s21
      %p269 = scmp.eq.s32.totalorder %s22, 0
      // Predicated region
      $region37: #{up_forward.4} parent=35 // pred_check
        %p270 = pneg %p269
      $region38: #{up_forward.4} parent=35 // pred_check_branch
        %272 = sbr.rel (%p270) target = $region40
      $region39: #{up_forward.4} parent=35 // pred_region
        %273 = vst [vmem:[#allocation2] sm:$0xff] 0.0
        %274 = vst [vmem:[#allocation2 + $0x8] sm:$0xff] 0.0
        %275 = vst [vmem:[#allocation2 + $0x10] sm:$0xff] 0.0
        %276 = vst [vmem:[#allocation2 + $0x18] sm:$0xff] 0.0
        %277 = vst [vmem:[#allocation2 + $0x20] sm:$0xff] 0.0
        %278 = vst [vmem:[#allocation2 + $0x28] sm:$0xff] 0.0
        %279 = vst [vmem:[#allocation2 + $0x30] sm:$0xff] 0.0
        %280 = vst [vmem:[#allocation2 + $0x38] sm:$0xff] 0.0
      $region40: #{up_forward.4} parent=35 // pred_fallthru
        _
      %v281 = vld [vmem:[%s250] sm:$0xf]
      %v282 = vld [vmem:[%s250 + $0x8] sm:$0xf]
      %v283 = vld [vmem:[%s250 + $0x10] sm:$0xf]
      %v284 = vld [vmem:[%s250 + $0x18] sm:$0xf]
      %v285 = vld [vmem:[%s250 + $0x20] sm:$0xf]
      %v286 = vld [vmem:[%s250 + $0x28] sm:$0xf]
      %v287 = vld [vmem:[%s250 + $0x30] sm:$0xf]
      %v288 = vld [vmem:[%s250 + $0x38] sm:$0xf]
      %v289 = vld [vmem:[#allocation2] sm:$0xff]
      %v290 = vld [vmem:[#allocation2 + $0x8] sm:$0xff]
      %v291 = vld [vmem:[#allocation2 + $0x10] sm:$0xff]
      %v292 = vld [vmem:[#allocation2 + $0x18] sm:$0xff]
      %v293 = vld [vmem:[#allocation2 + $0x20] sm:$0xff]
      %v294 = vld [vmem:[#allocation2 + $0x28] sm:$0xff]
      %v295 = vld [vmem:[#allocation2 + $0x30] sm:$0xff]
      %v296 = vld [vmem:[#allocation2 + $0x38] sm:$0xff]
      %v297 = vld [vmem:[%s258] sm:$0xf]
      %v298 = vld [vmem:[%s258 + $0x4] sm:$0xf]
      %v299 = vld [vmem:[%s258 + $0x8] sm:$0xf]
      %v300 = vld [vmem:[%s258 + $0xc] sm:$0xf]
      %v301 = vld [vmem:[%s258 + $0x10] sm:$0xf]
      %v302 = vld [vmem:[%s258 + $0x14] sm:$0xf]
      %v303 = vld [vmem:[%s258 + $0x18] sm:$0xf]
      %v304 = vld [vmem:[%s258 + $0x1c] sm:$0xf]
      %v305 = vld [vmem:[%s258 + $0x20] sm:$0xf]
      %v306 = vld [vmem:[%s258 + $0x24] sm:$0xf]
      %v307 = vld [vmem:[%s258 + $0x28] sm:$0xf]
      %v308 = vld [vmem:[%s258 + $0x2c] sm:$0xf]
      %v309 = vld [vmem:[%s258 + $0x30] sm:$0xf]
      %v310 = vld [vmem:[%s258 + $0x34] sm:$0xf]
      %v311 = vld [vmem:[%s258 + $0x38] sm:$0xf]
      %v312 = vld [vmem:[%s258 + $0x3c] sm:$0xf]
      %v321 = vunpack.c.l.b16 %v281
      %v322 = vunpack.c.l.b16 %v282
      %v323 = vunpack.c.l.b16 %v283
      %v324 = vunpack.c.l.b16 %v284
      %v325 = vunpack.c.l.b16 %v285
      %v326 = vunpack.c.l.b16 %v286
      %v327 = vunpack.c.l.b16 %v287
      %v328 = vunpack.c.l.b16 %v288
      %v329 = vpack.c.b16 %v322, %v321
      %v330 = vpack.c.b16 %v324, %v323
      %v331 = vpack.c.b16 %v326, %v325
      %v332 = vpack.c.b16 %v328, %v327
      %v353 = vunpack.c.l.b16 %v297
      %v354 = vunpack.c.l.b16 %v298
      %v355 = vunpack.c.l.b16 %v299
      %v356 = vunpack.c.l.b16 %v300
      %v357 = vunpack.c.l.b16 %v301
      %v358 = vunpack.c.l.b16 %v302
      %v359 = vunpack.c.l.b16 %v303
      %v360 = vunpack.c.l.b16 %v304
      %v361 = vunpack.c.l.b16 %v305
      %v362 = vunpack.c.l.b16 %v306
      %v363 = vunpack.c.l.b16 %v307
      %v364 = vunpack.c.l.b16 %v308
      %v365 = vunpack.c.l.b16 %v309
      %v366 = vunpack.c.l.b16 %v310
      %v367 = vunpack.c.l.b16 %v311
      %v368 = vunpack.c.l.b16 %v312
      %v369 = vpack.c.b16 %v354, %v353
      %v370 = vpack.c.b16 %v356, %v355
      %v371 = vpack.c.b16 %v358, %v357
      %v372 = vpack.c.b16 %v360, %v359
      %v373 = vpack.c.b16 %v362, %v361
      %v374 = vpack.c.b16 %v364, %v363
      %v375 = vpack.c.b16 %v366, %v365
      %v376 = vpack.c.b16 %v368, %v367
      %385 = vmatprep.subr.bf16.mxu0 0
      %386 = vmatpush1.bf16.msra.mxu0 %v369
      %387 = vmatprep.subr.bf16.mxu0 0
      %388 = vmatpush1.bf16.msra.mxu0 %v370
      %389 = vmatprep.subr.bf16.mxu0 0
      %390 = vmatpush1.bf16.msra.mxu0 %v371
      %391 = vmatprep.subr.bf16.mxu0 0
      %392 = vmatpush1.bf16.msra.mxu0 %v372
      %393 = vmatprep.subr.bf16.mxu0 0
      %394 = vmatpush1.bf16.msra.mxu0 %v373
      %395 = vmatprep.subr.bf16.mxu0 0
      %396 = vmatpush1.bf16.msra.mxu0 %v374
      %397 = vmatprep.subr.bf16.mxu0 0
      %398 = vmatpush1.bf16.msra.mxu0 %v375
      %399 = vmatprep.subr.bf16.mxu0 0
      %400 = vmatpush1.bf16.msra.mxu0 %v376
      %401 = vmatprep.subr.bf16.mxu0 0
      %402 = vmatpush1.bf16.msra.mxu0 0
      %403 = vmatprep.subr.bf16.mxu0 0
      %404 = vmatpush1.bf16.msra.mxu0 0
      %405 = vmatprep.subr.bf16.mxu0 0
      %406 = vmatpush1.bf16.msra.mxu0 0
      %407 = vmatprep.subr.bf16.mxu0 0
      %408 = vmatpush1.bf16.msra.mxu0 0
      %409 = vmatprep.subr.bf16.mxu0 0
      %410 = vmatpush1.bf16.msra.mxu0 0
      %411 = vmatprep.subr.bf16.mxu0 0
      %412 = vmatpush1.bf16.msra.mxu0 0
      %413 = vmatprep.subr.bf16.mxu0 0
      %414 = vmatpush1.bf16.msra.mxu0 0
      %415 = vmatprep.subr.bf16.mxu0 0
      %416 = vmatpush1.bf16.msra.mxu0 0
      %417 = vmatprep.mubr.bf16.mxu0 0
      %418 = vmatmul.mubr.bf16.gmra.mrb[0].mxu0 %v329
      %v419 = vpop.f32.mrb[0].mxu0
      %v420 = vadd.f32 0.0, %v419
      %v421 = vpop.f32.mrb[0].mxu0
      %v422 = vpop.f32.mrb[0].mxu0
      %v423 = vadd.f32 0.0, %v422
      %v424 = vpop.f32.mrb[0].mxu0
      %425 = vmatprep.mubr.bf16.mxu0 0
      %426 = vmatmul.mubr.bf16.gmra.mrb[0].mxu0 %v330
      %v427 = vpop.f32.mrb[0].mxu0
      %v428 = vadd.f32 0.0, %v427
      %v429 = vpop.f32.mrb[0].mxu0
      %v430 = vpop.f32.mrb[0].mxu0
      %v431 = vadd.f32 0.0, %v430
      %v432 = vpop.f32.mrb[0].mxu0
      %433 = vmatprep.mubr.bf16.mxu0 0
      %434 = vmatmul.mubr.bf16.gmra.mrb[0].mxu0 %v331
      %v435 = vpop.f32.mrb[0].mxu0
      %v436 = vadd.f32 0.0, %v435
      %v437 = vpop.f32.mrb[0].mxu0
      %v438 = vpop.f32.mrb[0].mxu0
      %v439 = vadd.f32 0.0, %v438
      %v440 = vpop.f32.mrb[0].mxu0
      %441 = vmatprep.mubr.bf16.mxu0 0
      %442 = vmatmul.mubr.bf16.gmra.mrb[0].mxu0 %v332
      %v443 = vpop.f32.mrb[0].mxu0
      %v444 = vadd.f32 0.0, %v443
      %v445 = vpop.f32.mrb[0].mxu0
      %v446 = vpop.f32.mrb[0].mxu0
      %v447 = vadd.f32 0.0, %v446
      %v448 = vpop.f32.mrb[0].mxu0
      %449 = vdwg.mxu0
      %v450 = vadd.f32 %v289, %v420
      %v451 = vadd.f32 %v290, %v423
      %v452 = vadd.f32 %v291, %v428
      %v453 = vadd.f32 %v292, %v431
      %v454 = vadd.f32 %v293, %v436
      %v455 = vadd.f32 %v294, %v439
      %v456 = vadd.f32 %v295, %v444
      %v457 = vadd.f32 %v296, %v447
      %458 = vst [vmem:[#allocation2] sm:$0xff] %v450
      %459 = vst [vmem:[#allocation2 + $0x8] sm:$0xff] %v451
      %460 = vst [vmem:[#allocation2 + $0x10] sm:$0xff] %v452
      %461 = vst [vmem:[#allocation2 + $0x18] sm:$0xff] %v453
      %462 = vst [vmem:[#allocation2 + $0x20] sm:$0xff] %v454
      %463 = vst [vmem:[#allocation2 + $0x28] sm:$0xff] %v455
      %464 = vst [vmem:[#allocation2 + $0x30] sm:$0xff] %v456
      %465 = vst [vmem:[#allocation2 + $0x38] sm:$0xff] %v457
      %v466 = vld [vmem:[%s250] sm:$0xf]
      %v467 = vld [vmem:[%s250 + $0x4] sm:$0x1]
      %v468 = vld [vmem:[%s250 + $0x8] sm:$0xf]
      %v469 = vld [vmem:[%s250 + $0xc] sm:$0x1]
      %v470 = vld [vmem:[%s250 + $0x10] sm:$0xf]
      %v471 = vld [vmem:[%s250 + $0x14] sm:$0x1]
      %v472 = vld [vmem:[%s250 + $0x18] sm:$0xf]
      %v473 = vld [vmem:[%s250 + $0x1c] sm:$0x1]
      %v474 = vld [vmem:[%s250 + $0x20] sm:$0xf]
      %v475 = vld [vmem:[%s250 + $0x24] sm:$0x1]
      %v476 = vld [vmem:[%s250 + $0x28] sm:$0xf]
      %v477 = vld [vmem:[%s250 + $0x2c] sm:$0x1]
      %v478 = vld [vmem:[%s250 + $0x30] sm:$0xf]
      %v479 = vld [vmem:[%s250 + $0x34] sm:$0x1]
      %v480 = vld [vmem:[%s250 + $0x38] sm:$0xf]
      %v481 = vld [vmem:[%s250 + $0x3c] sm:$0x1]
      %vm482 = vsmask.f32 3328
      %vm483 = vsmask.f32 7440
      %vm484 = vmor %vm482, %vm483
      %v486 = vshrl.u32 %v466, 16
      %v488 = vrot.slane %v486, 4
      %v489 = vshll.u32 %v466, 16
      %v491 = vrot.slane %v489, 5
      %v492 = vor.u32 %v488, %v491
      %v493 = vrot.slane %v492, 4
      %v495 = vshll.u32 %v467, 16
      %v497 = vrot.slane %v495, 5
      %v498 = vsel %vm484, %v493, %v497
      %v500 = vshrl.u32 %v468, 16
      %v502 = vrot.slane %v500, 4
      %v503 = vshll.u32 %v468, 16
      %v505 = vrot.slane %v503, 5
      %v506 = vor.u32 %v502, %v505
      %v507 = vrot.slane %v506, 4
      %v509 = vshll.u32 %v469, 16
      %v511 = vrot.slane %v509, 5
      %v512 = vsel %vm484, %v507, %v511
      %v514 = vshrl.u32 %v470, 16
      %v516 = vrot.slane %v514, 4
      %v517 = vshll.u32 %v470, 16
      %v519 = vrot.slane %v517, 5
      %v520 = vor.u32 %v516, %v519
      %v521 = vrot.slane %v520, 4
      %v523 = vshll.u32 %v471, 16
      %v525 = vrot.slane %v523, 5
      %v526 = vsel %vm484, %v521, %v525
      %v528 = vshrl.u32 %v472, 16
      %v530 = vrot.slane %v528, 4
      %v531 = vshll.u32 %v472, 16
      %v533 = vrot.slane %v531, 5
      %v534 = vor.u32 %v530, %v533
      %v535 = vrot.slane %v534, 4
      %v537 = vshll.u32 %v473, 16
      %v539 = vrot.slane %v537, 5
      %v540 = vsel %vm484, %v535, %v539
      %v542 = vshrl.u32 %v474, 16
      %v544 = vrot.slane %v542, 4
      %v545 = vshll.u32 %v474, 16
      %v547 = vrot.slane %v545, 5
      %v548 = vor.u32 %v544, %v547
      %v549 = vrot.slane %v548, 4
      %v551 = vshll.u32 %v475, 16
      %v553 = vrot.slane %v551, 5
      %v554 = vsel %vm484, %v549, %v553
      %v556 = vshrl.u32 %v476, 16
      %v558 = vrot.slane %v556, 4
      %v559 = vshll.u32 %v476, 16
      %v561 = vrot.slane %v559, 5
      %v562 = vor.u32 %v558, %v561
      %v563 = vrot.slane %v562, 4
      %v565 = vshll.u32 %v477, 16
      %v567 = vrot.slane %v565, 5
      %v568 = vsel %vm484, %v563, %v567
      %v570 = vshrl.u32 %v478, 16
      %v572 = vrot.slane %v570, 4
      %v573 = vshll.u32 %v478, 16
      %v575 = vrot.slane %v573, 5
      %v576 = vor.u32 %v572, %v575
      %v577 = vrot.slane %v576, 4
      %v579 = vshll.u32 %v479, 16
      %v581 = vrot.slane %v579, 5
      %v582 = vsel %vm484, %v577, %v581
      %v584 = vshrl.u32 %v480, 16
      %v586 = vrot.slane %v584, 4
      %v587 = vshll.u32 %v480, 16
      %v589 = vrot.slane %v587, 5
      %v590 = vor.u32 %v586, %v589
      %v591 = vrot.slane %v590, 4
      %v593 = vshll.u32 %v481, 16
      %v595 = vrot.slane %v593, 5
      %v596 = vsel %vm484, %v591, %v595
      %v597 = vld [vmem:[#allocation2] sm:$0xff]
      %v598 = vld [vmem:[#allocation2 + $0x8] sm:$0xff]
      %v599 = vld [vmem:[#allocation2 + $0x10] sm:$0xff]
      %v600 = vld [vmem:[#allocation2 + $0x18] sm:$0xff]
      %v601 = vld [vmem:[#allocation2 + $0x20] sm:$0xff]
      %v602 = vld [vmem:[#allocation2 + $0x28] sm:$0xff]
      %v603 = vld [vmem:[#allocation2 + $0x30] sm:$0xff]
      %v604 = vld [vmem:[#allocation2 + $0x38] sm:$0xff]
      %s605 = scalar_lea.vmem %s258, 64
      %v606 = vld [vmem:[%s605] sm:$0xf]
      %v607 = vld [vmem:[%s605 + $0x4] sm:$0xf]
      %v608 = vld [vmem:[%s605 + $0x8] sm:$0xf]
      %v609 = vld [vmem:[%s605 + $0xc] sm:$0xf]
      %v610 = vld [vmem:[%s605 + $0x10] sm:$0xf]
      %v611 = vld [vmem:[%s605 + $0x14] sm:$0xf]
      %v612 = vld [vmem:[%s605 + $0x18] sm:$0xf]
      %v613 = vld [vmem:[%s605 + $0x1c] sm:$0xf]
      %v614 = vld [vmem:[%s605 + $0x20] sm:$0xf]
      %v615 = vld [vmem:[%s605 + $0x24] sm:$0xf]
      %v616 = vld [vmem:[%s605 + $0x28] sm:$0xf]
      %v617 = vld [vmem:[%s605 + $0x2c] sm:$0xf]
      %v618 = vld [vmem:[%s605 + $0x30] sm:$0xf]
      %v619 = vld [vmem:[%s605 + $0x34] sm:$0xf]
      %v620 = vld [vmem:[%s605 + $0x38] sm:$0xf]
      %v621 = vld [vmem:[%s605 + $0x3c] sm:$0xf]
      %v622 = vunpack.c.l.b16 %v498
      %v623 = vunpack.c.l.b16 %v512
      %v624 = vunpack.c.l.b16 %v526
      %v625 = vunpack.c.l.b16 %v540
      %v626 = vunpack.c.l.b16 %v554
      %v627 = vunpack.c.l.b16 %v568
      %v628 = vunpack.c.l.b16 %v582
      %v629 = vunpack.c.l.b16 %v596
      %v630 = vpack.c.b16 %v623, %v622
      %v631 = vpack.c.b16 %v625, %v624
      %v632 = vpack.c.b16 %v627, %v626
      %v633 = vpack.c.b16 %v629, %v628
      %v654 = vunpack.c.l.b16 %v606
      %v655 = vunpack.c.l.b16 %v607
      %v656 = vunpack.c.l.b16 %v608
      %v657 = vunpack.c.l.b16 %v609
      %v658 = vunpack.c.l.b16 %v610
      %v659 = vunpack.c.l.b16 %v611
      %v660 = vunpack.c.l.b16 %v612
      %v661 = vunpack.c.l.b16 %v613
      %v662 = vunpack.c.l.b16 %v614
      %v663 = vunpack.c.l.b16 %v615
      %v664 = vunpack.c.l.b16 %v616
      %v665 = vunpack.c.l.b16 %v617
      %v666 = vunpack.c.l.b16 %v618
      %v667 = vunpack.c.l.b16 %v619
      %v668 = vunpack.c.l.b16 %v620
      %v669 = vunpack.c.l.b16 %v621
      %v670 = vpack.c.b16 %v655, %v654
      %v671 = vpack.c.b16 %v657, %v656
      %v672 = vpack.c.b16 %v659, %v658
      %v673 = vpack.c.b16 %v661, %v660
      %v674 = vpack.c.b16 %v663, %v662
      %v675 = vpack.c.b16 %v665, %v664
      %v676 = vpack.c.b16 %v667, %v666
      %v677 = vpack.c.b16 %v669, %v668
      %686 = vmatprep.subr.bf16.mxu0 0
      %687 = vmatpush1.bf16.msra.mxu0 %v670
      %688 = vmatprep.subr.bf16.mxu0 0
      %689 = vmatpush1.bf16.msra.mxu0 %v671
      %690 = vmatprep.subr.bf16.mxu0 0
      %691 = vmatpush1.bf16.msra.mxu0 %v672
      %692 = vmatprep.subr.bf16.mxu0 0
      %693 = vmatpush1.bf16.msra.mxu0 %v673
      %694 = vmatprep.subr.bf16.mxu0 0
      %695 = vmatpush1.bf16.msra.mxu0 %v674
      %696 = vmatprep.subr.bf16.mxu0 0
      %697 = vmatpush1.bf16.msra.mxu0 %v675
      %698 = vmatprep.subr.bf16.mxu0 0
      %699 = vmatpush1.bf16.msra.mxu0 %v676
      %700 = vmatprep.subr.bf16.mxu0 0
      %701 = vmatpush1.bf16.msra.mxu0 %v677
      %702 = vmatprep.subr.bf16.mxu0 0
      %703 = vmatpush1.bf16.msra.mxu0 0
      %704 = vmatprep.subr.bf16.mxu0 0
      %705 = vmatpush1.bf16.msra.mxu0 0
      %706 = vmatprep.subr.bf16.mxu0 0
      %707 = vmatpush1.bf16.msra.mxu0 0
      %708 = vmatprep.subr.bf16.mxu0 0
      %709 = vmatpush1.bf16.msra.mxu0 0
      %710 = vmatprep.subr.bf16.mxu0 0
      %711 = vmatpush1.bf16.msra.mxu0 0
      %712 = vmatprep.subr.bf16.mxu0 0
      %713 = vmatpush1.bf16.msra.mxu0 0
      %714 = vmatprep.subr.bf16.mxu0 0
      %715 = vmatpush1.bf16.msra.mxu0 0
      %716 = vmatprep.subr.bf16.mxu0 0
      %717 = vmatpush1.bf16.msra.mxu0 0
      %718 = vmatprep.mubr.bf16.mxu0 0
      %719 = vmatmul.mubr.bf16.gmra.mrb[0].mxu0 %v630
      %v720 = vpop.f32.mrb[0].mxu0
      %v721 = vadd.f32 0.0, %v720
      %v722 = vpop.f32.mrb[0].mxu0
      %v723 = vpop.f32.mrb[0].mxu0
      %v724 = vadd.f32 0.0, %v723
      %v725 = vpop.f32.mrb[0].mxu0
      %726 = vmatprep.mubr.bf16.mxu0 0
      %727 = vmatmul.mubr.bf16.gmra.mrb[0].mxu0 %v631
      %v728 = vpop.f32.mrb[0].mxu0
      %v729 = vadd.f32 0.0, %v728
      %v730 = vpop.f32.mrb[0].mxu0
      %v731 = vpop.f32.mrb[0].mxu0
      %v732 = vadd.f32 0.0, %v731
      %v733 = vpop.f32.mrb[0].mxu0
      %734 = vmatprep.mubr.bf16.mxu0 0
      %735 = vmatmul.mubr.bf16.gmra.mrb[0].mxu0 %v632
      %v736 = vpop.f32.mrb[0].mxu0
      %v737 = vadd.f32 0.0, %v736
      %v738 = vpop.f32.mrb[0].mxu0
      %v739 = vpop.f32.mrb[0].mxu0
      %v740 = vadd.f32 0.0, %v739
      %v741 = vpop.f32.mrb[0].mxu0
      %742 = vmatprep.mubr.bf16.mxu0 0
      %743 = vmatmul.mubr.bf16.gmra.mrb[0].mxu0 %v633
      %v744 = vpop.f32.mrb[0].mxu0
      %v745 = vadd.f32 0.0, %v744
      %v746 = vpop.f32.mrb[0].mxu0
      %v747 = vpop.f32.mrb[0].mxu0
      %v748 = vadd.f32 0.0, %v747
      %v749 = vpop.f32.mrb[0].mxu0
      %750 = vdwg.mxu0
      %v751 = vadd.f32 %v597, %v721
      %v752 = vadd.f32 %v598, %v724
      %v753 = vadd.f32 %v599, %v729
      %v754 = vadd.f32 %v600, %v732
      %v755 = vadd.f32 %v601, %v737
      %v756 = vadd.f32 %v602, %v740
      %v757 = vadd.f32 %v603, %v745
      %v758 = vadd.f32 %v604, %v748
      %759 = vst [vmem:[#allocation2] sm:$0xff] %v751
      %760 = vst [vmem:[#allocation2 + $0x8] sm:$0xff] %v752
      %761 = vst [vmem:[#allocation2 + $0x10] sm:$0xff] %v753
      %762 = vst [vmem:[#allocation2 + $0x18] sm:$0xff] %v754
      %763 = vst [vmem:[#allocation2 + $0x20] sm:$0xff] %v755
      %764 = vst [vmem:[#allocation2 + $0x28] sm:$0xff] %v756
      %765 = vst [vmem:[#allocation2 + $0x30] sm:$0xff] %v757
      %766 = vst [vmem:[#allocation2 + $0x38] sm:$0xff] %v758
      %v767 = vld [vmem:[%s250] sm:$0xe]
      %v768 = vld [vmem:[%s250 + $0x4] sm:$0x1]
      %v769 = vld [vmem:[%s250 + $0x8] sm:$0xe]
      %v770 = vld [vmem:[%s250 + $0xc] sm:$0x1]
      %v771 = vld [vmem:[%s250 + $0x10] sm:$0xe]
      %v772 = vld [vmem:[%s250 + $0x14] sm:$0x1]
      %v773 = vld [vmem:[%s250 + $0x18] sm:$0xe]
      %v774 = vld [vmem:[%s250 + $0x1c] sm:$0x1]
      %v775 = vld [vmem:[%s250 + $0x20] sm:$0xe]
      %v776 = vld [vmem:[%s250 + $0x24] sm:$0x1]
      %v777 = vld [vmem:[%s250 + $0x28] sm:$0xe]
      %v778 = vld [vmem:[%s250 + $0x2c] sm:$0x1]
      %v779 = vld [vmem:[%s250 + $0x30] sm:$0xe]
      %v780 = vld [vmem:[%s250 + $0x34] sm:$0x1]
      %v781 = vld [vmem:[%s250 + $0x38] sm:$0xe]
      %v782 = vld [vmem:[%s250 + $0x3c] sm:$0x1]
      %vm799 = vcmask 1042432
      %vm800 = vcmask 1046532
      %vm801 = vmor %vm799, %vm800
      %v802 = vrot.slane %v767, 5
      %v803 = vrot.slane %v802, 4
      %v804 = vrot.slane %v768, 5
      %v805 = vsel %vm801, %v803, %v804
      %v806 = vrot.slane %v769, 5
      %v807 = vrot.slane %v806, 4
      %v808 = vrot.slane %v770, 5
      %v809 = vsel %vm801, %v807, %v808
      %v810 = vrot.slane %v771, 5
      %v811 = vrot.slane %v810, 4
      %v812 = vrot.slane %v772, 5
      %v813 = vsel %vm801, %v811, %v812
      %v814 = vrot.slane %v773, 5
      %v815 = vrot.slane %v814, 4
      %v816 = vrot.slane %v774, 5
      %v817 = vsel %vm801, %v815, %v816
      %v818 = vrot.slane %v775, 5
      %v819 = vrot.slane %v818, 4
      %v820 = vrot.slane %v776, 5
      %v821 = vsel %vm801, %v819, %v820
      %v822 = vrot.slane %v777, 5
      %v823 = vrot.slane %v822, 4
      %v824 = vrot.slane %v778, 5
      %v825 = vsel %vm801, %v823, %v824
      %v826 = vrot.slane %v779, 5
      %v827 = vrot.slane %v826, 4
      %v828 = vrot.slane %v780, 5
      %v829 = vsel %vm801, %v827, %v828
      %v830 = vrot.slane %v781, 5
      %v831 = vrot.slane %v830, 4
      %v832 = vrot.slane %v782, 5
      %v833 = vsel %vm801, %v831, %v832
      %v834 = vld [vmem:[#allocation2] sm:$0xff]
      %v835 = vld [vmem:[#allocation2 + $0x8] sm:$0xff]
      %v836 = vld [vmem:[#allocation2 + $0x10] sm:$0xff]
      %v837 = vld [vmem:[#allocation2 + $0x18] sm:$0xff]
      %v838 = vld [vmem:[#allocation2 + $0x20] sm:$0xff]
      %v839 = vld [vmem:[#allocation2 + $0x28] sm:$0xff]
      %v840 = vld [vmem:[#allocation2 + $0x30] sm:$0xff]
      %v841 = vld [vmem:[#allocation2 + $0x38] sm:$0xff]
      %s842 = scalar_lea.vmem %s258, 128
      %v843 = vld [vmem:[%s842] sm:$0xf]
      %v844 = vld [vmem:[%s842 + $0x4] sm:$0xf]
      %v845 = vld [vmem:[%s842 + $0x8] sm:$0xf]
      %v846 = vld [vmem:[%s842 + $0xc] sm:$0xf]
      %v847 = vld [vmem:[%s842 + $0x10] sm:$0xf]
      %v848 = vld [vmem:[%s842 + $0x14] sm:$0xf]
      %v849 = vld [vmem:[%s842 + $0x18] sm:$0xf]
      %v850 = vld [vmem:[%s842 + $0x1c] sm:$0xf]
      %v851 = vld [vmem:[%s842 + $0x20] sm:$0xf]
      %v852 = vld [vmem:[%s842 + $0x24] sm:$0xf]
      %v853 = vld [vmem:[%s842 + $0x28] sm:$0xf]
      %v854 = vld [vmem:[%s842 + $0x2c] sm:$0xf]
      %v855 = vld [vmem:[%s842 + $0x30] sm:$0xf]
      %v856 = vld [vmem:[%s842 + $0x34] sm:$0xf]
      %v857 = vld [vmem:[%s842 + $0x38] sm:$0xf]
      %v858 = vld [vmem:[%s842 + $0x3c] sm:$0xf]
      %v859 = vunpack.c.l.b16 %v805
      %v860 = vunpack.c.l.b16 %v809
      %v861 = vunpack.c.l.b16 %v813
      %v862 = vunpack.c.l.b16 %v817
      %v863 = vunpack.c.l.b16 %v821
      %v864 = vunpack.c.l.b16 %v825
      %v865 = vunpack.c.l.b16 %v829
      %v866 = vunpack.c.l.b16 %v833
      %v867 = vpack.c.b16 %v860, %v859
      %v868 = vpack.c.b16 %v862, %v861
      %v869 = vpack.c.b16 %v864, %v863
      %v870 = vpack.c.b16 %v866, %v865
      %v891 = vunpack.c.l.b16 %v843
      %v892 = vunpack.c.l.b16 %v844
      %v893 = vunpack.c.l.b16 %v845
      %v894 = vunpack.c.l.b16 %v846
      %v895 = vunpack.c.l.b16 %v847
      %v896 = vunpack.c.l.b16 %v848
      %v897 = vunpack.c.l.b16 %v849
      %v898 = vunpack.c.l.b16 %v850
      %v899 = vunpack.c.l.b16 %v851
      %v900 = vunpack.c.l.b16 %v852
      %v901 = vunpack.c.l.b16 %v853
      %v902 = vunpack.c.l.b16 %v854
      %v903 = vunpack.c.l.b16 %v855
      %v904 = vunpack.c.l.b16 %v856
      %v905 = vunpack.c.l.b16 %v857
      %v906 = vunpack.c.l.b16 %v858
      %v907 = vpack.c.b16 %v892, %v891
      %v908 = vpack.c.b16 %v894, %v893
      %v909 = vpack.c.b16 %v896, %v895
      %v910 = vpack.c.b16 %v898, %v897
      %v911 = vpack.c.b16 %v900, %v899
      %v912 = vpack.c.b16 %v902, %v901
      %v913 = vpack.c.b16 %v904, %v903
      %v914 = vpack.c.b16 %v906, %v905
      %923 = vmatprep.subr.bf16.mxu0 0
      %924 = vmatpush1.bf16.msra.mxu0 %v907
      %925 = vmatprep.subr.bf16.mxu0 0
      %926 = vmatpush1.bf16.msra.mxu0 %v908
      %927 = vmatprep.subr.bf16.mxu0 0
      %928 = vmatpush1.bf16.msra.mxu0 %v909
      %929 = vmatprep.subr.bf16.mxu0 0
      %930 = vmatpush1.bf16.msra.mxu0 %v910
      %931 = vmatprep.subr.bf16.mxu0 0
      %932 = vmatpush1.bf16.msra.mxu0 %v911
      %933 = vmatprep.subr.bf16.mxu0 0
      %934 = vmatpush1.bf16.msra.mxu0 %v912
      %935 = vmatprep.subr.bf16.mxu0 0
      %936 = vmatpush1.bf16.msra.mxu0 %v913
      %937 = vmatprep.subr.bf16.mxu0 0
      %938 = vmatpush1.bf16.msra.mxu0 %v914
      %939 = vmatprep.subr.bf16.mxu0 0
      %940 = vmatpush1.bf16.msra.mxu0 0
      %941 = vmatprep.subr.bf16.mxu0 0
      %942 = vmatpush1.bf16.msra.mxu0 0
      %943 = vmatprep.subr.bf16.mxu0 0
      %944 = vmatpush1.bf16.msra.mxu0 0
      %945 = vmatprep.subr.bf16.mxu0 0
      %946 = vmatpush1.bf16.msra.mxu0 0
      %947 = vmatprep.subr.bf16.mxu0 0
      %948 = vmatpush1.bf16.msra.mxu0 0
      %949 = vmatprep.subr.bf16.mxu0 0
      %950 = vmatpush1.bf16.msra.mxu0 0
      %951 = vmatprep.subr.bf16.mxu0 0
      %952 = vmatpush1.bf16.msra.mxu0 0
      %953 = vmatprep.subr.bf16.mxu0 0
      %954 = vmatpush1.bf16.msra.mxu0 0
      %955 = vmatprep.mubr.bf16.mxu0 0
      %956 = vmatmul.mubr.bf16.gmra.mrb[0].mxu0 %v867
      %v957 = vpop.f32.mrb[0].mxu0
      %v958 = vadd.f32 0.0, %v957
      %v959 = vpop.f32.mrb[0].mxu0
      %v960 = vpop.f32.mrb[0].mxu0
      %v961 = vadd.f32 0.0, %v960
      %v962 = vpop.f32.mrb[0].mxu0
      %963 = vmatprep.mubr.bf16.mxu0 0
      %964 = vmatmul.mubr.bf16.gmra.mrb[0].mxu0 %v868
      %v965 = vpop.f32.mrb[0].mxu0
      %v966 = vadd.f32 0.0, %v965
      %v967 = vpop.f32.mrb[0].mxu0
      %v968 = vpop.f32.mrb[0].mxu0
      %v969 = vadd.f32 0.0, %v968
      %v970 = vpop.f32.mrb[0].mxu0
      %971 = vmatprep.mubr.bf16.mxu0 0
      %972 = vmatmul.mubr.bf16.gmra.mrb[0].mxu0 %v869
      %v973 = vpop.f32.mrb[0].mxu0
      %v974 = vadd.f32 0.0, %v973
      %v975 = vpop.f32.mrb[0].mxu0
      %v976 = vpop.f32.mrb[0].mxu0
      %v977 = vadd.f32 0.0, %v976
      %v978 = vpop.f32.mrb[0].mxu0
      %979 = vmatprep.mubr.bf16.mxu0 0
      %980 = vmatmul.mubr.bf16.gmra.mrb[0].mxu0 %v870
      %v981 = vpop.f32.mrb[0].mxu0
      %v982 = vadd.f32 0.0, %v981
      %v983 = vpop.f32.mrb[0].mxu0
      %v984 = vpop.f32.mrb[0].mxu0
      %v985 = vadd.f32 0.0, %v984
      %v986 = vpop.f32.mrb[0].mxu0
      %987 = vdwg.mxu0
      %v988 = vadd.f32 %v834, %v958
      %v989 = vadd.f32 %v835, %v961
      %v990 = vadd.f32 %v836, %v966
      %v991 = vadd.f32 %v837, %v969
      %v992 = vadd.f32 %v838, %v974
      %v993 = vadd.f32 %v839, %v977
      %v994 = vadd.f32 %v840, %v982
      %v995 = vadd.f32 %v841, %v985
      %996 = vst [vmem:[#allocation2] sm:$0xff] %v988
      %997 = vst [vmem:[#allocation2 + $0x8] sm:$0xff] %v989
      %998 = vst [vmem:[#allocation2 + $0x10] sm:$0xff] %v990
      %999 = vst [vmem:[#allocation2 + $0x18] sm:$0xff] %v991
      %1000 = vst [vmem:[#allocation2 + $0x20] sm:$0xff] %v992
      %1001 = vst [vmem:[#allocation2 + $0x28] sm:$0xff] %v993
      %1002 = vst [vmem:[#allocation2 + $0x30] sm:$0xff] %v994
      %1003 = vst [vmem:[#allocation2 + $0x38] sm:$0xff] %v995
      %s1004 = scalar_lea.vmem %s250, 8
      %v1005 = vld [vmem:[%s1004] sm:$0xf]
      %v1006 = vld [vmem:[%s1004 + $0x8] sm:$0xf]
      %v1007 = vld [vmem:[%s1004 + $0x10] sm:$0xf]
      %v1008 = vld [vmem:[%s1004 + $0x18] sm:$0xf]
      %v1009 = vld [vmem:[%s1004 + $0x20] sm:$0xf]
      %v1010 = vld [vmem:[%s1004 + $0x28] sm:$0xf]
      %v1011 = vld [vmem:[%s1004 + $0x30] sm:$0xf]
      %v1012 = vld [vmem:[%s1004 + $0x38] sm:$0xf]
      %v1013 = vld [vmem:[#allocation2] sm:$0xff]
      %v1014 = vld [vmem:[#allocation2 + $0x8] sm:$0xff]
      %v1015 = vld [vmem:[#allocation2 + $0x10] sm:$0xff]
      %v1016 = vld [vmem:[#allocation2 + $0x18] sm:$0xff]
      %v1017 = vld [vmem:[#allocation2 + $0x20] sm:$0xff]
      %v1018 = vld [vmem:[#allocation2 + $0x28] sm:$0xff]
      %v1019 = vld [vmem:[#allocation2 + $0x30] sm:$0xff]
      %v1020 = vld [vmem:[#allocation2 + $0x38] sm:$0xff]
      %s1021 = scalar_lea.vmem %s258, 192
      %v1022 = vld [vmem:[%s1021] sm:$0xf]
      %v1023 = vld [vmem:[%s1021 + $0x4] sm:$0xf]
      %v1024 = vld [vmem:[%s1021 + $0x8] sm:$0xf]
      %v1025 = vld [vmem:[%s1021 + $0xc] sm:$0xf]
      %v1026 = vld [vmem:[%s1021 + $0x10] sm:$0xf]
      %v1027 = vld [vmem:[%s1021 + $0x14] sm:$0xf]
      %v1028 = vld [vmem:[%s1021 + $0x18] sm:$0xf]
      %v1029 = vld [vmem:[%s1021 + $0x1c] sm:$0xf]
      %v1030 = vld [vmem:[%s1021 + $0x20] sm:$0xf]
      %v1031 = vld [vmem:[%s1021 + $0x24] sm:$0xf]
      %v1032 = vld [vmem:[%s1021 + $0x28] sm:$0xf]
      %v1033 = vld [vmem:[%s1021 + $0x2c] sm:$0xf]
      %v1034 = vld [vmem:[%s1021 + $0x30] sm:$0xf]
      %v1035 = vld [vmem:[%s1021 + $0x34] sm:$0xf]
      %v1036 = vld [vmem:[%s1021 + $0x38] sm:$0xf]
      %v1037 = vld [vmem:[%s1021 + $0x3c] sm:$0xf]
      %v1046 = vunpack.c.l.b16 %v1005
      %v1047 = vunpack.c.l.b16 %v1006
      %v1048 = vunpack.c.l.b16 %v1007
      %v1049 = vunpack.c.l.b16 %v1008
      %v1050 = vunpack.c.l.b16 %v1009
      %v1051 = vunpack.c.l.b16 %v1010
      %v1052 = vunpack.c.l.b16 %v1011
      %v1053 = vunpack.c.l.b16 %v1012
      %v1054 = vpack.c.b16 %v1047, %v1046
      %v1055 = vpack.c.b16 %v1049, %v1048
      %v1056 = vpack.c.b16 %v1051, %v1050
      %v1057 = vpack.c.b16 %v1053, %v1052
      %v1078 = vunpack.c.l.b16 %v1022
      %v1079 = vunpack.c.l.b16 %v1023
      %v1080 = vunpack.c.l.b16 %v1024
      %v1081 = vunpack.c.l.b16 %v1025
      %v1082 = vunpack.c.l.b16 %v1026
      %v1083 = vunpack.c.l.b16 %v1027
      %v1084 = vunpack.c.l.b16 %v1028
      %v1085 = vunpack.c.l.b16 %v1029
      %v1086 = vunpack.c.l.b16 %v1030
      %v1087 = vunpack.c.l.b16 %v1031
      %v1088 = vunpack.c.l.b16 %v1032
      %v1089 = vunpack.c.l.b16 %v1033
      %v1090 = vunpack.c.l.b16 %v1034
      %v1091 = vunpack.c.l.b16 %v1035
      %v1092 = vunpack.c.l.b16 %v1036
      %v1093 = vunpack.c.l.b16 %v1037
      %v1094 = vpack.c.b16 %v1079, %v1078
      %v1095 = vpack.c.b16 %v1081, %v1080
      %v1096 = vpack.c.b16 %v1083, %v1082
      %v1097 = vpack.c.b16 %v1085, %v1084
      %v1098 = vpack.c.b16 %v1087, %v1086
      %v1099 = vpack.c.b16 %v1089, %v1088
      %v1100 = vpack.c.b16 %v1091, %v1090
      %v1101 = vpack.c.b16 %v1093, %v1092
      %1110 = vmatprep.subr.bf16.mxu0 0
      %1111 = vmatpush1.bf16.msra.mxu0 %v1094
      %1112 = vmatprep.subr.bf16.mxu0 0
      %1113 = vmatpush1.bf16.msra.mxu0 %v1095
      %1114 = vmatprep.subr.bf16.mxu0 0
      %1115 = vmatpush1.bf16.msra.mxu0 %v1096
      %1116 = vmatprep.subr.bf16.mxu0 0
      %1117 = vmatpush1.bf16.msra.mxu0 %v1097
      %1118 = vmatprep.subr.bf16.mxu0 0
      %1119 = vmatpush1.bf16.msra.mxu0 %v1098
      %1120 = vmatprep.subr.bf16.mxu0 0
      %1121 = vmatpush1.bf16.msra.mxu0 %v1099
      %1122 = vmatprep.subr.bf16.mxu0 0
      %1123 = vmatpush1.bf16.msra.mxu0 %v1100
      %1124 = vmatprep.subr.bf16.mxu0 0
      %1125 = vmatpush1.bf16.msra.mxu0 %v1101
      %1126 = vmatprep.subr.bf16.mxu0 0
      %1127 = vmatpush1.bf16.msra.mxu0 0
      %1128 = vmatprep.subr.bf16.mxu0 0
      %1129 = vmatpush1.bf16.msra.mxu0 0
      %1130 = vmatprep.subr.bf16.mxu0 0
      %1131 = vmatpush1.bf16.msra.mxu0 0
      %1132 = vmatprep.subr.bf16.mxu0 0
      %1133 = vmatpush1.bf16.msra.mxu0 0
      %1134 = vmatprep.subr.bf16.mxu0 0
      %1135 = vmatpush1.bf16.msra.mxu0 0
      %1136 = vmatprep.subr.bf16.mxu0 0
      %1137 = vmatpush1.bf16.msra.mxu0 0
      %1138 = vmatprep.subr.bf16.mxu0 0
      %1139 = vmatpush1.bf16.msra.mxu0 0
      %1140 = vmatprep.subr.bf16.mxu0 0
      %1141 = vmatpush1.bf16.msra.mxu0 0
      %1142 = vmatprep.mubr.bf16.mxu0 0
      %1143 = vmatmul.mubr.bf16.gmra.mrb[0].mxu0 %v1054
      %v1144 = vpop.f32.mrb[0].mxu0
      %v1145 = vadd.f32 0.0, %v1144
      %v1146 = vpop.f32.mrb[0].mxu0
      %v1147 = vpop.f32.mrb[0].mxu0
      %v1148 = vadd.f32 0.0, %v1147
      %v1149 = vpop.f32.mrb[0].mxu0
      %1150 = vmatprep.mubr.bf16.mxu0 0
      %1151 = vmatmul.mubr.bf16.gmra.mrb[0].mxu0 %v1055
      %v1152 = vpop.f32.mrb[0].mxu0
      %v1153 = vadd.f32 0.0, %v1152
      %v1154 = vpop.f32.mrb[0].mxu0
      %v1155 = vpop.f32.mrb[0].mxu0
      %v1156 = vadd.f32 0.0, %v1155
      %v1157 = vpop.f32.mrb[0].mxu0
      %1158 = vmatprep.mubr.bf16.mxu0 0
      %1159 = vmatmul.mubr.bf16.gmra.mrb[0].mxu0 %v1056
      %v1160 = vpop.f32.mrb[0].mxu0
      %v1161 = vadd.f32 0.0, %v1160
      %v1162 = vpop.f32.mrb[0].mxu0
      %v1163 = vpop.f32.mrb[0].mxu0
      %v1164 = vadd.f32 0.0, %v1163
      %v1165 = vpop.f32.mrb[0].mxu0
      %1166 = vmatprep.mubr.bf16.mxu0 0
      %1167 = vmatmul.mubr.bf16.gmra.mrb[0].mxu0 %v1057
      %v1168 = vpop.f32.mrb[0].mxu0
      %v1169 = vadd.f32 0.0, %v1168
      %v1170 = vpop.f32.mrb[0].mxu0
      %v1171 = vpop.f32.mrb[0].mxu0
      %v1172 = vadd.f32 0.0, %v1171
      %v1173 = vpop.f32.mrb[0].mxu0
      %1174 = vdwg.mxu0
      %v1175 = vadd.f32 %v1013, %v1145
      %v1176 = vadd.f32 %v1014, %v1148
      %v1177 = vadd.f32 %v1015, %v1153
      %v1178 = vadd.f32 %v1016, %v1156
      %v1179 = vadd.f32 %v1017, %v1161
      %v1180 = vadd.f32 %v1018, %v1164
      %v1181 = vadd.f32 %v1019, %v1169
      %v1182 = vadd.f32 %v1020, %v1172
      %1183 = vst [vmem:[#allocation2] sm:$0xff] %v1175
      %1184 = vst [vmem:[#allocation2 + $0x8] sm:$0xff] %v1176
      %1185 = vst [vmem:[#allocation2 + $0x10] sm:$0xff] %v1177
      %1186 = vst [vmem:[#allocation2 + $0x18] sm:$0xff] %v1178
      %1187 = vst [vmem:[#allocation2 + $0x20] sm:$0xff] %v1179
      %1188 = vst [vmem:[#allocation2 + $0x28] sm:$0xff] %v1180
      %1189 = vst [vmem:[#allocation2 + $0x30] sm:$0xff] %v1181
      %1190 = vst [vmem:[#allocation2 + $0x38] sm:$0xff] %v1182
      %v1191 = vld [vmem:[%s1004] sm:$0xf]
      %v1192 = vld [vmem:[%s1004 + $0x4] sm:$0x1]
      %v1193 = vld [vmem:[%s1004 + $0x8] sm:$0xf]
      %v1194 = vld [vmem:[%s1004 + $0xc] sm:$0x1]
      %v1195 = vld [vmem:[%s1004 + $0x10] sm:$0xf]
      %v1196 = vld [vmem:[%s1004 + $0x14] sm:$0x1]
      %v1197 = vld [vmem:[%s1004 + $0x18] sm:$0xf]
      %v1198 = vld [vmem:[%s1004 + $0x1c] sm:$0x1]
      %v1199 = vld [vmem:[%s1004 + $0x20] sm:$0xf]
      %v1200 = vld [vmem:[%s1004 + $0x24] sm:$0x1]
      %v1201 = vld [vmem:[%s1004 + $0x28] sm:$0xf]
      %v1202 = vld [vmem:[%s1004 + $0x2c] sm:$0x1]
      %v1203 = vld [vmem:[%s1004 + $0x30] sm:$0xf]
      %v1204 = vld [vmem:[%s1004 + $0x34] sm:$0x1]
      %v1205 = vld [vmem:[%s1004 + $0x38] sm:$0xf]
      %v1206 = vld [vmem:[%s1004 + $0x3c] sm:$0x1]
      %v1208 = vshrl.u32 %v1191, 16
      %v1210 = vrot.slane %v1208, 4
      %v1211 = vshll.u32 %v1191, 16
      %v1213 = vrot.slane %v1211, 5
      %v1214 = vor.u32 %v1210, %v1213
      %v1215 = vrot.slane %v1214, 4
      %v1217 = vshll.u32 %v1192, 16
      %v1219 = vrot.slane %v1217, 5
      %v1220 = vsel %vm484, %v1215, %v1219
      %v1222 = vshrl.u32 %v1193, 16
      %v1224 = vrot.slane %v1222, 4
      %v1225 = vshll.u32 %v1193, 16
      %v1227 = vrot.slane %v1225, 5
      %v1228 = vor.u32 %v1224, %v1227
      %v1229 = vrot.slane %v1228, 4
      %v1231 = vshll.u32 %v1194, 16
      %v1233 = vrot.slane %v1231, 5
      %v1234 = vsel %vm484, %v1229, %v1233
      %v1236 = vshrl.u32 %v1195, 16
      %v1238 = vrot.slane %v1236, 4
      %v1239 = vshll.u32 %v1195, 16
      %v1241 = vrot.slane %v1239, 5
      %v1242 = vor.u32 %v1238, %v1241
      %v1243 = vrot.slane %v1242, 4
      %v1245 = vshll.u32 %v1196, 16
      %v1247 = vrot.slane %v1245, 5
      %v1248 = vsel %vm484, %v1243, %v1247
      %v1250 = vshrl.u32 %v1197, 16
      %v1252 = vrot.slane %v1250, 4
      %v1253 = vshll.u32 %v1197, 16
      %v1255 = vrot.slane %v1253, 5
      %v1256 = vor.u32 %v1252, %v1255
      %v1257 = vrot.slane %v1256, 4
      %v1259 = vshll.u32 %v1198, 16
      %v1261 = vrot.slane %v1259, 5
      %v1262 = vsel %vm484, %v1257, %v1261
      %v1264 = vshrl.u32 %v1199, 16
      %v1266 = vrot.slane %v1264, 4
      %v1267 = vshll.u32 %v1199, 16
      %v1269 = vrot.slane %v1267, 5
      %v1270 = vor.u32 %v1266, %v1269
      %v1271 = vrot.slane %v1270, 4
      %v1273 = vshll.u32 %v1200, 16
      %v1275 = vrot.slane %v1273, 5
      %v1276 = vsel %vm484, %v1271, %v1275
      %v1278 = vshrl.u32 %v1201, 16
      %v1280 = vrot.slane %v1278, 4
      %v1281 = vshll.u32 %v1201, 16
      %v1283 = vrot.slane %v1281, 5
      %v1284 = vor.u32 %v1280, %v1283
      %v1285 = vrot.slane %v1284, 4
      %v1287 = vshll.u32 %v1202, 16
      %v1289 = vrot.slane %v1287, 5
      %v1290 = vsel %vm484, %v1285, %v1289
      %v1292 = vshrl.u32 %v1203, 16
      %v1294 = vrot.slane %v1292, 4
      %v1295 = vshll.u32 %v1203, 16
      %v1297 = vrot.slane %v1295, 5
      %v1298 = vor.u32 %v1294, %v1297
      %v1299 = vrot.slane %v1298, 4
      %v1301 = vshll.u32 %v1204, 16
      %v1303 = vrot.slane %v1301, 5
      %v1304 = vsel %vm484, %v1299, %v1303
      %v1306 = vshrl.u32 %v1205, 16
      %v1308 = vrot.slane %v1306, 4
      %v1309 = vshll.u32 %v1205, 16
      %v1311 = vrot.slane %v1309, 5
      %v1312 = vor.u32 %v1308, %v1311
      %v1313 = vrot.slane %v1312, 4
      %v1315 = vshll.u32 %v1206, 16
      %v1317 = vrot.slane %v1315, 5
      %v1318 = vsel %vm484, %v1313, %v1317
      %v1319 = vld [vmem:[#allocation2] sm:$0xff]
      %v1320 = vld [vmem:[#allocation2 + $0x8] sm:$0xff]
      %v1321 = vld [vmem:[#allocation2 + $0x10] sm:$0xff]
      %v1322 = vld [vmem:[#allocation2 + $0x18] sm:$0xff]
      %v1323 = vld [vmem:[#allocation2 + $0x20] sm:$0xff]
      %v1324 = vld [vmem:[#allocation2 + $0x28] sm:$0xff]
      %v1325 = vld [vmem:[#allocation2 + $0x30] sm:$0xff]
      %v1326 = vld [vmem:[#allocation2 + $0x38] sm:$0xff]
      %s1327 = scalar_lea.vmem %s258, 256
      %v1328 = vld [vmem:[%s1327] sm:$0xf]
      %v1329 = vld [vmem:[%s1327 + $0x4] sm:$0xf]
      %v1330 = vld [vmem:[%s1327 + $0x8] sm:$0xf]
      %v1331 = vld [vmem:[%s1327 + $0xc] sm:$0xf]
      %v1332 = vld [vmem:[%s1327 + $0x10] sm:$0xf]
      %v1333 = vld [vmem:[%s1327 + $0x14] sm:$0xf]
      %v1334 = vld [vmem:[%s1327 + $0x18] sm:$0xf]
      %v1335 = vld [vmem:[%s1327 + $0x1c] sm:$0xf]
      %v1336 = vld [vmem:[%s1327 + $0x20] sm:$0xf]
      %v1337 = vld [vmem:[%s1327 + $0x24] sm:$0xf]
      %v1338 = vld [vmem:[%s1327 + $0x28] sm:$0xf]
      %v1339 = vld [vmem:[%s1327 + $0x2c] sm:$0xf]
      %v1340 = vld [vmem:[%s1327 + $0x30] sm:$0xf]
      %v1341 = vld [vmem:[%s1327 + $0x34] sm:$0xf]
      %v1342 = vld [vmem:[%s1327 + $0x38] sm:$0xf]
      %v1343 = vld [vmem:[%s1327 + $0x3c] sm:$0xf]
      %v1344 = vunpack.c.l.b16 %v1220
      %v1345 = vunpack.c.l.b16 %v1234
      %v1346 = vunpack.c.l.b16 %v1248
      %v1347 = vunpack.c.l.b16 %v1262
      %v1348 = vunpack.c.l.b16 %v1276
      %v1349 = vunpack.c.l.b16 %v1290
      %v1350 = vunpack.c.l.b16 %v1304
      %v1351 = vunpack.c.l.b16 %v1318
      %v1352 = vpack.c.b16 %v1345, %v1344
      %v1353 = vpack.c.b16 %v1347, %v1346
      %v1354 = vpack.c.b16 %v1349, %v1348
      %v1355 = vpack.c.b16 %v1351, %v1350
      %v1376 = vunpack.c.l.b16 %v1328
      %v1377 = vunpack.c.l.b16 %v1329
      %v1378 = vunpack.c.l.b16 %v1330
      %v1379 = vunpack.c.l.b16 %v1331
      %v1380 = vunpack.c.l.b16 %v1332
      %v1381 = vunpack.c.l.b16 %v1333
      %v1382 = vunpack.c.l.b16 %v1334
      %v1383 = vunpack.c.l.b16 %v1335
      %v1384 = vunpack.c.l.b16 %v1336
      %v1385 = vunpack.c.l.b16 %v1337
      %v1386 = vunpack.c.l.b16 %v1338
      %v1387 = vunpack.c.l.b16 %v1339
      %v1388 = vunpack.c.l.b16 %v1340
      %v1389 = vunpack.c.l.b16 %v1341
      %v1390 = vunpack.c.l.b16 %v1342
      %v1391 = vunpack.c.l.b16 %v1343
      %v1392 = vpack.c.b16 %v1377, %v1376
      %v1393 = vpack.c.b16 %v1379, %v1378
      %v1394 = vpack.c.b16 %v1381, %v1380
      %v1395 = vpack.c.b16 %v1383, %v1382
      %v1396 = vpack.c.b16 %v1385, %v1384
      %v1397 = vpack.c.b16 %v1387, %v1386
      %v1398 = vpack.c.b16 %v1389, %v1388
      %v1399 = vpack.c.b16 %v1391, %v1390
      %1408 = vmatprep.subr.bf16.mxu0 0
      %1409 = vmatpush1.bf16.msra.mxu0 %v1392
      %1410 = vmatprep.subr.bf16.mxu0 0
      %1411 = vmatpush1.bf16.msra.mxu0 %v1393
      %1412 = vmatprep.subr.bf16.mxu0 0
      %1413 = vmatpush1.bf16.msra.mxu0 %v1394
      %1414 = vmatprep.subr.bf16.mxu0 0
      %1415 = vmatpush1.bf16.msra.mxu0 %v1395
      %1416 = vmatprep.subr.bf16.mxu0 0
      %1417 = vmatpush1.bf16.msra.mxu0 %v1396
      %1418 = vmatprep.subr.bf16.mxu0 0
      %1419 = vmatpush1.bf16.msra.mxu0 %v1397
      %1420 = vmatprep.subr.bf16.mxu0 0
      %1421 = vmatpush1.bf16.msra.mxu0 %v1398
      %1422 = vmatprep.subr.bf16.mxu0 0
      %1423 = vmatpush1.bf16.msra.mxu0 %v1399
      %1424 = vmatprep.subr.bf16.mxu0 0
      %1425 = vmatpush1.bf16.msra.mxu0 0
      %1426 = vmatprep.subr.bf16.mxu0 0
      %1427 = vmatpush1.bf16.msra.mxu0 0
      %1428 = vmatprep.subr.bf16.mxu0 0
      %1429 = vmatpush1.bf16.msra.mxu0 0
      %1430 = vmatprep.subr.bf16.mxu0 0
      %1431 = vmatpush1.bf16.msra.mxu0 0
      %1432 = vmatprep.subr.bf16.mxu0 0
      %1433 = vmatpush1.bf16.msra.mxu0 0
      %1434 = vmatprep.subr.bf16.mxu0 0
      %1435 = vmatpush1.bf16.msra.mxu0 0
      %1436 = vmatprep.subr.bf16.mxu0 0
      %1437 = vmatpush1.bf16.msra.mxu0 0
      %1438 = vmatprep.subr.bf16.mxu0 0
      %1439 = vmatpush1.bf16.msra.mxu0 0
      %1440 = vmatprep.mubr.bf16.mxu0 0
      %1441 = vmatmul.mubr.bf16.gmra.mrb[0].mxu0 %v1352
      %v1442 = vpop.f32.mrb[0].mxu0
      %v1443 = vadd.f32 0.0, %v1442
      %v1444 = vpop.f32.mrb[0].mxu0
      %v1445 = vpop.f32.mrb[0].mxu0
      %v1446 = vadd.f32 0.0, %v1445
      %v1447 = vpop.f32.mrb[0].mxu0
      %1448 = vmatprep.mubr.bf16.mxu0 0
      %1449 = vmatmul.mubr.bf16.gmra.mrb[0].mxu0 %v1353
      %v1450 = vpop.f32.mrb[0].mxu0
      %v1451 = vadd.f32 0.0, %v1450
      %v1452 = vpop.f32.mrb[0].mxu0
      %v1453 = vpop.f32.mrb[0].mxu0
      %v1454 = vadd.f32 0.0, %v1453
      %v1455 = vpop.f32.mrb[0].mxu0
      %1456 = vmatprep.mubr.bf16.mxu0 0
      %1457 = vmatmul.mubr.bf16.gmra.mrb[0].mxu0 %v1354
      %v1458 = vpop.f32.mrb[0].mxu0
      %v1459 = vadd.f32 0.0, %v1458
      %v1460 = vpop.f32.mrb[0].mxu0
      %v1461 = vpop.f32.mrb[0].mxu0
      %v1462 = vadd.f32 0.0, %v1461
      %v1463 = vpop.f32.mrb[0].mxu0
      %1464 = vmatprep.mubr.bf16.mxu0 0
      %1465 = vmatmul.mubr.bf16.gmra.mrb[0].mxu0 %v1355
      %v1466 = vpop.f32.mrb[0].mxu0
      %v1467 = vadd.f32 0.0, %v1466
      %v1468 = vpop.f32.mrb[0].mxu0
      %v1469 = vpop.f32.mrb[0].mxu0
      %v1470 = vadd.f32 0.0, %v1469
      %v1471 = vpop.f32.mrb[0].mxu0
      %1472 = vdwg.mxu0
      %v1473 = vadd.f32 %v1319, %v1443
      %v1474 = vadd.f32 %v1320, %v1446
      %v1475 = vadd.f32 %v1321, %v1451
      %v1476 = vadd.f32 %v1322, %v1454
      %v1477 = vadd.f32 %v1323, %v1459
      %v1478 = vadd.f32 %v1324, %v1462
      %v1479 = vadd.f32 %v1325, %v1467
      %v1480 = vadd.f32 %v1326, %v1470
      %1481 = vst [vmem:[#allocation2] sm:$0xff] %v1473
      %1482 = vst [vmem:[#allocation2 + $0x8] sm:$0xff] %v1474
      %1483 = vst [vmem:[#allocation2 + $0x10] sm:$0xff] %v1475
      %1484 = vst [vmem:[#allocation2 + $0x18] sm:$0xff] %v1476
      %1485 = vst [vmem:[#allocation2 + $0x20] sm:$0xff] %v1477
      %1486 = vst [vmem:[#allocation2 + $0x28] sm:$0xff] %v1478
      %1487 = vst [vmem:[#allocation2 + $0x30] sm:$0xff] %v1479
      %1488 = vst [vmem:[#allocation2 + $0x38] sm:$0xff] %v1480
      %v1489 = vld [vmem:[%s1004] sm:$0xe]
      %v1490 = vld [vmem:[%s1004 + $0x4] sm:$0x1]
      %v1491 = vld [vmem:[%s1004 + $0x8] sm:$0xe]
      %v1492 = vld [vmem:[%s1004 + $0xc] sm:$0x1]
      %v1493 = vld [vmem:[%s1004 + $0x10] sm:$0xe]
      %v1494 = vld [vmem:[%s1004 + $0x14] sm:$0x1]
      %v1495 = vld [vmem:[%s1004 + $0x18] sm:$0xe]
      %v1496 = vld [vmem:[%s1004 + $0x1c] sm:$0x1]
      %v1497 = vld [vmem:[%s1004 + $0x20] sm:$0xe]
      %v1498 = vld [vmem:[%s1004 + $0x24] sm:$0x1]
      %v1499 = vld [vmem:[%s1004 + $0x28] sm:$0xe]
      %v1500 = vld [vmem:[%s1004 + $0x2c] sm:$0x1]
      %v1501 = vld [vmem:[%s1004 + $0x30] sm:$0xe]
      %v1502 = vld [vmem:[%s1004 + $0x34] sm:$0x1]
      %v1503 = vld [vmem:[%s1004 + $0x38] sm:$0xe]
      %v1504 = vld [vmem:[%s1004 + $0x3c] sm:$0x1]
      %v1521 = vrot.slane %v1489, 5
      %v1522 = vrot.slane %v1521, 4
      %v1523 = vrot.slane %v1490, 5
      %v1524 = vsel %vm801, %v1522, %v1523
      %v1525 = vrot.slane %v1491, 5
      %v1526 = vrot.slane %v1525, 4
      %v1527 = vrot.slane %v1492, 5
      %v1528 = vsel %vm801, %v1526, %v1527
      %v1529 = vrot.slane %v1493, 5
      %v1530 = vrot.slane %v1529, 4
      %v1531 = vrot.slane %v1494, 5
      %v1532 = vsel %vm801, %v1530, %v1531
      %v1533 = vrot.slane %v1495, 5
      %v1534 = vrot.slane %v1533, 4
      %v1535 = vrot.slane %v1496, 5
      %v1536 = vsel %vm801, %v1534, %v1535
      %v1537 = vrot.slane %v1497, 5
      %v1538 = vrot.slane %v1537, 4
      %v1539 = vrot.slane %v1498, 5
      %v1540 = vsel %vm801, %v1538, %v1539
      %v1541 = vrot.slane %v1499, 5
      %v1542 = vrot.slane %v1541, 4
      %v1543 = vrot.slane %v1500, 5
      %v1544 = vsel %vm801, %v1542, %v1543
      %v1545 = vrot.slane %v1501, 5
      %v1546 = vrot.slane %v1545, 4
      %v1547 = vrot.slane %v1502, 5
      %v1548 = vsel %vm801, %v1546, %v1547
      %v1549 = vrot.slane %v1503, 5
      %v1550 = vrot.slane %v1549, 4
      %v1551 = vrot.slane %v1504, 5
      %v1552 = vsel %vm801, %v1550, %v1551
      %v1553 = vld [vmem:[#allocation2] sm:$0xff]
      %v1554 = vld [vmem:[#allocation2 + $0x8] sm:$0xff]
      %v1555 = vld [vmem:[#allocation2 + $0x10] sm:$0xff]
      %v1556 = vld [vmem:[#allocation2 + $0x18] sm:$0xff]
      %v1557 = vld [vmem:[#allocation2 + $0x20] sm:$0xff]
      %v1558 = vld [vmem:[#allocation2 + $0x28] sm:$0xff]
      %v1559 = vld [vmem:[#allocation2 + $0x30] sm:$0xff]
      %v1560 = vld [vmem:[#allocation2 + $0x38] sm:$0xff]
      %s1561 = scalar_lea.vmem %s258, 320
      %v1562 = vld [vmem:[%s1561] sm:$0xf]
      %v1563 = vld [vmem:[%s1561 + $0x4] sm:$0xf]
      %v1564 = vld [vmem:[%s1561 + $0x8] sm:$0xf]
      %v1565 = vld [vmem:[%s1561 + $0xc] sm:$0xf]
      %v1566 = vld [vmem:[%s1561 + $0x10] sm:$0xf]
      %v1567 = vld [vmem:[%s1561 + $0x14] sm:$0xf]
      %v1568 = vld [vmem:[%s1561 + $0x18] sm:$0xf]
      %v1569 = vld [vmem:[%s1561 + $0x1c] sm:$0xf]
      %v1570 = vld [vmem:[%s1561 + $0x20] sm:$0xf]
      %v1571 = vld [vmem:[%s1561 + $0x24] sm:$0xf]
      %v1572 = vld [vmem:[%s1561 + $0x28] sm:$0xf]
      %v1573 = vld [vmem:[%s1561 + $0x2c] sm:$0xf]
      %v1574 = vld [vmem:[%s1561 + $0x30] sm:$0xf]
      %v1575 = vld [vmem:[%s1561 + $0x34] sm:$0xf]
      %v1576 = vld [vmem:[%s1561 + $0x38] sm:$0xf]
      %v1577 = vld [vmem:[%s1561 + $0x3c] sm:$0xf]
      %v1578 = vunpack.c.l.b16 %v1524
      %v1579 = vunpack.c.l.b16 %v1528
      %v1580 = vunpack.c.l.b16 %v1532
      %v1581 = vunpack.c.l.b16 %v1536
      %v1582 = vunpack.c.l.b16 %v1540
      %v1583 = vunpack.c.l.b16 %v1544
      %v1584 = vunpack.c.l.b16 %v1548
      %v1585 = vunpack.c.l.b16 %v1552
      %v1586 = vpack.c.b16 %v1579, %v1578
      %v1587 = vpack.c.b16 %v1581, %v1580
      %v1588 = vpack.c.b16 %v1583, %v1582
      %v1589 = vpack.c.b16 %v1585, %v1584
      %v1610 = vunpack.c.l.b16 %v1562
      %v1611 = vunpack.c.l.b16 %v1563
      %v1612 = vunpack.c.l.b16 %v1564
      %v1613 = vunpack.c.l.b16 %v1565
      %v1614 = vunpack.c.l.b16 %v1566
      %v1615 = vunpack.c.l.b16 %v1567
      %v1616 = vunpack.c.l.b16 %v1568
      %v1617 = vunpack.c.l.b16 %v1569
      %v1618 = vunpack.c.l.b16 %v1570
      %v1619 = vunpack.c.l.b16 %v1571
      %v1620 = vunpack.c.l.b16 %v1572
      %v1621 = vunpack.c.l.b16 %v1573
      %v1622 = vunpack.c.l.b16 %v1574
      %v1623 = vunpack.c.l.b16 %v1575
      %v1624 = vunpack.c.l.b16 %v1576
      %v1625 = vunpack.c.l.b16 %v1577
      %v1626 = vpack.c.b16 %v1611, %v1610
      %v1627 = vpack.c.b16 %v1613, %v1612
      %v1628 = vpack.c.b16 %v1615, %v1614
      %v1629 = vpack.c.b16 %v1617, %v1616
      %v1630 = vpack.c.b16 %v1619, %v1618
      %v1631 = vpack.c.b16 %v1621, %v1620
      %v1632 = vpack.c.b16 %v1623, %v1622
      %v1633 = vpack.c.b16 %v1625, %v1624
      %1642 = vmatprep.subr.bf16.mxu0 0
      %1643 = vmatpush1.bf16.msra.mxu0 %v1626
      %1644 = vmatprep.subr.bf16.mxu0 0
      %1645 = vmatpush1.bf16.msra.mxu0 %v1627
      %1646 = vmatprep.subr.bf16.mxu0 0
      %1647 = vmatpush1.bf16.msra.mxu0 %v1628
      %1648 = vmatprep.subr.bf16.mxu0 0
      %1649 = vmatpush1.bf16.msra.mxu0 %v1629
      %1650 = vmatprep.subr.bf16.mxu0 0
      %1651 = vmatpush1.bf16.msra.mxu0 %v1630
      %1652 = vmatprep.subr.bf16.mxu0 0
      %1653 = vmatpush1.bf16.msra.mxu0 %v1631
      %1654 = vmatprep.subr.bf16.mxu0 0
      %1655 = vmatpush1.bf16.msra.mxu0 %v1632
      %1656 = vmatprep.subr.bf16.mxu0 0
      %1657 = vmatpush1.bf16.msra.mxu0 %v1633
      %1658 = vmatprep.subr.bf16.mxu0 0
      %1659 = vmatpush1.bf16.msra.mxu0 0
      %1660 = vmatprep.subr.bf16.mxu0 0
      %1661 = vmatpush1.bf16.msra.mxu0 0
      %1662 = vmatprep.subr.bf16.mxu0 0
      %1663 = vmatpush1.bf16.msra.mxu0 0
      %1664 = vmatprep.subr.bf16.mxu0 0
      %1665 = vmatpush1.bf16.msra.mxu0 0
      %1666 = vmatprep.subr.bf16.mxu0 0
      %1667 = vmatpush1.bf16.msra.mxu0 0
      %1668 = vmatprep.subr.bf16.mxu0 0
      %1669 = vmatpush1.bf16.msra.mxu0 0
      %1670 = vmatprep.subr.bf16.mxu0 0
      %1671 = vmatpush1.bf16.msra.mxu0 0
      %1672 = vmatprep.subr.bf16.mxu0 0
      %1673 = vmatpush1.bf16.msra.mxu0 0
      %1674 = vmatprep.mubr.bf16.mxu0 0
      %1675 = vmatmul.mubr.bf16.gmra.mrb[0].mxu0 %v1586
      %v1676 = vpop.f32.mrb[0].mxu0
      %v1677 = vadd.f32 0.0, %v1676
      %v1678 = vpop.f32.mrb[0].mxu0
      %v1679 = vpop.f32.mrb[0].mxu0
      %v1680 = vadd.f32 0.0, %v1679
      %v1681 = vpop.f32.mrb[0].mxu0
      %1682 = vmatprep.mubr.bf16.mxu0 0
      %1683 = vmatmul.mubr.bf16.gmra.mrb[0].mxu0 %v1587
      %v1684 = vpop.f32.mrb[0].mxu0
      %v1685 = vadd.f32 0.0, %v1684
      %v1686 = vpop.f32.mrb[0].mxu0
      %v1687 = vpop.f32.mrb[0].mxu0
      %v1688 = vadd.f32 0.0, %v1687
      %v1689 = vpop.f32.mrb[0].mxu0
      %1690 = vmatprep.mubr.bf16.mxu0 0
      %1691 = vmatmul.mubr.bf16.gmra.mrb[0].mxu0 %v1588
      %v1692 = vpop.f32.mrb[0].mxu0
      %v1693 = vadd.f32 0.0, %v1692
      %v1694 = vpop.f32.mrb[0].mxu0
      %v1695 = vpop.f32.mrb[0].mxu0
      %v1696 = vadd.f32 0.0, %v1695
      %v1697 = vpop.f32.mrb[0].mxu0
      %1698 = vmatprep.mubr.bf16.mxu0 0
      %1699 = vmatmul.mubr.bf16.gmra.mrb[0].mxu0 %v1589
      %v1700 = vpop.f32.mrb[0].mxu0
      %v1701 = vadd.f32 0.0, %v1700
      %v1702 = vpop.f32.mrb[0].mxu0
      %v1703 = vpop.f32.mrb[0].mxu0
      %v1704 = vadd.f32 0.0, %v1703
      %v1705 = vpop.f32.mrb[0].mxu0
      %1706 = vdwg.mxu0
      %v1707 = vadd.f32 %v1553, %v1677
      %v1708 = vadd.f32 %v1554, %v1680
      %v1709 = vadd.f32 %v1555, %v1685
      %v1710 = vadd.f32 %v1556, %v1688
      %v1711 = vadd.f32 %v1557, %v1693
      %v1712 = vadd.f32 %v1558, %v1696
      %v1713 = vadd.f32 %v1559, %v1701
      %v1714 = vadd.f32 %v1560, %v1704
      %1715 = vst [vmem:[#allocation2] sm:$0xff] %v1707
      %1716 = vst [vmem:[#allocation2 + $0x8] sm:$0xff] %v1708
      %1717 = vst [vmem:[#allocation2 + $0x10] sm:$0xff] %v1709
      %1718 = vst [vmem:[#allocation2 + $0x18] sm:$0xff] %v1710
      %1719 = vst [vmem:[#allocation2 + $0x20] sm:$0xff] %v1711
      %1720 = vst [vmem:[#allocation2 + $0x28] sm:$0xff] %v1712
      %1721 = vst [vmem:[#allocation2 + $0x30] sm:$0xff] %v1713
      %1722 = vst [vmem:[#allocation2 + $0x38] sm:$0xff] %v1714
      %s1723 = scalar_lea.vmem %s250, 16
      %v1724 = vld [vmem:[%s1723] sm:$0xf]
      %v1725 = vld [vmem:[%s1723 + $0x8] sm:$0xf]
      %v1726 = vld [vmem:[%s1723 + $0x10] sm:$0xf]
      %v1727 = vld [vmem:[%s1723 + $0x18] sm:$0xf]
      %v1728 = vld [vmem:[%s1723 + $0x20] sm:$0xf]
      %v1729 = vld [vmem:[%s1723 + $0x28] sm:$0xf]
      %v1730 = vld [vmem:[%s1723 + $0x30] sm:$0xf]
      %v1731 = vld [vmem:[%s1723 + $0x38] sm:$0xf]
      %v1732 = vld [vmem:[#allocation2] sm:$0xff]
      %v1733 = vld [vmem:[#allocation2 + $0x8] sm:$0xff]
      %v1734 = vld [vmem:[#allocation2 + $0x10] sm:$0xff]
      %v1735 = vld [vmem:[#allocation2 + $0x18] sm:$0xff]
      %v1736 = vld [vmem:[#allocation2 + $0x20] sm:$0xff]
      %v1737 = vld [vmem:[#allocation2 + $0x28] sm:$0xff]
      %v1738 = vld [vmem:[#allocation2 + $0x30] sm:$0xff]
      %v1739 = vld [vmem:[#allocation2 + $0x38] sm:$0xff]
      %s1740 = scalar_lea.vmem %s258, 384
      %v1741 = vld [vmem:[%s1740] sm:$0xf]
      %v1742 = vld [vmem:[%s1740 + $0x4] sm:$0xf]
      %v1743 = vld [vmem:[%s1740 + $0x8] sm:$0xf]
      %v1744 = vld [vmem:[%s1740 + $0xc] sm:$0xf]
      %v1745 = vld [vmem:[%s1740 + $0x10] sm:$0xf]
      %v1746 = vld [vmem:[%s1740 + $0x14] sm:$0xf]
      %v1747 = vld [vmem:[%s1740 + $0x18] sm:$0xf]
      %v1748 = vld [vmem:[%s1740 + $0x1c] sm:$0xf]
      %v1749 = vld [vmem:[%s1740 + $0x20] sm:$0xf]
      %v1750 = vld [vmem:[%s1740 + $0x24] sm:$0xf]
      %v1751 = vld [vmem:[%s1740 + $0x28] sm:$0xf]
      %v1752 = vld [vmem:[%s1740 + $0x2c] sm:$0xf]
      %v1753 = vld [vmem:[%s1740 + $0x30] sm:$0xf]
      %v1754 = vld [vmem:[%s1740 + $0x34] sm:$0xf]
      %v1755 = vld [vmem:[%s1740 + $0x38] sm:$0xf]
      %v1756 = vld [vmem:[%s1740 + $0x3c] sm:$0xf]
      %v1765 = vunpack.c.l.b16 %v1724
      %v1766 = vunpack.c.l.b16 %v1725
      %v1767 = vunpack.c.l.b16 %v1726
      %v1768 = vunpack.c.l.b16 %v1727
      %v1769 = vunpack.c.l.b16 %v1728
      %v1770 = vunpack.c.l.b16 %v1729
      %v1771 = vunpack.c.l.b16 %v1730
      %v1772 = vunpack.c.l.b16 %v1731
      %v1773 = vpack.c.b16 %v1766, %v1765
      %v1774 = vpack.c.b16 %v1768, %v1767
      %v1775 = vpack.c.b16 %v1770, %v1769
      %v1776 = vpack.c.b16 %v1772, %v1771
      %v1797 = vunpack.c.l.b16 %v1741
      %v1798 = vunpack.c.l.b16 %v1742
      %v1799 = vunpack.c.l.b16 %v1743
      %v1800 = vunpack.c.l.b16 %v1744
      %v1801 = vunpack.c.l.b16 %v1745
      %v1802 = vunpack.c.l.b16 %v1746
      %v1803 = vunpack.c.l.b16 %v1747
      %v1804 = vunpack.c.l.b16 %v1748
      %v1805 = vunpack.c.l.b16 %v1749
      %v1806 = vunpack.c.l.b16 %v1750
      %v1807 = vunpack.c.l.b16 %v1751
      %v1808 = vunpack.c.l.b16 %v1752
      %v1809 = vunpack.c.l.b16 %v1753
      %v1810 = vunpack.c.l.b16 %v1754
      %v1811 = vunpack.c.l.b16 %v1755
      %v1812 = vunpack.c.l.b16 %v1756
      %v1813 = vpack.c.b16 %v1798, %v1797
      %v1814 = vpack.c.b16 %v1800, %v1799
      %v1815 = vpack.c.b16 %v1802, %v1801
      %v1816 = vpack.c.b16 %v1804, %v1803
      %v1817 = vpack.c.b16 %v1806, %v1805
      %v1818 = vpack.c.b16 %v1808, %v1807
      %v1819 = vpack.c.b16 %v1810, %v1809
      %v1820 = vpack.c.b16 %v1812, %v1811
      %1829 = vmatprep.subr.bf16.mxu0 0
      %1830 = vmatpush1.bf16.msra.mxu0 %v1813
      %1831 = vmatprep.subr.bf16.mxu0 0
      %1832 = vmatpush1.bf16.msra.mxu0 %v1814
      %1833 = vmatprep.subr.bf16.mxu0 0
      %1834 = vmatpush1.bf16.msra.mxu0 %v1815
      %1835 = vmatprep.subr.bf16.mxu0 0
      %1836 = vmatpush1.bf16.msra.mxu0 %v1816
      %1837 = vmatprep.subr.bf16.mxu0 0
      %1838 = vmatpush1.bf16.msra.mxu0 %v1817
      %1839 = vmatprep.subr.bf16.mxu0 0
      %1840 = vmatpush1.bf16.msra.mxu0 %v1818
      %1841 = vmatprep.subr.bf16.mxu0 0
      %1842 = vmatpush1.bf16.msra.mxu0 %v1819
      %1843 = vmatprep.subr.bf16.mxu0 0
      %1844 = vmatpush1.bf16.msra.mxu0 %v1820
      %1845 = vmatprep.subr.bf16.mxu0 0
      %1846 = vmatpush1.bf16.msra.mxu0 0
      %1847 = vmatprep.subr.bf16.mxu0 0
      %1848 = vmatpush1.bf16.msra.mxu0 0
      %1849 = vmatprep.subr.bf16.mxu0 0
      %1850 = vmatpush1.bf16.msra.mxu0 0
      %1851 = vmatprep.subr.bf16.mxu0 0
      %1852 = vmatpush1.bf16.msra.mxu0 0
      %1853 = vmatprep.subr.bf16.mxu0 0
      %1854 = vmatpush1.bf16.msra.mxu0 0
      %1855 = vmatprep.subr.bf16.mxu0 0
      %1856 = vmatpush1.bf16.msra.mxu0 0
      %1857 = vmatprep.subr.bf16.mxu0 0
      %1858 = vmatpush1.bf16.msra.mxu0 0
      %1859 = vmatprep.subr.bf16.mxu0 0
      %1860 = vmatpush1.bf16.msra.mxu0 0
      %1861 = vmatprep.mubr.bf16.mxu0 0
      %1862 = vmatmul.mubr.bf16.gmra.mrb[0].mxu0 %v1773
      %v1863 = vpop.f32.mrb[0].mxu0
      %v1864 = vadd.f32 0.0, %v1863
      %v1865 = vpop.f32.mrb[0].mxu0
      %v1866 = vpop.f32.mrb[0].mxu0
      %v1867 = vadd.f32 0.0, %v1866
      %v1868 = vpop.f32.mrb[0].mxu0
      %1869 = vmatprep.mubr.bf16.mxu0 0
      %1870 = vmatmul.mubr.bf16.gmra.mrb[0].mxu0 %v1774
      %v1871 = vpop.f32.mrb[0].mxu0
      %v1872 = vadd.f32 0.0, %v1871
      %v1873 = vpop.f32.mrb[0].mxu0
      %v1874 = vpop.f32.mrb[0].mxu0
      %v1875 = vadd.f32 0.0, %v1874
      %v1876 = vpop.f32.mrb[0].mxu0
      %1877 = vmatprep.mubr.bf16.mxu0 0
      %1878 = vmatmul.mubr.bf16.gmra.mrb[0].mxu0 %v1775
      %v1879 = vpop.f32.mrb[0].mxu0
      %v1880 = vadd.f32 0.0, %v1879
      %v1881 = vpop.f32.mrb[0].mxu0
      %v1882 = vpop.f32.mrb[0].mxu0
      %v1883 = vadd.f32 0.0, %v1882
      %v1884 = vpop.f32.mrb[0].mxu0
      %1885 = vmatprep.mubr.bf16.mxu0 0
      %1886 = vmatmul.mubr.bf16.gmra.mrb[0].mxu0 %v1776
      %v1887 = vpop.f32.mrb[0].mxu0
      %v1888 = vadd.f32 0.0, %v1887
      %v1889 = vpop.f32.mrb[0].mxu0
      %v1890 = vpop.f32.mrb[0].mxu0
      %v1891 = vadd.f32 0.0, %v1890
      %v1892 = vpop.f32.mrb[0].mxu0
      %1893 = vdwg.mxu0
      %v1894 = vadd.f32 %v1732, %v1864
      %v1895 = vadd.f32 %v1733, %v1867
      %v1896 = vadd.f32 %v1734, %v1872
      %v1897 = vadd.f32 %v1735, %v1875
      %v1898 = vadd.f32 %v1736, %v1880
      %v1899 = vadd.f32 %v1737, %v1883
      %v1900 = vadd.f32 %v1738, %v1888
      %v1901 = vadd.f32 %v1739, %v1891
      %1902 = vst [vmem:[#allocation2] sm:$0xff] %v1894
      %1903 = vst [vmem:[#allocation2 + $0x8] sm:$0xff] %v1895
      %1904 = vst [vmem:[#allocation2 + $0x10] sm:$0xff] %v1896
      %1905 = vst [vmem:[#allocation2 + $0x18] sm:$0xff] %v1897
      %1906 = vst [vmem:[#allocation2 + $0x20] sm:$0xff] %v1898
      %1907 = vst [vmem:[#allocation2 + $0x28] sm:$0xff] %v1899
      %1908 = vst [vmem:[#allocation2 + $0x30] sm:$0xff] %v1900
      %1909 = vst [vmem:[#allocation2 + $0x38] sm:$0xff] %v1901
      %v1910 = vld [vmem:[%s1723] sm:$0xf]
      %v1911 = vld [vmem:[%s1723 + $0x4] sm:$0x1]
      %v1912 = vld [vmem:[%s1723 + $0x8] sm:$0xf]
      %v1913 = vld [vmem:[%s1723 + $0xc] sm:$0x1]
      %v1914 = vld [vmem:[%s1723 + $0x10] sm:$0xf]
      %v1915 = vld [vmem:[%s1723 + $0x14] sm:$0x1]
      %v1916 = vld [vmem:[%s1723 + $0x18] sm:$0xf]
      %v1917 = vld [vmem:[%s1723 + $0x1c] sm:$0x1]
      %v1918 = vld [vmem:[%s1723 + $0x20] sm:$0xf]
      %v1919 = vld [vmem:[%s1723 + $0x24] sm:$0x1]
      %v1920 = vld [vmem:[%s1723 + $0x28] sm:$0xf]
      %v1921 = vld [vmem:[%s1723 + $0x2c] sm:$0x1]
      %v1922 = vld [vmem:[%s1723 + $0x30] sm:$0xf]
      %v1923 = vld [vmem:[%s1723 + $0x34] sm:$0x1]
      %v1924 = vld [vmem:[%s1723 + $0x38] sm:$0xf]
      %v1925 = vld [vmem:[%s1723 + $0x3c] sm:$0x1]
      %v1927 = vshrl.u32 %v1910, 16
      %v1929 = vrot.slane %v1927, 4
      %v1930 = vshll.u32 %v1910, 16
      %v1932 = vrot.slane %v1930, 5
      %v1933 = vor.u32 %v1929, %v1932
      %v1934 = vrot.slane %v1933, 4
      %v1936 = vshll.u32 %v1911, 16
      %v1938 = vrot.slane %v1936, 5
      %v1939 = vsel %vm484, %v1934, %v1938
      %v1941 = vshrl.u32 %v1912, 16
      %v1943 = vrot.slane %v1941, 4
      %v1944 = vshll.u32 %v1912, 16
      %v1946 = vrot.slane %v1944, 5
      %v1947 = vor.u32 %v1943, %v1946
      %v1948 = vrot.slane %v1947, 4
      %v1950 = vshll.u32 %v1913, 16
      %v1952 = vrot.slane %v1950, 5
      %v1953 = vsel %vm484, %v1948, %v1952
      %v1955 = vshrl.u32 %v1914, 16
      %v1957 = vrot.slane %v1955, 4
      %v1958 = vshll.u32 %v1914, 16
      %v1960 = vrot.slane %v1958, 5
      %v1961 = vor.u32 %v1957, %v1960
      %v1962 = vrot.slane %v1961, 4
      %v1964 = vshll.u32 %v1915, 16
      %v1966 = vrot.slane %v1964, 5
      %v1967 = vsel %vm484, %v1962, %v1966
      %v1969 = vshrl.u32 %v1916, 16
      %v1971 = vrot.slane %v1969, 4
      %v1972 = vshll.u32 %v1916, 16
      %v1974 = vrot.slane %v1972, 5
      %v1975 = vor.u32 %v1971, %v1974
      %v1976 = vrot.slane %v1975, 4
      %v1978 = vshll.u32 %v1917, 16
      %v1980 = vrot.slane %v1978, 5
      %v1981 = vsel %vm484, %v1976, %v1980
      %v1983 = vshrl.u32 %v1918, 16
      %v1985 = vrot.slane %v1983, 4
      %v1986 = vshll.u32 %v1918, 16
      %v1988 = vrot.slane %v1986, 5
      %v1989 = vor.u32 %v1985, %v1988
      %v1990 = vrot.slane %v1989, 4
      %v1992 = vshll.u32 %v1919, 16
      %v1994 = vrot.slane %v1992, 5
      %v1995 = vsel %vm484, %v1990, %v1994
      %v1997 = vshrl.u32 %v1920, 16
      %v1999 = vrot.slane %v1997, 4
      %v2000 = vshll.u32 %v1920, 16
      %v2002 = vrot.slane %v2000, 5
      %v2003 = vor.u32 %v1999, %v2002
      %v2004 = vrot.slane %v2003, 4
      %v2006 = vshll.u32 %v1921, 16
      %v2008 = vrot.slane %v2006, 5
      %v2009 = vsel %vm484, %v2004, %v2008
      %v2011 = vshrl.u32 %v1922, 16
      %v2013 = vrot.slane %v2011, 4
      %v2014 = vshll.u32 %v1922, 16
      %v2016 = vrot.slane %v2014, 5
      %v2017 = vor.u32 %v2013, %v2016
      %v2018 = vrot.slane %v2017, 4
      %v2020 = vshll.u32 %v1923, 16
      %v2022 = vrot.slane %v2020, 5
      %v2023 = vsel %vm484, %v2018, %v2022
      %v2025 = vshrl.u32 %v1924, 16
      %v2027 = vrot.slane %v2025, 4
      %v2028 = vshll.u32 %v1924, 16
      %v2030 = vrot.slane %v2028, 5
      %v2031 = vor.u32 %v2027, %v2030
      %v2032 = vrot.slane %v2031, 4
      %v2034 = vshll.u32 %v1925, 16
      %v2036 = vrot.slane %v2034, 5
      %v2037 = vsel %vm484, %v2032, %v2036
      %v2038 = vld [vmem:[#allocation2] sm:$0xff]
      %v2039 = vld [vmem:[#allocation2 + $0x8] sm:$0xff]
      %v2040 = vld [vmem:[#allocation2 + $0x10] sm:$0xff]
      %v2041 = vld [vmem:[#allocation2 + $0x18] sm:$0xff]
      %v2042 = vld [vmem:[#allocation2 + $0x20] sm:$0xff]
      %v2043 = vld [vmem:[#allocation2 + $0x28] sm:$0xff]
      %v2044 = vld [vmem:[#allocation2 + $0x30] sm:$0xff]
      %v2045 = vld [vmem:[#allocation2 + $0x38] sm:$0xff]
      %s2046 = scalar_lea.vmem %s258, 448
      %v2047 = vld [vmem:[%s2046] sm:$0xf]
      %v2048 = vld [vmem:[%s2046 + $0x4] sm:$0xf]
      %v2049 = vld [vmem:[%s2046 + $0x8] sm:$0xf]
      %v2050 = vld [vmem:[%s2046 + $0xc] sm:$0xf]
      %v2051 = vld [vmem:[%s2046 + $0x10] sm:$0xf]
      %v2052 = vld [vmem:[%s2046 + $0x14] sm:$0xf]
      %v2053 = vld [vmem:[%s2046 + $0x18] sm:$0xf]
      %v2054 = vld [vmem:[%s2046 + $0x1c] sm:$0xf]
      %v2055 = vld [vmem:[%s2046 + $0x20] sm:$0xf]
      %v2056 = vld [vmem:[%s2046 + $0x24] sm:$0xf]
      %v2057 = vld [vmem:[%s2046 + $0x28] sm:$0xf]
      %v2058 = vld [vmem:[%s2046 + $0x2c] sm:$0xf]
      %v2059 = vld [vmem:[%s2046 + $0x30] sm:$0xf]
      %v2060 = vld [vmem:[%s2046 + $0x34] sm:$0xf]
      %v2061 = vld [vmem:[%s2046 + $0x38] sm:$0xf]
      %v2062 = vld [vmem:[%s2046 + $0x3c] sm:$0xf]
      %v2063 = vunpack.c.l.b16 %v1939
      %v2064 = vunpack.c.l.b16 %v1953
      %v2065 = vunpack.c.l.b16 %v1967
      %v2066 = vunpack.c.l.b16 %v1981
      %v2067 = vunpack.c.l.b16 %v1995
      %v2068 = vunpack.c.l.b16 %v2009
      %v2069 = vunpack.c.l.b16 %v2023
      %v2070 = vunpack.c.l.b16 %v2037
      %v2071 = vpack.c.b16 %v2064, %v2063
      %v2072 = vpack.c.b16 %v2066, %v2065
      %v2073 = vpack.c.b16 %v2068, %v2067
      %v2074 = vpack.c.b16 %v2070, %v2069
      %v2095 = vunpack.c.l.b16 %v2047
      %v2096 = vunpack.c.l.b16 %v2048
      %v2097 = vunpack.c.l.b16 %v2049
      %v2098 = vunpack.c.l.b16 %v2050
      %v2099 = vunpack.c.l.b16 %v2051
      %v2100 = vunpack.c.l.b16 %v2052
      %v2101 = vunpack.c.l.b16 %v2053
      %v2102 = vunpack.c.l.b16 %v2054
      %v2103 = vunpack.c.l.b16 %v2055
      %v2104 = vunpack.c.l.b16 %v2056
      %v2105 = vunpack.c.l.b16 %v2057
      %v2106 = vunpack.c.l.b16 %v2058
      %v2107 = vunpack.c.l.b16 %v2059
      %v2108 = vunpack.c.l.b16 %v2060
      %v2109 = vunpack.c.l.b16 %v2061
      %v2110 = vunpack.c.l.b16 %v2062
      %v2111 = vpack.c.b16 %v2096, %v2095
      %v2112 = vpack.c.b16 %v2098, %v2097
      %v2113 = vpack.c.b16 %v2100, %v2099
      %v2114 = vpack.c.b16 %v2102, %v2101
      %v2115 = vpack.c.b16 %v2104, %v2103
      %v2116 = vpack.c.b16 %v2106, %v2105
      %v2117 = vpack.c.b16 %v2108, %v2107
      %v2118 = vpack.c.b16 %v2110, %v2109
      %2127 = vmatprep.subr.bf16.mxu0 0
      %2128 = vmatpush1.bf16.msra.mxu0 %v2111
      %2129 = vmatprep.subr.bf16.mxu0 0
      %2130 = vmatpush1.bf16.msra.mxu0 %v2112
      %2131 = vmatprep.subr.bf16.mxu0 0
      %2132 = vmatpush1.bf16.msra.mxu0 %v2113
      %2133 = vmatprep.subr.bf16.mxu0 0
      %2134 = vmatpush1.bf16.msra.mxu0 %v2114
      %2135 = vmatprep.subr.bf16.mxu0 0
      %2136 = vmatpush1.bf16.msra.mxu0 %v2115
      %2137 = vmatprep.subr.bf16.mxu0 0
      %2138 = vmatpush1.bf16.msra.mxu0 %v2116
      %2139 = vmatprep.subr.bf16.mxu0 0
      %2140 = vmatpush1.bf16.msra.mxu0 %v2117
      %2141 = vmatprep.subr.bf16.mxu0 0
      %2142 = vmatpush1.bf16.msra.mxu0 %v2118
      %2143 = vmatprep.subr.bf16.mxu0 0
      %2144 = vmatpush1.bf16.msra.mxu0 0
      %2145 = vmatprep.subr.bf16.mxu0 0
      %2146 = vmatpush1.bf16.msra.mxu0 0
      %2147 = vmatprep.subr.bf16.mxu0 0
      %2148 = vmatpush1.bf16.msra.mxu0 0
      %2149 = vmatprep.subr.bf16.mxu0 0
      %2150 = vmatpush1.bf16.msra.mxu0 0
      %2151 = vmatprep.subr.bf16.mxu0 0
      %2152 = vmatpush1.bf16.msra.mxu0 0
      %2153 = vmatprep.subr.bf16.mxu0 0
      %2154 = vmatpush1.bf16.msra.mxu0 0
      %2155 = vmatprep.subr.bf16.mxu0 0
      %2156 = vmatpush1.bf16.msra.mxu0 0
      %2157 = vmatprep.subr.bf16.mxu0 0
      %2158 = vmatpush1.bf16.msra.mxu0 0
      %2159 = vmatprep.mubr.bf16.mxu0 0
      %2160 = vmatmul.mubr.bf16.gmra.mrb[0].mxu0 %v2071
      %v2161 = vpop.f32.mrb[0].mxu0
      %v2162 = vadd.f32 0.0, %v2161
      %v2163 = vpop.f32.mrb[0].mxu0
      %v2164 = vpop.f32.mrb[0].mxu0
      %v2165 = vadd.f32 0.0, %v2164
      %v2166 = vpop.f32.mrb[0].mxu0
      %2167 = vmatprep.mubr.bf16.mxu0 0
      %2168 = vmatmul.mubr.bf16.gmra.mrb[0].mxu0 %v2072
      %v2169 = vpop.f32.mrb[0].mxu0
      %v2170 = vadd.f32 0.0, %v2169
      %v2171 = vpop.f32.mrb[0].mxu0
      %v2172 = vpop.f32.mrb[0].mxu0
      %v2173 = vadd.f32 0.0, %v2172
      %v2174 = vpop.f32.mrb[0].mxu0
      %2175 = vmatprep.mubr.bf16.mxu0 0
      %2176 = vmatmul.mubr.bf16.gmra.mrb[0].mxu0 %v2073
      %v2177 = vpop.f32.mrb[0].mxu0
      %v2178 = vadd.f32 0.0, %v2177
      %v2179 = vpop.f32.mrb[0].mxu0
      %v2180 = vpop.f32.mrb[0].mxu0
      %v2181 = vadd.f32 0.0, %v2180
      %v2182 = vpop.f32.mrb[0].mxu0
      %2183 = vmatprep.mubr.bf16.mxu0 0
      %2184 = vmatmul.mubr.bf16.gmra.mrb[0].mxu0 %v2074
      %v2185 = vpop.f32.mrb[0].mxu0
      %v2186 = vadd.f32 0.0, %v2185
      %v2187 = vpop.f32.mrb[0].mxu0
      %v2188 = vpop.f32.mrb[0].mxu0
      %v2189 = vadd.f32 0.0, %v2188
      %v2190 = vpop.f32.mrb[0].mxu0
      %2191 = vdwg.mxu0
      %v2192 = vadd.f32 %v2038, %v2162
      %v2193 = vadd.f32 %v2039, %v2165
      %v2194 = vadd.f32 %v2040, %v2170
      %v2195 = vadd.f32 %v2041, %v2173
      %v2196 = vadd.f32 %v2042, %v2178
      %v2197 = vadd.f32 %v2043, %v2181
      %v2198 = vadd.f32 %v2044, %v2186
      %v2199 = vadd.f32 %v2045, %v2189
      %2200 = vst [vmem:[#allocation2] sm:$0xff] %v2192
      %2201 = vst [vmem:[#allocation2 + $0x8] sm:$0xff] %v2193
      %2202 = vst [vmem:[#allocation2 + $0x10] sm:$0xff] %v2194
      %2203 = vst [vmem:[#allocation2 + $0x18] sm:$0xff] %v2195
      %2204 = vst [vmem:[#allocation2 + $0x20] sm:$0xff] %v2196
      %2205 = vst [vmem:[#allocation2 + $0x28] sm:$0xff] %v2197
      %2206 = vst [vmem:[#allocation2 + $0x30] sm:$0xff] %v2198
      %2207 = vst [vmem:[#allocation2 + $0x38] sm:$0xff] %v2199
      %v2208 = vld [vmem:[%s1723] sm:$0xe]
      %v2209 = vld [vmem:[%s1723 + $0x4] sm:$0x1]
      %v2210 = vld [vmem:[%s1723 + $0x8] sm:$0xe]
      %v2211 = vld [vmem:[%s1723 + $0xc] sm:$0x1]
      %v2212 = vld [vmem:[%s1723 + $0x10] sm:$0xe]
      %v2213 = vld [vmem:[%s1723 + $0x14] sm:$0x1]
      %v2214 = vld [vmem:[%s1723 + $0x18] sm:$0xe]
      %v2215 = vld [vmem:[%s1723 + $0x1c] sm:$0x1]
      %v2216 = vld [vmem:[%s1723 + $0x20] sm:$0xe]
      %v2217 = vld [vmem:[%s1723 + $0x24] sm:$0x1]
      %v2218 = vld [vmem:[%s1723 + $0x28] sm:$0xe]
      %v2219 = vld [vmem:[%s1723 + $0x2c] sm:$0x1]
      %v2220 = vld [vmem:[%s1723 + $0x30] sm:$0xe]
      %v2221 = vld [vmem:[%s1723 + $0x34] sm:$0x1]
      %v2222 = vld [vmem:[%s1723 + $0x38] sm:$0xe]
      %v2223 = vld [vmem:[%s1723 + $0x3c] sm:$0x1]
      %v2240 = vrot.slane %v2208, 5
      %v2241 = vrot.slane %v2240, 4
      %v2242 = vrot.slane %v2209, 5
      %v2243 = vsel %vm801, %v2241, %v2242
      %v2244 = vrot.slane %v2210, 5
      %v2245 = vrot.slane %v2244, 4
      %v2246 = vrot.slane %v2211, 5
      %v2247 = vsel %vm801, %v2245, %v2246
      %v2248 = vrot.slane %v2212, 5
      %v2249 = vrot.slane %v2248, 4
      %v2250 = vrot.slane %v2213, 5
      %v2251 = vsel %vm801, %v2249, %v2250
      %v2252 = vrot.slane %v2214, 5
      %v2253 = vrot.slane %v2252, 4
      %v2254 = vrot.slane %v2215, 5
      %v2255 = vsel %vm801, %v2253, %v2254
      %v2256 = vrot.slane %v2216, 5
      %v2257 = vrot.slane %v2256, 4
      %v2258 = vrot.slane %v2217, 5
      %v2259 = vsel %vm801, %v2257, %v2258
      %v2260 = vrot.slane %v2218, 5
      %v2261 = vrot.slane %v2260, 4
      %v2262 = vrot.slane %v2219, 5
      %v2263 = vsel %vm801, %v2261, %v2262
      %v2264 = vrot.slane %v2220, 5
      %v2265 = vrot.slane %v2264, 4
      %v2266 = vrot.slane %v2221, 5
      %v2267 = vsel %vm801, %v2265, %v2266
      %v2268 = vrot.slane %v2222, 5
      %v2269 = vrot.slane %v2268, 4
      %v2270 = vrot.slane %v2223, 5
      %v2271 = vsel %vm801, %v2269, %v2270
      %v2272 = vld [vmem:[#allocation2] sm:$0xff]
      %v2273 = vld [vmem:[#allocation2 + $0x8] sm:$0xff]
      %v2274 = vld [vmem:[#allocation2 + $0x10] sm:$0xff]
      %v2275 = vld [vmem:[#allocation2 + $0x18] sm:$0xff]
      %v2276 = vld [vmem:[#allocation2 + $0x20] sm:$0xff]
      %v2277 = vld [vmem:[#allocation2 + $0x28] sm:$0xff]
      %v2278 = vld [vmem:[#allocation2 + $0x30] sm:$0xff]
      %v2279 = vld [vmem:[#allocation2 + $0x38] sm:$0xff]
      %s2280 = scalar_lea.vmem %s258, 512
      %v2281 = vld [vmem:[%s2280] sm:$0xf]
      %v2282 = vld [vmem:[%s2280 + $0x4] sm:$0xf]
      %v2283 = vld [vmem:[%s2280 + $0x8] sm:$0xf]
      %v2284 = vld [vmem:[%s2280 + $0xc] sm:$0xf]
      %v2285 = vld [vmem:[%s2280 + $0x10] sm:$0xf]
      %v2286 = vld [vmem:[%s2280 + $0x14] sm:$0xf]
      %v2287 = vld [vmem:[%s2280 + $0x18] sm:$0xf]
      %v2288 = vld [vmem:[%s2280 + $0x1c] sm:$0xf]
      %v2289 = vld [vmem:[%s2280 + $0x20] sm:$0xf]
      %v2290 = vld [vmem:[%s2280 + $0x24] sm:$0xf]
      %v2291 = vld [vmem:[%s2280 + $0x28] sm:$0xf]
      %v2292 = vld [vmem:[%s2280 + $0x2c] sm:$0xf]
      %v2293 = vld [vmem:[%s2280 + $0x30] sm:$0xf]
      %v2294 = vld [vmem:[%s2280 + $0x34] sm:$0xf]
      %v2295 = vld [vmem:[%s2280 + $0x38] sm:$0xf]
      %v2296 = vld [vmem:[%s2280 + $0x3c] sm:$0xf]
      %v2297 = vunpack.c.l.b16 %v2243
      %v2298 = vunpack.c.l.b16 %v2247
      %v2299 = vunpack.c.l.b16 %v2251
      %v2300 = vunpack.c.l.b16 %v2255
      %v2301 = vunpack.c.l.b16 %v2259
      %v2302 = vunpack.c.l.b16 %v2263
      %v2303 = vunpack.c.l.b16 %v2267
      %v2304 = vunpack.c.l.b16 %v2271
      %v2305 = vpack.c.b16 %v2298, %v2297
      %v2306 = vpack.c.b16 %v2300, %v2299
      %v2307 = vpack.c.b16 %v2302, %v2301
      %v2308 = vpack.c.b16 %v2304, %v2303
      %v2329 = vunpack.c.l.b16 %v2281
      %v2330 = vunpack.c.l.b16 %v2282
      %v2331 = vunpack.c.l.b16 %v2283
      %v2332 = vunpack.c.l.b16 %v2284
      %v2333 = vunpack.c.l.b16 %v2285
      %v2334 = vunpack.c.l.b16 %v2286
      %v2335 = vunpack.c.l.b16 %v2287
      %v2336 = vunpack.c.l.b16 %v2288
      %v2337 = vunpack.c.l.b16 %v2289
      %v2338 = vunpack.c.l.b16 %v2290
      %v2339 = vunpack.c.l.b16 %v2291
      %v2340 = vunpack.c.l.b16 %v2292
      %v2341 = vunpack.c.l.b16 %v2293
      %v2342 = vunpack.c.l.b16 %v2294
      %v2343 = vunpack.c.l.b16 %v2295
      %v2344 = vunpack.c.l.b16 %v2296
      %v2345 = vpack.c.b16 %v2330, %v2329
      %v2346 = vpack.c.b16 %v2332, %v2331
      %v2347 = vpack.c.b16 %v2334, %v2333
      %v2348 = vpack.c.b16 %v2336, %v2335
      %v2349 = vpack.c.b16 %v2338, %v2337
      %v2350 = vpack.c.b16 %v2340, %v2339
      %v2351 = vpack.c.b16 %v2342, %v2341
      %v2352 = vpack.c.b16 %v2344, %v2343
      %2361 = vmatprep.subr.bf16.mxu0 0
      %2362 = vmatpush1.bf16.msra.mxu0 %v2345
      %2363 = vmatprep.subr.bf16.mxu0 0
      %2364 = vmatpush1.bf16.msra.mxu0 %v2346
      %2365 = vmatprep.subr.bf16.mxu0 0
      %2366 = vmatpush1.bf16.msra.mxu0 %v2347
      %2367 = vmatprep.subr.bf16.mxu0 0
      %2368 = vmatpush1.bf16.msra.mxu0 %v2348
      %2369 = vmatprep.subr.bf16.mxu0 0
      %2370 = vmatpush1.bf16.msra.mxu0 %v2349
      %2371 = vmatprep.subr.bf16.mxu0 0
      %2372 = vmatpush1.bf16.msra.mxu0 %v2350
      %2373 = vmatprep.subr.bf16.mxu0 0
      %2374 = vmatpush1.bf16.msra.mxu0 %v2351
      %2375 = vmatprep.subr.bf16.mxu0 0
      %2376 = vmatpush1.bf16.msra.mxu0 %v2352
      %2377 = vmatprep.subr.bf16.mxu0 0
      %2378 = vmatpush1.bf16.msra.mxu0 0
      %2379 = vmatprep.subr.bf16.mxu0 0
      %2380 = vmatpush1.bf16.msra.mxu0 0
      %2381 = vmatprep.subr.bf16.mxu0 0
      %2382 = vmatpush1.bf16.msra.mxu0 0
      %2383 = vmatprep.subr.bf16.mxu0 0
      %2384 = vmatpush1.bf16.msra.mxu0 0
      %2385 = vmatprep.subr.bf16.mxu0 0
      %2386 = vmatpush1.bf16.msra.mxu0 0
      %2387 = vmatprep.subr.bf16.mxu0 0
      %2388 = vmatpush1.bf16.msra.mxu0 0
      %2389 = vmatprep.subr.bf16.mxu0 0
      %2390 = vmatpush1.bf16.msra.mxu0 0
      %2391 = vmatprep.subr.bf16.mxu0 0
      %2392 = vmatpush1.bf16.msra.mxu0 0
      %2393 = vmatprep.mubr.bf16.mxu0 0
      %2394 = vmatmul.mubr.bf16.gmra.mrb[0].mxu0 %v2305
      %v2395 = vpop.f32.mrb[0].mxu0
      %v2396 = vadd.f32 0.0, %v2395
      %v2397 = vpop.f32.mrb[0].mxu0
      %v2398 = vpop.f32.mrb[0].mxu0
      %v2399 = vadd.f32 0.0, %v2398
      %v2400 = vpop.f32.mrb[0].mxu0
      %2401 = vmatprep.mubr.bf16.mxu0 0
      %2402 = vmatmul.mubr.bf16.gmra.mrb[0].mxu0 %v2306
      %v2403 = vpop.f32.mrb[0].mxu0
      %v2404 = vadd.f32 0.0, %v2403
      %v2405 = vpop.f32.mrb[0].mxu0
      %v2406 = vpop.f32.mrb[0].mxu0
      %v2407 = vadd.f32 0.0, %v2406
      %v2408 = vpop.f32.mrb[0].mxu0
      %2409 = vmatprep.mubr.bf16.mxu0 0
      %2410 = vmatmul.mubr.bf16.gmra.mrb[0].mxu0 %v2307
      %v2411 = vpop.f32.mrb[0].mxu0
      %v2412 = vadd.f32 0.0, %v2411
      %v2413 = vpop.f32.mrb[0].mxu0
      %v2414 = vpop.f32.mrb[0].mxu0
      %v2415 = vadd.f32 0.0, %v2414
      %v2416 = vpop.f32.mrb[0].mxu0
      %2417 = vmatprep.mubr.bf16.mxu0 0
      %2418 = vmatmul.mubr.bf16.gmra.mrb[0].mxu0 %v2308
      %v2419 = vpop.f32.mrb[0].mxu0
      %v2420 = vadd.f32 0.0, %v2419
      %v2421 = vpop.f32.mrb[0].mxu0
      %v2422 = vpop.f32.mrb[0].mxu0
      %v2423 = vadd.f32 0.0, %v2422
      %v2424 = vpop.f32.mrb[0].mxu0
      %2425 = vdwg.mxu0
      %v2426 = vadd.f32 %v2272, %v2396
      %v2427 = vadd.f32 %v2273, %v2399
      %v2428 = vadd.f32 %v2274, %v2404
      %v2429 = vadd.f32 %v2275, %v2407
      %v2430 = vadd.f32 %v2276, %v2412
      %v2431 = vadd.f32 %v2277, %v2415
      %v2432 = vadd.f32 %v2278, %v2420
      %v2433 = vadd.f32 %v2279, %v2423
      %2434 = vst [vmem:[#allocation2] sm:$0xff] %v2426
      %2435 = vst [vmem:[#allocation2 + $0x8] sm:$0xff] %v2427
      %2436 = vst [vmem:[#allocation2 + $0x10] sm:$0xff] %v2428
      %2437 = vst [vmem:[#allocation2 + $0x18] sm:$0xff] %v2429
      %2438 = vst [vmem:[#allocation2 + $0x20] sm:$0xff] %v2430
      %2439 = vst [vmem:[#allocation2 + $0x28] sm:$0xff] %v2431
      %2440 = vst [vmem:[#allocation2 + $0x30] sm:$0xff] %v2432
      %2441 = vst [vmem:[#allocation2 + $0x38] sm:$0xff] %v2433
      %p2442 = scmp.eq.s32.totalorder %s22, 2
      // Predicated region
      $region41: #{up_forward.4} parent=35 // pred_check
        %p2443 = pneg %p2442
      $region42: #{up_forward.4} parent=35 // pred_check_branch
        %2445 = sbr.rel (%p2443) target = $region44
      $region43: #{up_forward.4} parent=35 // pred_region
        %v2446 = vld [vmem:[#allocation2] sm:$0xff]
        %v2447 = vld [vmem:[#allocation2 + $0x8] sm:$0xff]
        %v2448 = vld [vmem:[#allocation2 + $0x10] sm:$0xff]
        %v2449 = vld [vmem:[#allocation2 + $0x18] sm:$0xff]
        %v2450 = vld [vmem:[#allocation2 + $0x20] sm:$0xff]
        %v2451 = vld [vmem:[#allocation2 + $0x28] sm:$0xff]
        %v2452 = vld [vmem:[#allocation2 + $0x30] sm:$0xff]
        %v2453 = vld [vmem:[#allocation2 + $0x38] sm:$0xff]
        %v2454 = vld [vmem:[%s2] sm:$0x1]
        %v2456 = vlaneseq
        %v2457 = vshrl.u32 %v2456, 7
        %v2458 = vsub.s32 0, %v2457
        %v2459 = vrot.slane %v2454, %v2458
        %v2461 = vmul.f32 %v2446, %v2459
        %v2462 = vmul.f32 %v2447, %v2459
        %v2463 = vmul.f32 %v2448, %v2459
        %v2464 = vmul.f32 %v2449, %v2459
        %v2465 = vmul.f32 %v2450, %v2459
        %v2466 = vmul.f32 %v2451, %v2459
        %v2467 = vmul.f32 %v2452, %v2459
        %v2468 = vmul.f32 %v2453, %v2459
        %v2469 = vld [vmem:[%s3] sm:$0x1]
        %v2471 = vlaneseq
        %v2472 = vshrl.u32 %v2471, 7
        %v2473 = vsub.s32 0, %v2472
        %v2474 = vrot.slane %v2469, %v2473
        %v2476 = vadd.f32 %v2461, %v2474
        %v2477 = vadd.f32 %v2462, %v2474
        %v2478 = vadd.f32 %v2463, %v2474
        %v2479 = vadd.f32 %v2464, %v2474
        %v2480 = vadd.f32 %v2465, %v2474
        %v2481 = vadd.f32 %v2466, %v2474
        %v2482 = vadd.f32 %v2467, %v2474
        %v2483 = vadd.f32 %v2468, %v2474
        %v2484 = vmax.f32 %v2476, 0.0
        %v2485 = vmax.f32 %v2477, 0.0
        %v2486 = vmax.f32 %v2478, 0.0
        %v2487 = vmax.f32 %v2479, 0.0
        %v2488 = vmax.f32 %v2480, 0.0
        %v2489 = vmax.f32 %v2481, 0.0
        %v2490 = vmax.f32 %v2482, 0.0
        %v2491 = vmax.f32 %v2483, 0.0
        %v2492 = vpack.c.bf16 %v2485, %v2484
        %v2493 = vpack.c.bf16 %v2487, %v2486
        %v2494 = vpack.c.bf16 %v2489, %v2488
        %v2495 = vpack.c.bf16 %v2491, %v2490
        %v2500 = vunpack.c.l.b16 %v2492
        %v2501 = vunpack.c.h.b16 %v2492
        %v2502 = vunpack.c.l.b16 %v2493
        %v2503 = vunpack.c.h.b16 %v2493
        %v2504 = vunpack.c.l.b16 %v2494
        %v2505 = vunpack.c.h.b16 %v2494
        %v2506 = vunpack.c.l.b16 %v2495
        %v2507 = vunpack.c.h.b16 %v2495
        %v2508 = vpack.c.b16 %v2500, %v2500
        %v2509 = vpack.c.b16 %v2501, %v2501
        %v2510 = vpack.c.b16 %v2502, %v2502
        %v2511 = vpack.c.b16 %v2503, %v2503
        %v2512 = vpack.c.b16 %v2504, %v2504
        %v2513 = vpack.c.b16 %v2505, %v2505
        %v2514 = vpack.c.b16 %v2506, %v2506
        %v2515 = vpack.c.b16 %v2507, %v2507
        %2524 = vst [vmem:[%s265] sm:$0xf] %v2508
        %2525 = vst [vmem:[%s265 + $0x4] sm:$0xf] %v2509
        %2526 = vst [vmem:[%s265 + $0x8] sm:$0xf] %v2510
        %2527 = vst [vmem:[%s265 + $0xc] sm:$0xf] %v2511
        %2528 = vst [vmem:[%s265 + $0x10] sm:$0xf] %v2512
        %2529 = vst [vmem:[%s265 + $0x14] sm:$0xf] %v2513
        %2530 = vst [vmem:[%s265 + $0x18] sm:$0xf] %v2514
        %2531 = vst [vmem:[%s265 + $0x1c] sm:$0xf] %v2515
      $region44: #{up_forward.4} parent=35 // pred_fallthru
        _
      %s2532 = smul.u32 %s20, 8
      %s2533 = sadd.s32 %s2532, %s21
      %p2534 = scmp.lt.s32.totalorder %s2533, 15
      %s2535 = scalar_select %p2534, %s2533, 15
      %s2536 = smul.addr %s2535, 8
      %s2537 = smul.addr %s2536, 4
      %s2538 = scalar_lea.vmem %s4, %s2537
      // Predicated region
      $region45: #{up_forward.4} parent=35 // pred_check
        %p2539 = pneg %p156
      $region46: #{up_forward.4} parent=35 // pred_check_branch
        %2541 = sbr.rel (%p2539) target = $region48
      $region47: #{up_forward.4} parent=35 // pred_region
        %s2542 = smul.u32 %s20, 8
        %s2543 = sadd.s32 %s2542, %s21
      $region48: #{up_forward.4} parent=35 // pred_fallthru
        _
    $region36: #{up_forward.4} parent=5 // pred_fallthru
      _
    %p2544 = scmp.le.s32.totalorder 2, %s10
    // Predicated region
    $region49: #{up_forward.4} parent=5 // pred_check
      %p2545 = pneg %p2544
    $region50: #{up_forward.4} parent=5 // pred_check_branch
      %2547 = sbr.rel (%p2545) target = $region52
    $region51: #{up_forward.4} parent=5 // pred_region
      %s2548 = ssub.s32 %s10, 2
      // Predicated region
      $region53: #{up_forward.4} parent=51 // pred_check
        %p2549 = pneg %p162
      $region54: #{up_forward.4} parent=51 // pred_check_branch
        %2551 = sbr.rel (%p2549) target = $region56
      $region55: #{up_forward.4} parent=51 // pred_region
        %s2552 = smul.u32 %s23, 8
        %s2553 = sadd.s32 %s2552, %s24
        %p2554 = scmp.lt.s32.totalorder %s2553, 15
        %s2555 = scalar_select %p2554, %s2553, 15
        %s2556 = smul.addr %s2555, 8
        %s2557 = smul.addr %s2556, 4
        %s2558 = scalar_lea.vmem %s4, %s2557
      $region56: #{up_forward.4} parent=51 // pred_fallthru
        _
    $region52: #{up_forward.4} parent=5 // pred_fallthru
      _
  $region6: #{up_forward.4} parent=0 // loop_footer
    %s14 = sadd.s32 1, %s10
  $region7: #{up_forward.4} parent=0 // loop_footer_branch
    %9 = sbr.rel target = $region3
  $region8: #{up_forward.4} parent=0 // loop_exit
    _

// kernel: up_forward.5
$region0: #{up_forward.5}
  #allocation0 [shape = 'u32[]', space=smem, size = 0x4, offset = 0x4, fixed_abs, tag = 'smem constant byte address 0x4 - core index']
  #allocation1 [shape = 'u32[144,128]{1,0:T(1,128)}', space=vmem, size = 0x12000, scoped, tag = 'internal scratch']
  #allocation2 [shape = 'f32[64,128]{1,0:T(8,128)}', space=vmem, size = 0x8000, scoped, tag = 'scratch operand']
  %s0 = inlined_call_operand.vmem [shape: bf16[20,10,10,128], index: 0, kind: input, shape index: {}]
  %s1 = inlined_call_operand.vmem [shape: bf16[3,9,128,128], index: 1, kind: input, shape index: {}]
  %s2 = inlined_call_operand.vmem [shape: f32[1,128], index: 2, kind: input, shape index: {}]
  %s3 = inlined_call_operand.vmem [shape: f32[1,128], index: 3, kind: input, shape index: {}]
  %s4 = inlined_call_operand.vmem [shape: f32[16,64,128], index: 4, kind: output, shape index: {}]
  %s5 = sld [smem:[#allocation0]]
  $region57: #{up_forward.5} parent=0
    _
  %s7 = ssub.s32 1, %s5
  %s8 = scalar_select 0, %s7, %s5
  loop: start=0, step=1, limit=50
  $region2: #{up_forward.5} parent=0 // loop_pre_header
    _
  $region3: #{up_forward.5} parent=0 // loop_header
    %s10 = sphi 0, %s14
    %p11 = scmp.ge.s32.totalorder %s10, 50
    %s17 = sphi 0, %s36
    %s18 = sphi 0, %s32
    %s19 = sphi 0, %s28
    %s20 = sphi 0, %s17
    %s21 = sphi 0, %s18
    %s22 = sphi 0, %s19
    %s23 = sphi 0, %s20
    %s24 = sphi 0, %s21
    %s25 = sphi 0, %s22
    %s45 = sphi 0, %s47
    %s48 = sphi 0, %s45
    %s49 = sphi 0, %s48
    %s65 = sphi 0, %s49
    %s71 = sphi 0, %s73
    %s74 = sphi 0, %s71
    %s75 = sphi 0, %s74
    %s91 = sphi 0, %s75
    %s95 = sphi 0, %s95
    %s97 = sphi 0, %s95
    %s98 = sphi 0, %s97
    %s112 = sphi 0, %s98
    %s116 = sphi 0, %s116
    %s118 = sphi 0, %s116
    %s119 = sphi 0, %s118
    %s133 = sphi 0, %s119
    %s143 = sphi 0, %s145
    %s146 = sphi 0, %s143
    %s147 = sphi 0, %s146
    %s163 = sphi 0, %s147
  $region4: #{up_forward.5} parent=0 // loop_header_branch
    %13 = sbr.rel (%p11) target = $region8
  $region5: #{up_forward.5} parent=0 // loop_body
    %s15 = ssub.s32 %s10, 1
    %s16 = ssub.s32 %s10, 2
    %s26 = sadd.s32 1, %s19
    %p27 = scmp.ge.s32.totalorder %s26, 3
    %s28 = scalar_select %p27, 0, %s26
    %s29 = sadd.s32 1, %s18
    %s30 = scalar_select %p27, %s29, %s18
    %p31 = scmp.ge.s32.totalorder %s30, 8
    %s32 = scalar_select %p31, 0, %s30
    %s33 = sadd.s32 1, %s17
    %s34 = scalar_select %p31, %s33, %s17
    %p35 = scmp.ge.s32.totalorder %s34, 2
    %s36 = scalar_select %p35, 0, %s34
    %s37 = smul.u32 %s17, 10
    %s38 = sadd.s32 %s37, %s18
    %s39 = sadd.s32 %s38, %s19
    %s40 = smul.u32 %s36, 10
    %s41 = sadd.s32 %s40, %s32
    %s42 = sadd.s32 %s41, %s28
    %s43 = ssub.s32 %s39, %s42
    %p44 = scmp.eq.s32.totalorder %s43, 0
    %s46 = sadd.s32 %s45, 1
    %s47 = scalar_select %p44, %s45, %s46
    %p50 = pneg %p44
    %p51 = scmp.eq.s32.totalorder %s10, 47
    %p52 = por %p50, %p51
    %p53 = scmp.ne.s32.totalorder %s45, %s48
    %p54 = scmp.eq.s32.totalorder %s10, 0
    %p55 = por %p53, %p54
    %p56 = scmp.ne.s32.totalorder %s45, %s48
    %p57 = scmp.eq.s32.totalorder %s15, 47
    %p58 = por %p56, %p57
    %p59 = scmp.ne.s32.totalorder %s48, %s49
    %p60 = scmp.eq.s32.totalorder %s15, 0
    %p61 = por %p59, %p60
    %p62 = scmp.ne.s32.totalorder %s48, %s49
    %p63 = scmp.eq.s32.totalorder %s16, 47
    %p64 = por %p62, %p63
    %p66 = scmp.ne.s32.totalorder %s49, %s65
    %p67 = scmp.eq.s32.totalorder %s16, 0
    %p68 = por %p66, %p67
    %s69 = ssub.s32 %s19, %s28
    %p70 = scmp.eq.s32.totalorder %s69, 0
    %s72 = sadd.s32 %s71, 1
    %s73 = scalar_select %p70, %s71, %s72
    %p76 = pneg %p70
    %p77 = scmp.eq.s32.totalorder %s10, 47
    %p78 = por %p76, %p77
    %p79 = scmp.ne.s32.totalorder %s71, %s74
    %p80 = scmp.eq.s32.totalorder %s10, 0
    %p81 = por %p79, %p80
    %p82 = scmp.ne.s32.totalorder %s71, %s74
    %p83 = scmp.eq.s32.totalorder %s15, 47
    %p84 = por %p82, %p83
    %p85 = scmp.ne.s32.totalorder %s74, %s75
    %p86 = scmp.eq.s32.totalorder %s15, 0
    %p87 = por %p85, %p86
    %p88 = scmp.ne.s32.totalorder %s74, %s75
    %p89 = scmp.eq.s32.totalorder %s16, 47
    %p90 = por %p88, %p89
    %p92 = scmp.ne.s32.totalorder %s75, %s91
    %p93 = scmp.eq.s32.totalorder %s16, 0
    %p94 = por %p92, %p93
    %s96 = sadd.s32 %s95, 1
    %p99 = scmp.eq.s32.totalorder %s10, 47
    %p100 = scmp.ne.s32.totalorder %s95, %s97
    %p101 = scmp.eq.s32.totalorder %s10, 0
    %p102 = por %p100, %p101
    %p103 = scmp.ne.s32.totalorder %s95, %s97
    %p104 = scmp.eq.s32.totalorder %s15, 47
    %p105 = por %p103, %p104
    %p106 = scmp.ne.s32.totalorder %s97, %s98
    %p107 = scmp.eq.s32.totalorder %s15, 0
    %p108 = por %p106, %p107
    %p109 = scmp.ne.s32.totalorder %s97, %s98
    %p110 = scmp.eq.s32.totalorder %s16, 47
    %p111 = por %p109, %p110
    %p113 = scmp.ne.s32.totalorder %s98, %s112
    %p114 = scmp.eq.s32.totalorder %s16, 0
    %p115 = por %p113, %p114
    %s117 = sadd.s32 %s116, 1
    %p120 = scmp.eq.s32.totalorder %s10, 47
    %p121 = scmp.ne.s32.totalorder %s116, %s118
    %p122 = scmp.eq.s32.totalorder %s10, 0
    %p123 = por %p121, %p122
    %p124 = scmp.ne.s32.totalorder %s116, %s118
    %p125 = scmp.eq.s32.totalorder %s15, 47
    %p126 = por %p124, %p125
    %p127 = scmp.ne.s32.totalorder %s118, %s119
    %p128 = scmp.eq.s32.totalorder %s15, 0
    %p129 = por %p127, %p128
    %p130 = scmp.ne.s32.totalorder %s118, %s119
    %p131 = scmp.eq.s32.totalorder %s16, 47
    %p132 = por %p130, %p131
    %p134 = scmp.ne.s32.totalorder %s119, %s133
    %p135 = scmp.eq.s32.totalorder %s16, 0
    %p136 = por %p134, %p135
    %s137 = smul.u32 %s17, 8
    %s138 = sadd.s32 %s137, %s18
    %s139 = smul.u32 %s36, 8
    %s140 = sadd.s32 %s139, %s32
    %s141 = ssub.s32 %s138, %s140
    %p142 = scmp.eq.s32.totalorder %s141, 0
    %s144 = sadd.s32 %s143, 1
    %s145 = scalar_select %p142, %s143, %s144
    %p148 = pneg %p142
    %p149 = scmp.eq.s32.totalorder %s10, 47
    %p150 = por %p148, %p149
    %p151 = scmp.ne.s32.totalorder %s143, %s146
    %p152 = scmp.eq.s32.totalorder %s10, 0
    %p153 = por %p151, %p152
    %p154 = scmp.ne.s32.totalorder %s143, %s146
    %p155 = scmp.eq.s32.totalorder %s15, 47
    %p156 = por %p154, %p155
    %p157 = scmp.ne.s32.totalorder %s146, %s147
    %p158 = scmp.eq.s32.totalorder %s15, 0
    %p159 = por %p157, %p158
    %p160 = scmp.ne.s32.totalorder %s146, %s147
    %p161 = scmp.eq.s32.totalorder %s16, 47
    %p162 = por %p160, %p161
    %p164 = scmp.ne.s32.totalorder %s147, %s163
    %p165 = scmp.eq.s32.totalorder %s16, 0
    %p166 = por %p164, %p165
    %p167 = scmp.le.s32.totalorder 1, %s10
    %p168 = scmp.lt.s32.totalorder %s10, 49
    %p169 = pnand %p167, %p168
    %p170 = pneg %p169
    // Predicated region
    $region9: #{up_forward.5} parent=5 // pred_check
      _
    $region10: #{up_forward.5} parent=5 // pred_check_branch
      %172 = sbr.rel (%p169) target = $region12
    $region11: #{up_forward.5} parent=5 // pred_region
      %s173 = ssub.s32 %s10, 1
      // Predicated region
      $region13: #{up_forward.5} parent=11 // pred_check
        %p174 = pneg %p108
      $region14: #{up_forward.5} parent=11 // pred_check_branch
        %176 = sbr.rel (%p174) target = $region16
      $region15: #{up_forward.5} parent=11 // pred_region
        _
      $region16: #{up_forward.5} parent=11 // pred_fallthru
        _
      // Predicated region
      $region17: #{up_forward.5} parent=11 // pred_check
        %p177 = pneg %p129
      $region18: #{up_forward.5} parent=11 // pred_check_branch
        %179 = sbr.rel (%p177) target = $region20
      $region19: #{up_forward.5} parent=11 // pred_region
        _
      $region20: #{up_forward.5} parent=11 // pred_fallthru
        _
    $region12: #{up_forward.5} parent=5 // pred_fallthru
      _
    %p180 = scmp.lt.s32.totalorder %s10, 48
    // Predicated region
    $region21: #{up_forward.5} parent=5 // pred_check
      %p181 = pneg %p180
    $region22: #{up_forward.5} parent=5 // pred_check_branch
      %183 = sbr.rel (%p181) target = $region24
    $region23: #{up_forward.5} parent=5 // pred_region
      // Predicated region
      $region25: #{up_forward.5} parent=23 // pred_check
        %p184 = pneg %p55
      $region26: #{up_forward.5} parent=23 // pred_check_branch
        %186 = sbr.rel (%p184) target = $region28
      $region27: #{up_forward.5} parent=23 // pred_region
        %s187 = smul.u32 %s17, 10
        %s188 = sadd.s32 %s187, %s18
        %s189 = sadd.s32 %s188, %s19
        %p190 = scmp.lt.s32.totalorder %s189, 19
        %s191 = scalar_select %p190, %s189, 19
        %s192 = smul.addr %s191, 20
        %s193 = smul.addr %s192, 4
        %s194 = scalar_lea.vmem %s0, %s193
        %s195 = smul.u32 %s17, 10
        %s196 = sadd.s32 %s195, %s18
        %s197 = sadd.s32 %s196, %s19
      $region28: #{up_forward.5} parent=23 // pred_fallthru
        _
      // Predicated region
      $region29: #{up_forward.5} parent=23 // pred_check
        %p198 = pneg %p81
      $region30: #{up_forward.5} parent=23 // pred_check_branch
        %200 = sbr.rel (%p198) target = $region32
      $region31: #{up_forward.5} parent=23 // pred_region
        %p201 = scmp.lt.s32.totalorder %s19, 2
        %s202 = scalar_select %p201, %s19, 2
        %s203 = smul.addr %s202, 144
        %s204 = smul.addr %s203, 4
        %s205 = scalar_lea.vmem %s1, %s204
      $region32: #{up_forward.5} parent=23 // pred_fallthru
        _
    $region24: #{up_forward.5} parent=5 // pred_fallthru
      _
    %p206 = scmp.le.s32.totalorder 1, %s10
    %p207 = scmp.lt.s32.totalorder %s10, 49
    %p208 = pnand %p206, %p207
    %p209 = pneg %p208
    // Predicated region
    $region33: #{up_forward.5} parent=5 // pred_check
      _
    $region34: #{up_forward.5} parent=5 // pred_check_branch
      %211 = sbr.rel (%p208) target = $region36
    $region35: #{up_forward.5} parent=5 // pred_region
      %s212 = ssub.s32 %s10, 1
      %s213 = smul.u32 %s20, 10
      %s214 = sadd.s32 %s213, %s21
      %s215 = sadd.s32 %s214, %s22
      %p216 = scmp.lt.s32.totalorder %s215, 19
      %s217 = scalar_select %p216, %s215, 19
      %s218 = smul.addr %s217, 20
      %s219 = smul.addr %s218, 4
      %s220 = scalar_lea.vmem %s0, %s219
      %p221 = pneg %p61
      %p222 = pneg %p58
      %p223 = scmp.lt.s32.totalorder %s22, 2
      %s224 = scalar_select %p223, %s22, 2
      %s225 = smul.addr %s224, 144
      %s226 = smul.addr %s225, 4
      %s227 = scalar_lea.vmem %s1, %s226
      %p228 = pneg %p87
      %p229 = pneg %p84
      %p230 = pneg %p108
      %p231 = pneg %p105
      %p232 = pneg %p129
      %p233 = pneg %p126
      %p234 = pneg %p159
      %p235 = pneg %p156
      %s236 = smul.u32 %s20, 8
      %s237 = sadd.s32 %s236, %s21
      %p238 = scmp.lt.s32.totalorder %s237, 15
      %s239 = scalar_select %p238, %s237, 15
      %s240 = smul.addr %s239, 8
      %s241 = smul.addr %s240, 8
      %s242 = scalar_lea.vmem %s4, %s241
      %s243 = smul.u32 %s20, 10
      %s244 = sadd.s32 %s243, %s21
      %s245 = sadd.s32 %s244, %s22
      %p246 = scmp.lt.s32.totalorder %s245, 19
      %s247 = scalar_select %p246, %s245, 19
      %s248 = smul.addr %s247, 20
      %s249 = smul.addr %s248, 4
      %s250 = scalar_lea.vmem %s0, %s249
      %s251 = smul.u32 %s20, 10
      %s252 = sadd.s32 %s251, %s21
      %s253 = sadd.s32 %s252, %s22
      %p254 = scmp.lt.s32.totalorder %s22, 2
      %s255 = scalar_select %p254, %s22, 2
      %s256 = smul.addr %s255, 144
      %s257 = smul.addr %s256, 4
      %s258 = scalar_lea.vmem %s1, %s257
      %s259 = smul.u32 %s20, 8
      %s260 = sadd.s32 %s259, %s21
      %p261 = scmp.lt.s32.totalorder %s260, 15
      %s262 = scalar_select %p261, %s260, 15
      %s263 = smul.addr %s262, 8
      %s264 = smul.addr %s263, 8
      %s265 = scalar_lea.vmem %s4, %s264
      %s266 = smul.u32 %s20, 8
      %s267 = sadd.s32 %s266, %s21
      %p269 = scmp.eq.s32.totalorder %s22, 0
      // Predicated region
      $region37: #{up_forward.5} parent=35 // pred_check
        %p270 = pneg %p269
      $region38: #{up_forward.5} parent=35 // pred_check_branch
        %272 = sbr.rel (%p270) target = $region40
      $region39: #{up_forward.5} parent=35 // pred_region
        %273 = vst [vmem:[#allocation2] sm:$0xff] 0.0
        %274 = vst [vmem:[#allocation2 + $0x8] sm:$0xff] 0.0
        %275 = vst [vmem:[#allocation2 + $0x10] sm:$0xff] 0.0
        %276 = vst [vmem:[#allocation2 + $0x18] sm:$0xff] 0.0
        %277 = vst [vmem:[#allocation2 + $0x20] sm:$0xff] 0.0
        %278 = vst [vmem:[#allocation2 + $0x28] sm:$0xff] 0.0
        %279 = vst [vmem:[#allocation2 + $0x30] sm:$0xff] 0.0
        %280 = vst [vmem:[#allocation2 + $0x38] sm:$0xff] 0.0
      $region40: #{up_forward.5} parent=35 // pred_fallthru
        _
      %v281 = vld [vmem:[%s250] sm:$0xf]
      %v282 = vld [vmem:[%s250 + $0x8] sm:$0xf]
      %v283 = vld [vmem:[%s250 + $0x10] sm:$0xf]
      %v284 = vld [vmem:[%s250 + $0x18] sm:$0xf]
      %v285 = vld [vmem:[%s250 + $0x20] sm:$0xf]
      %v286 = vld [vmem:[%s250 + $0x28] sm:$0xf]
      %v287 = vld [vmem:[%s250 + $0x30] sm:$0xf]
      %v288 = vld [vmem:[%s250 + $0x38] sm:$0xf]
      %v289 = vld [vmem:[#allocation2] sm:$0xff]
      %v290 = vld [vmem:[#allocation2 + $0x8] sm:$0xff]
      %v291 = vld [vmem:[#allocation2 + $0x10] sm:$0xff]
      %v292 = vld [vmem:[#allocation2 + $0x18] sm:$0xff]
      %v293 = vld [vmem:[#allocation2 + $0x20] sm:$0xff]
      %v294 = vld [vmem:[#allocation2 + $0x28] sm:$0xff]
      %v295 = vld [vmem:[#allocation2 + $0x30] sm:$0xff]
      %v296 = vld [vmem:[#allocation2 + $0x38] sm:$0xff]
      %v297 = vld [vmem:[%s258] sm:$0xf]
      %v298 = vld [vmem:[%s258 + $0x4] sm:$0xf]
      %v299 = vld [vmem:[%s258 + $0x8] sm:$0xf]
      %v300 = vld [vmem:[%s258 + $0xc] sm:$0xf]
      %v301 = vld [vmem:[%s258 + $0x10] sm:$0xf]
      %v302 = vld [vmem:[%s258 + $0x14] sm:$0xf]
      %v303 = vld [vmem:[%s258 + $0x18] sm:$0xf]
      %v304 = vld [vmem:[%s258 + $0x1c] sm:$0xf]
      %v305 = vld [vmem:[%s258 + $0x20] sm:$0xf]
      %v306 = vld [vmem:[%s258 + $0x24] sm:$0xf]
      %v307 = vld [vmem:[%s258 + $0x28] sm:$0xf]
      %v308 = vld [vmem:[%s258 + $0x2c] sm:$0xf]
      %v309 = vld [vmem:[%s258 + $0x30] sm:$0xf]
      %v310 = vld [vmem:[%s258 + $0x34] sm:$0xf]
      %v311 = vld [vmem:[%s258 + $0x38] sm:$0xf]
      %v312 = vld [vmem:[%s258 + $0x3c] sm:$0xf]
      %v321 = vunpack.c.l.b16 %v281
      %v322 = vunpack.c.l.b16 %v282
      %v323 = vunpack.c.l.b16 %v283
      %v324 = vunpack.c.l.b16 %v284
      %v325 = vunpack.c.l.b16 %v285
      %v326 = vunpack.c.l.b16 %v286
      %v327 = vunpack.c.l.b16 %v287
      %v328 = vunpack.c.l.b16 %v288
      %v329 = vpack.c.b16 %v322, %v321
      %v330 = vpack.c.b16 %v324, %v323
      %v331 = vpack.c.b16 %v326, %v325
      %v332 = vpack.c.b16 %v328, %v327
      %v353 = vunpack.c.l.b16 %v297
      %v354 = vunpack.c.l.b16 %v298
      %v355 = vunpack.c.l.b16 %v299
      %v356 = vunpack.c.l.b16 %v300
      %v357 = vunpack.c.l.b16 %v301
      %v358 = vunpack.c.l.b16 %v302
      %v359 = vunpack.c.l.b16 %v303
      %v360 = vunpack.c.l.b16 %v304
      %v361 = vunpack.c.l.b16 %v305
      %v362 = vunpack.c.l.b16 %v306
      %v363 = vunpack.c.l.b16 %v307
      %v364 = vunpack.c.l.b16 %v308
      %v365 = vunpack.c.l.b16 %v309
      %v366 = vunpack.c.l.b16 %v310
      %v367 = vunpack.c.l.b16 %v311
      %v368 = vunpack.c.l.b16 %v312
      %v369 = vpack.c.b16 %v354, %v353
      %v370 = vpack.c.b16 %v356, %v355
      %v371 = vpack.c.b16 %v358, %v357
      %v372 = vpack.c.b16 %v360, %v359
      %v373 = vpack.c.b16 %v362, %v361
      %v374 = vpack.c.b16 %v364, %v363
      %v375 = vpack.c.b16 %v366, %v365
      %v376 = vpack.c.b16 %v368, %v367
      %385 = vmatprep.subr.bf16.mxu0 0
      %386 = vmatpush1.bf16.msra.mxu0 %v369
      %387 = vmatprep.subr.bf16.mxu0 0
      %388 = vmatpush1.bf16.msra.mxu0 %v370
      %389 = vmatprep.subr.bf16.mxu0 0
      %390 = vmatpush1.bf16.msra.mxu0 %v371
      %391 = vmatprep.subr.bf16.mxu0 0
      %392 = vmatpush1.bf16.msra.mxu0 %v372
      %393 = vmatprep.subr.bf16.mxu0 0
      %394 = vmatpush1.bf16.msra.mxu0 %v373
      %395 = vmatprep.subr.bf16.mxu0 0
      %396 = vmatpush1.bf16.msra.mxu0 %v374
      %397 = vmatprep.subr.bf16.mxu0 0
      %398 = vmatpush1.bf16.msra.mxu0 %v375
      %399 = vmatprep.subr.bf16.mxu0 0
      %400 = vmatpush1.bf16.msra.mxu0 %v376
      %401 = vmatprep.subr.bf16.mxu0 0
      %402 = vmatpush1.bf16.msra.mxu0 0
      %403 = vmatprep.subr.bf16.mxu0 0
      %404 = vmatpush1.bf16.msra.mxu0 0
      %405 = vmatprep.subr.bf16.mxu0 0
      %406 = vmatpush1.bf16.msra.mxu0 0
      %407 = vmatprep.subr.bf16.mxu0 0
      %408 = vmatpush1.bf16.msra.mxu0 0
      %409 = vmatprep.subr.bf16.mxu0 0
      %410 = vmatpush1.bf16.msra.mxu0 0
      %411 = vmatprep.subr.bf16.mxu0 0
      %412 = vmatpush1.bf16.msra.mxu0 0
      %413 = vmatprep.subr.bf16.mxu0 0
      %414 = vmatpush1.bf16.msra.mxu0 0
      %415 = vmatprep.subr.bf16.mxu0 0
      %416 = vmatpush1.bf16.msra.mxu0 0
      %417 = vmatprep.mubr.bf16.mxu0 0
      %418 = vmatmul.mubr.bf16.gmra.mrb[0].mxu0 %v329
      %v419 = vpop.f32.mrb[0].mxu0
      %v420 = vadd.f32 0.0, %v419
      %v421 = vpop.f32.mrb[0].mxu0
      %v422 = vpop.f32.mrb[0].mxu0
      %v423 = vadd.f32 0.0, %v422
      %v424 = vpop.f32.mrb[0].mxu0
      %425 = vmatprep.mubr.bf16.mxu0 0
      %426 = vmatmul.mubr.bf16.gmra.mrb[0].mxu0 %v330
      %v427 = vpop.f32.mrb[0].mxu0
      %v428 = vadd.f32 0.0, %v427
      %v429 = vpop.f32.mrb[0].mxu0
      %v430 = vpop.f32.mrb[0].mxu0
      %v431 = vadd.f32 0.0, %v430
      %v432 = vpop.f32.mrb[0].mxu0
      %433 = vmatprep.mubr.bf16.mxu0 0
      %434 = vmatmul.mubr.bf16.gmra.mrb[0].mxu0 %v331
      %v435 = vpop.f32.mrb[0].mxu0
      %v436 = vadd.f32 0.0, %v435
      %v437 = vpop.f32.mrb[0].mxu0
      %v438 = vpop.f32.mrb[0].mxu0
      %v439 = vadd.f32 0.0, %v438
      %v440 = vpop.f32.mrb[0].mxu0
      %441 = vmatprep.mubr.bf16.mxu0 0
      %442 = vmatmul.mubr.bf16.gmra.mrb[0].mxu0 %v332
      %v443 = vpop.f32.mrb[0].mxu0
      %v444 = vadd.f32 0.0, %v443
      %v445 = vpop.f32.mrb[0].mxu0
      %v446 = vpop.f32.mrb[0].mxu0
      %v447 = vadd.f32 0.0, %v446
      %v448 = vpop.f32.mrb[0].mxu0
      %449 = vdwg.mxu0
      %v450 = vadd.f32 %v289, %v420
      %v451 = vadd.f32 %v290, %v423
      %v452 = vadd.f32 %v291, %v428
      %v453 = vadd.f32 %v292, %v431
      %v454 = vadd.f32 %v293, %v436
      %v455 = vadd.f32 %v294, %v439
      %v456 = vadd.f32 %v295, %v444
      %v457 = vadd.f32 %v296, %v447
      %458 = vst [vmem:[#allocation2] sm:$0xff] %v450
      %459 = vst [vmem:[#allocation2 + $0x8] sm:$0xff] %v451
      %460 = vst [vmem:[#allocation2 + $0x10] sm:$0xff] %v452
      %461 = vst [vmem:[#allocation2 + $0x18] sm:$0xff] %v453
      %462 = vst [vmem:[#allocation2 + $0x20] sm:$0xff] %v454
      %463 = vst [vmem:[#allocation2 + $0x28] sm:$0xff] %v455
      %464 = vst [vmem:[#allocation2 + $0x30] sm:$0xff] %v456
      %465 = vst [vmem:[#allocation2 + $0x38] sm:$0xff] %v457
      %v466 = vld [vmem:[%s250] sm:$0xf]
      %v467 = vld [vmem:[%s250 + $0x4] sm:$0x1]
      %v468 = vld [vmem:[%s250 + $0x8] sm:$0xf]
      %v469 = vld [vmem:[%s250 + $0xc] sm:$0x1]
      %v470 = vld [vmem:[%s250 + $0x10] sm:$0xf]
      %v471 = vld [vmem:[%s250 + $0x14] sm:$0x1]
      %v472 = vld [vmem:[%s250 + $0x18] sm:$0xf]
      %v473 = vld [vmem:[%s250 + $0x1c] sm:$0x1]
      %v474 = vld [vmem:[%s250 + $0x20] sm:$0xf]
      %v475 = vld [vmem:[%s250 + $0x24] sm:$0x1]
      %v476 = vld [vmem:[%s250 + $0x28] sm:$0xf]
      %v477 = vld [vmem:[%s250 + $0x2c] sm:$0x1]
      %v478 = vld [vmem:[%s250 + $0x30] sm:$0xf]
      %v479 = vld [vmem:[%s250 + $0x34] sm:$0x1]
      %v480 = vld [vmem:[%s250 + $0x38] sm:$0xf]
      %v481 = vld [vmem:[%s250 + $0x3c] sm:$0x1]
      %vm482 = vsmask.f32 3328
      %vm483 = vsmask.f32 7440
      %vm484 = vmor %vm482, %vm483
      %v486 = vshrl.u32 %v466, 16
      %v488 = vrot.slane %v486, 4
      %v489 = vshll.u32 %v466, 16
      %v491 = vrot.slane %v489, 5
      %v492 = vor.u32 %v488, %v491
      %v493 = vrot.slane %v492, 4
      %v495 = vshll.u32 %v467, 16
      %v497 = vrot.slane %v495, 5
      %v498 = vsel %vm484, %v493, %v497
      %v500 = vshrl.u32 %v468, 16
      %v502 = vrot.slane %v500, 4
      %v503 = vshll.u32 %v468, 16
      %v505 = vrot.slane %v503, 5
      %v506 = vor.u32 %v502, %v505
      %v507 = vrot.slane %v506, 4
      %v509 = vshll.u32 %v469, 16
      %v511 = vrot.slane %v509, 5
      %v512 = vsel %vm484, %v507, %v511
      %v514 = vshrl.u32 %v470, 16
      %v516 = vrot.slane %v514, 4
      %v517 = vshll.u32 %v470, 16
      %v519 = vrot.slane %v517, 5
      %v520 = vor.u32 %v516, %v519
      %v521 = vrot.slane %v520, 4
      %v523 = vshll.u32 %v471, 16
      %v525 = vrot.slane %v523, 5
      %v526 = vsel %vm484, %v521, %v525
      %v528 = vshrl.u32 %v472, 16
      %v530 = vrot.slane %v528, 4
      %v531 = vshll.u32 %v472, 16
      %v533 = vrot.slane %v531, 5
      %v534 = vor.u32 %v530, %v533
      %v535 = vrot.slane %v534, 4
      %v537 = vshll.u32 %v473, 16
      %v539 = vrot.slane %v537, 5
      %v540 = vsel %vm484, %v535, %v539
      %v542 = vshrl.u32 %v474, 16
      %v544 = vrot.slane %v542, 4
      %v545 = vshll.u32 %v474, 16
      %v547 = vrot.slane %v545, 5
      %v548 = vor.u32 %v544, %v547
      %v549 = vrot.slane %v548, 4
      %v551 = vshll.u32 %v475, 16
      %v553 = vrot.slane %v551, 5
      %v554 = vsel %vm484, %v549, %v553
      %v556 = vshrl.u32 %v476, 16
      %v558 = vrot.slane %v556, 4
      %v559 = vshll.u32 %v476, 16
      %v561 = vrot.slane %v559, 5
      %v562 = vor.u32 %v558, %v561
      %v563 = vrot.slane %v562, 4
      %v565 = vshll.u32 %v477, 16
      %v567 = vrot.slane %v565, 5
      %v568 = vsel %vm484, %v563, %v567
      %v570 = vshrl.u32 %v478, 16
      %v572 = vrot.slane %v570, 4
      %v573 = vshll.u32 %v478, 16
      %v575 = vrot.slane %v573, 5
      %v576 = vor.u32 %v572, %v575
      %v577 = vrot.slane %v576, 4
      %v579 = vshll.u32 %v479, 16
      %v581 = vrot.slane %v579, 5
      %v582 = vsel %vm484, %v577, %v581
      %v584 = vshrl.u32 %v480, 16
      %v586 = vrot.slane %v584, 4
      %v587 = vshll.u32 %v480, 16
      %v589 = vrot.slane %v587, 5
      %v590 = vor.u32 %v586, %v589
      %v591 = vrot.slane %v590, 4
      %v593 = vshll.u32 %v481, 16
      %v595 = vrot.slane %v593, 5
      %v596 = vsel %vm484, %v591, %v595
      %v597 = vld [vmem:[#allocation2] sm:$0xff]
      %v598 = vld [vmem:[#allocation2 + $0x8] sm:$0xff]
      %v599 = vld [vmem:[#allocation2 + $0x10] sm:$0xff]
      %v600 = vld [vmem:[#allocation2 + $0x18] sm:$0xff]
      %v601 = vld [vmem:[#allocation2 + $0x20] sm:$0xff]
      %v602 = vld [vmem:[#allocation2 + $0x28] sm:$0xff]
      %v603 = vld [vmem:[#allocation2 + $0x30] sm:$0xff]
      %v604 = vld [vmem:[#allocation2 + $0x38] sm:$0xff]
      %s605 = scalar_lea.vmem %s258, 64
      %v606 = vld [vmem:[%s605] sm:$0xf]
      %v607 = vld [vmem:[%s605 + $0x4] sm:$0xf]
      %v608 = vld [vmem:[%s605 + $0x8] sm:$0xf]
      %v609 = vld [vmem:[%s605 + $0xc] sm:$0xf]
      %v610 = vld [vmem:[%s605 + $0x10] sm:$0xf]
      %v611 = vld [vmem:[%s605 + $0x14] sm:$0xf]
      %v612 = vld [vmem:[%s605 + $0x18] sm:$0xf]
      %v613 = vld [vmem:[%s605 + $0x1c] sm:$0xf]
      %v614 = vld [vmem:[%s605 + $0x20] sm:$0xf]
      %v615 = vld [vmem:[%s605 + $0x24] sm:$0xf]
      %v616 = vld [vmem:[%s605 + $0x28] sm:$0xf]
      %v617 = vld [vmem:[%s605 + $0x2c] sm:$0xf]
      %v618 = vld [vmem:[%s605 + $0x30] sm:$0xf]
      %v619 = vld [vmem:[%s605 + $0x34] sm:$0xf]
      %v620 = vld [vmem:[%s605 + $0x38] sm:$0xf]
      %v621 = vld [vmem:[%s605 + $0x3c] sm:$0xf]
      %v622 = vunpack.c.l.b16 %v498
      %v623 = vunpack.c.l.b16 %v512
      %v624 = vunpack.c.l.b16 %v526
      %v625 = vunpack.c.l.b16 %v540
      %v626 = vunpack.c.l.b16 %v554
      %v627 = vunpack.c.l.b16 %v568
      %v628 = vunpack.c.l.b16 %v582
      %v629 = vunpack.c.l.b16 %v596
      %v630 = vpack.c.b16 %v623, %v622
      %v631 = vpack.c.b16 %v625, %v624
      %v632 = vpack.c.b16 %v627, %v626
      %v633 = vpack.c.b16 %v629, %v628
      %v654 = vunpack.c.l.b16 %v606
      %v655 = vunpack.c.l.b16 %v607
      %v656 = vunpack.c.l.b16 %v608
      %v657 = vunpack.c.l.b16 %v609
      %v658 = vunpack.c.l.b16 %v610
      %v659 = vunpack.c.l.b16 %v611
      %v660 = vunpack.c.l.b16 %v612
      %v661 = vunpack.c.l.b16 %v613
      %v662 = vunpack.c.l.b16 %v614
      %v663 = vunpack.c.l.b16 %v615
      %v664 = vunpack.c.l.b16 %v616
      %v665 = vunpack.c.l.b16 %v617
      %v666 = vunpack.c.l.b16 %v618
      %v667 = vunpack.c.l.b16 %v619
      %v668 = vunpack.c.l.b16 %v620
      %v669 = vunpack.c.l.b16 %v621
      %v670 = vpack.c.b16 %v655, %v654
      %v671 = vpack.c.b16 %v657, %v656
      %v672 = vpack.c.b16 %v659, %v658
      %v673 = vpack.c.b16 %v661, %v660
      %v674 = vpack.c.b16 %v663, %v662
      %v675 = vpack.c.b16 %v665, %v664
      %v676 = vpack.c.b16 %v667, %v666
      %v677 = vpack.c.b16 %v669, %v668
      %686 = vmatprep.subr.bf16.mxu0 0
      %687 = vmatpush1.bf16.msra.mxu0 %v670
      %688 = vmatprep.subr.bf16.mxu0 0
      %689 = vmatpush1.bf16.msra.mxu0 %v671
      %690 = vmatprep.subr.bf16.mxu0 0
      %691 = vmatpush1.bf16.msra.mxu0 %v672
      %692 = vmatprep.subr.bf16.mxu0 0
      %693 = vmatpush1.bf16.msra.mxu0 %v673
      %694 = vmatprep.subr.bf16.mxu0 0
      %695 = vmatpush1.bf16.msra.mxu0 %v674
      %696 = vmatprep.subr.bf16.mxu0 0
      %697 = vmatpush1.bf16.msra.mxu0 %v675
      %698 = vmatprep.subr.bf16.mxu0 0
      %699 = vmatpush1.bf16.msra.mxu0 %v676
      %700 = vmatprep.subr.bf16.mxu0 0
      %701 = vmatpush1.bf16.msra.mxu0 %v677
      %702 = vmatprep.subr.bf16.mxu0 0
      %703 = vmatpush1.bf16.msra.mxu0 0
      %704 = vmatprep.subr.bf16.mxu0 0
      %705 = vmatpush1.bf16.msra.mxu0 0
      %706 = vmatprep.subr.bf16.mxu0 0
      %707 = vmatpush1.bf16.msra.mxu0 0
      %708 = vmatprep.subr.bf16.mxu0 0
      %709 = vmatpush1.bf16.msra.mxu0 0
      %710 = vmatprep.subr.bf16.mxu0 0
      %711 = vmatpush1.bf16.msra.mxu0 0
      %712 = vmatprep.subr.bf16.mxu0 0
      %713 = vmatpush1.bf16.msra.mxu0 0
      %714 = vmatprep.subr.bf16.mxu0 0
      %715 = vmatpush1.bf16.msra.mxu0 0
      %716 = vmatprep.subr.bf16.mxu0 0
      %717 = vmatpush1.bf16.msra.mxu0 0
      %718 = vmatprep.mubr.bf16.mxu0 0
      %719 = vmatmul.mubr.bf16.gmra.mrb[0].mxu0 %v630
      %v720 = vpop.f32.mrb[0].mxu0
      %v721 = vadd.f32 0.0, %v720
      %v722 = vpop.f32.mrb[0].mxu0
      %v723 = vpop.f32.mrb[0].mxu0
      %v724 = vadd.f32 0.0, %v723
      %v725 = vpop.f32.mrb[0].mxu0
      %726 = vmatprep.mubr.bf16.mxu0 0
      %727 = vmatmul.mubr.bf16.gmra.mrb[0].mxu0 %v631
      %v728 = vpop.f32.mrb[0].mxu0
      %v729 = vadd.f32 0.0, %v728
      %v730 = vpop.f32.mrb[0].mxu0
      %v731 = vpop.f32.mrb[0].mxu0
      %v732 = vadd.f32 0.0, %v731
      %v733 = vpop.f32.mrb[0].mxu0
      %734 = vmatprep.mubr.bf16.mxu0 0
      %735 = vmatmul.mubr.bf16.gmra.mrb[0].mxu0 %v632
      %v736 = vpop.f32.mrb[0].mxu0
      %v737 = vadd.f32 0.0, %v736
      %v738 = vpop.f32.mrb[0].mxu0
      %v739 = vpop.f32.mrb[0].mxu0
      %v740 = vadd.f32 0.0, %v739
      %v741 = vpop.f32.mrb[0].mxu0
      %742 = vmatprep.mubr.bf16.mxu0 0
      %743 = vmatmul.mubr.bf16.gmra.mrb[0].mxu0 %v633
      %v744 = vpop.f32.mrb[0].mxu0
      %v745 = vadd.f32 0.0, %v744
      %v746 = vpop.f32.mrb[0].mxu0
      %v747 = vpop.f32.mrb[0].mxu0
      %v748 = vadd.f32 0.0, %v747
      %v749 = vpop.f32.mrb[0].mxu0
      %750 = vdwg.mxu0
      %v751 = vadd.f32 %v597, %v721
      %v752 = vadd.f32 %v598, %v724
      %v753 = vadd.f32 %v599, %v729
      %v754 = vadd.f32 %v600, %v732
      %v755 = vadd.f32 %v601, %v737
      %v756 = vadd.f32 %v602, %v740
      %v757 = vadd.f32 %v603, %v745
      %v758 = vadd.f32 %v604, %v748
      %759 = vst [vmem:[#allocation2] sm:$0xff] %v751
      %760 = vst [vmem:[#allocation2 + $0x8] sm:$0xff] %v752
      %761 = vst [vmem:[#allocation2 + $0x10] sm:$0xff] %v753
      %762 = vst [vmem:[#allocation2 + $0x18] sm:$0xff] %v754
      %763 = vst [vmem:[#allocation2 + $0x20] sm:$0xff] %v755
      %764 = vst [vmem:[#allocation2 + $0x28] sm:$0xff] %v756
      %765 = vst [vmem:[#allocation2 + $0x30] sm:$0xff] %v757
      %766 = vst [vmem:[#allocation2 + $0x38] sm:$0xff] %v758
      %v767 = vld [vmem:[%s250] sm:$0xe]
      %v768 = vld [vmem:[%s250 + $0x4] sm:$0x1]
      %v769 = vld [vmem:[%s250 + $0x8] sm:$0xe]
      %v770 = vld [vmem:[%s250 + $0xc] sm:$0x1]
      %v771 = vld [vmem:[%s250 + $0x10] sm:$0xe]
      %v772 = vld [vmem:[%s250 + $0x14] sm:$0x1]
      %v773 = vld [vmem:[%s250 + $0x18] sm:$0xe]
      %v774 = vld [vmem:[%s250 + $0x1c] sm:$0x1]
      %v775 = vld [vmem:[%s250 + $0x20] sm:$0xe]
      %v776 = vld [vmem:[%s250 + $0x24] sm:$0x1]
      %v777 = vld [vmem:[%s250 + $0x28] sm:$0xe]
      %v778 = vld [vmem:[%s250 + $0x2c] sm:$0x1]
      %v779 = vld [vmem:[%s250 + $0x30] sm:$0xe]
      %v780 = vld [vmem:[%s250 + $0x34] sm:$0x1]
      %v781 = vld [vmem:[%s250 + $0x38] sm:$0xe]
      %v782 = vld [vmem:[%s250 + $0x3c] sm:$0x1]
      %vm799 = vcmask 1042432
      %vm800 = vcmask 1046532
      %vm801 = vmor %vm799, %vm800
      %v802 = vrot.slane %v767, 5
      %v803 = vrot.slane %v802, 4
      %v804 = vrot.slane %v768, 5
      %v805 = vsel %vm801, %v803, %v804
      %v806 = vrot.slane %v769, 5
      %v807 = vrot.slane %v806, 4
      %v808 = vrot.slane %v770, 5
      %v809 = vsel %vm801, %v807, %v808
      %v810 = vrot.slane %v771, 5
      %v811 = vrot.slane %v810, 4
      %v812 = vrot.slane %v772, 5
      %v813 = vsel %vm801, %v811, %v812
      %v814 = vrot.slane %v773, 5
      %v815 = vrot.slane %v814, 4
      %v816 = vrot.slane %v774, 5
      %v817 = vsel %vm801, %v815, %v816
      %v818 = vrot.slane %v775, 5
      %v819 = vrot.slane %v818, 4
      %v820 = vrot.slane %v776, 5
      %v821 = vsel %vm801, %v819, %v820
      %v822 = vrot.slane %v777, 5
      %v823 = vrot.slane %v822, 4
      %v824 = vrot.slane %v778, 5
      %v825 = vsel %vm801, %v823, %v824
      %v826 = vrot.slane %v779, 5
      %v827 = vrot.slane %v826, 4
      %v828 = vrot.slane %v780, 5
      %v829 = vsel %vm801, %v827, %v828
      %v830 = vrot.slane %v781, 5
      %v831 = vrot.slane %v830, 4
      %v832 = vrot.slane %v782, 5
      %v833 = vsel %vm801, %v831, %v832
      %v834 = vld [vmem:[#allocation2] sm:$0xff]
      %v835 = vld [vmem:[#allocation2 + $0x8] sm:$0xff]
      %v836 = vld [vmem:[#allocation2 + $0x10] sm:$0xff]
      %v837 = vld [vmem:[#allocation2 + $0x18] sm:$0xff]
      %v838 = vld [vmem:[#allocation2 + $0x20] sm:$0xff]
      %v839 = vld [vmem:[#allocation2 + $0x28] sm:$0xff]
      %v840 = vld [vmem:[#allocation2 + $0x30] sm:$0xff]
      %v841 = vld [vmem:[#allocation2 + $0x38] sm:$0xff]
      %s842 = scalar_lea.vmem %s258, 128
      %v843 = vld [vmem:[%s842] sm:$0xf]
      %v844 = vld [vmem:[%s842 + $0x4] sm:$0xf]
      %v845 = vld [vmem:[%s842 + $0x8] sm:$0xf]
      %v846 = vld [vmem:[%s842 + $0xc] sm:$0xf]
      %v847 = vld [vmem:[%s842 + $0x10] sm:$0xf]
      %v848 = vld [vmem:[%s842 + $0x14] sm:$0xf]
      %v849 = vld [vmem:[%s842 + $0x18] sm:$0xf]
      %v850 = vld [vmem:[%s842 + $0x1c] sm:$0xf]
      %v851 = vld [vmem:[%s842 + $0x20] sm:$0xf]
      %v852 = vld [vmem:[%s842 + $0x24] sm:$0xf]
      %v853 = vld [vmem:[%s842 + $0x28] sm:$0xf]
      %v854 = vld [vmem:[%s842 + $0x2c] sm:$0xf]
      %v855 = vld [vmem:[%s842 + $0x30] sm:$0xf]
      %v856 = vld [vmem:[%s842 + $0x34] sm:$0xf]
      %v857 = vld [vmem:[%s842 + $0x38] sm:$0xf]
      %v858 = vld [vmem:[%s842 + $0x3c] sm:$0xf]
      %v859 = vunpack.c.l.b16 %v805
      %v860 = vunpack.c.l.b16 %v809
      %v861 = vunpack.c.l.b16 %v813
      %v862 = vunpack.c.l.b16 %v817
      %v863 = vunpack.c.l.b16 %v821
      %v864 = vunpack.c.l.b16 %v825
      %v865 = vunpack.c.l.b16 %v829
      %v866 = vunpack.c.l.b16 %v833
      %v867 = vpack.c.b16 %v860, %v859
      %v868 = vpack.c.b16 %v862, %v861
      %v869 = vpack.c.b16 %v864, %v863
      %v870 = vpack.c.b16 %v866, %v865
      %v891 = vunpack.c.l.b16 %v843
      %v892 = vunpack.c.l.b16 %v844
      %v893 = vunpack.c.l.b16 %v845
      %v894 = vunpack.c.l.b16 %v846
      %v895 = vunpack.c.l.b16 %v847
      %v896 = vunpack.c.l.b16 %v848
      %v897 = vunpack.c.l.b16 %v849
      %v898 = vunpack.c.l.b16 %v850
      %v899 = vunpack.c.l.b16 %v851
      %v900 = vunpack.c.l.b16 %v852
      %v901 = vunpack.c.l.b16 %v853
      %v902 = vunpack.c.l.b16 %v854
      %v903 = vunpack.c.l.b16 %v855
      %v904 = vunpack.c.l.b16 %v856
      %v905 = vunpack.c.l.b16 %v857
      %v906 = vunpack.c.l.b16 %v858
      %v907 = vpack.c.b16 %v892, %v891
      %v908 = vpack.c.b16 %v894, %v893
      %v909 = vpack.c.b16 %v896, %v895
      %v910 = vpack.c.b16 %v898, %v897
      %v911 = vpack.c.b16 %v900, %v899
      %v912 = vpack.c.b16 %v902, %v901
      %v913 = vpack.c.b16 %v904, %v903
      %v914 = vpack.c.b16 %v906, %v905
      %923 = vmatprep.subr.bf16.mxu0 0
      %924 = vmatpush1.bf16.msra.mxu0 %v907
      %925 = vmatprep.subr.bf16.mxu0 0
      %926 = vmatpush1.bf16.msra.mxu0 %v908
      %927 = vmatprep.subr.bf16.mxu0 0
      %928 = vmatpush1.bf16.msra.mxu0 %v909
      %929 = vmatprep.subr.bf16.mxu0 0
      %930 = vmatpush1.bf16.msra.mxu0 %v910
      %931 = vmatprep.subr.bf16.mxu0 0
      %932 = vmatpush1.bf16.msra.mxu0 %v911
      %933 = vmatprep.subr.bf16.mxu0 0
      %934 = vmatpush1.bf16.msra.mxu0 %v912
      %935 = vmatprep.subr.bf16.mxu0 0
      %936 = vmatpush1.bf16.msra.mxu0 %v913
      %937 = vmatprep.subr.bf16.mxu0 0
      %938 = vmatpush1.bf16.msra.mxu0 %v914
      %939 = vmatprep.subr.bf16.mxu0 0
      %940 = vmatpush1.bf16.msra.mxu0 0
      %941 = vmatprep.subr.bf16.mxu0 0
      %942 = vmatpush1.bf16.msra.mxu0 0
      %943 = vmatprep.subr.bf16.mxu0 0
      %944 = vmatpush1.bf16.msra.mxu0 0
      %945 = vmatprep.subr.bf16.mxu0 0
      %946 = vmatpush1.bf16.msra.mxu0 0
      %947 = vmatprep.subr.bf16.mxu0 0
      %948 = vmatpush1.bf16.msra.mxu0 0
      %949 = vmatprep.subr.bf16.mxu0 0
      %950 = vmatpush1.bf16.msra.mxu0 0
      %951 = vmatprep.subr.bf16.mxu0 0
      %952 = vmatpush1.bf16.msra.mxu0 0
      %953 = vmatprep.subr.bf16.mxu0 0
      %954 = vmatpush1.bf16.msra.mxu0 0
      %955 = vmatprep.mubr.bf16.mxu0 0
      %956 = vmatmul.mubr.bf16.gmra.mrb[0].mxu0 %v867
      %v957 = vpop.f32.mrb[0].mxu0
      %v958 = vadd.f32 0.0, %v957
      %v959 = vpop.f32.mrb[0].mxu0
      %v960 = vpop.f32.mrb[0].mxu0
      %v961 = vadd.f32 0.0, %v960
      %v962 = vpop.f32.mrb[0].mxu0
      %963 = vmatprep.mubr.bf16.mxu0 0
      %964 = vmatmul.mubr.bf16.gmra.mrb[0].mxu0 %v868
      %v965 = vpop.f32.mrb[0].mxu0
      %v966 = vadd.f32 0.0, %v965
      %v967 = vpop.f32.mrb[0].mxu0
      %v968 = vpop.f32.mrb[0].mxu0
      %v969 = vadd.f32 0.0, %v968
      %v970 = vpop.f32.mrb[0].mxu0
      %971 = vmatprep.mubr.bf16.mxu0 0
      %972 = vmatmul.mubr.bf16.gmra.mrb[0].mxu0 %v869
      %v973 = vpop.f32.mrb[0].mxu0
      %v974 = vadd.f32 0.0, %v973
      %v975 = vpop.f32.mrb[0].mxu0
      %v976 = vpop.f32.mrb[0].mxu0
      %v977 = vadd.f32 0.0, %v976
      %v978 = vpop.f32.mrb[0].mxu0
      %979 = vmatprep.mubr.bf16.mxu0 0
      %980 = vmatmul.mubr.bf16.gmra.mrb[0].mxu0 %v870
      %v981 = vpop.f32.mrb[0].mxu0
      %v982 = vadd.f32 0.0, %v981
      %v983 = vpop.f32.mrb[0].mxu0
      %v984 = vpop.f32.mrb[0].mxu0
      %v985 = vadd.f32 0.0, %v984
      %v986 = vpop.f32.mrb[0].mxu0
      %987 = vdwg.mxu0
      %v988 = vadd.f32 %v834, %v958
      %v989 = vadd.f32 %v835, %v961
      %v990 = vadd.f32 %v836, %v966
      %v991 = vadd.f32 %v837, %v969
      %v992 = vadd.f32 %v838, %v974
      %v993 = vadd.f32 %v839, %v977
      %v994 = vadd.f32 %v840, %v982
      %v995 = vadd.f32 %v841, %v985
      %996 = vst [vmem:[#allocation2] sm:$0xff] %v988
      %997 = vst [vmem:[#allocation2 + $0x8] sm:$0xff] %v989
      %998 = vst [vmem:[#allocation2 + $0x10] sm:$0xff] %v990
      %999 = vst [vmem:[#allocation2 + $0x18] sm:$0xff] %v991
      %1000 = vst [vmem:[#allocation2 + $0x20] sm:$0xff] %v992
      %1001 = vst [vmem:[#allocation2 + $0x28] sm:$0xff] %v993
      %1002 = vst [vmem:[#allocation2 + $0x30] sm:$0xff] %v994
      %1003 = vst [vmem:[#allocation2 + $0x38] sm:$0xff] %v995
      %s1004 = scalar_lea.vmem %s250, 8
      %v1005 = vld [vmem:[%s1004] sm:$0xf]
      %v1006 = vld [vmem:[%s1004 + $0x8] sm:$0xf]
      %v1007 = vld [vmem:[%s1004 + $0x10] sm:$0xf]
      %v1008 = vld [vmem:[%s1004 + $0x18] sm:$0xf]
      %v1009 = vld [vmem:[%s1004 + $0x20] sm:$0xf]
      %v1010 = vld [vmem:[%s1004 + $0x28] sm:$0xf]
      %v1011 = vld [vmem:[%s1004 + $0x30] sm:$0xf]
      %v1012 = vld [vmem:[%s1004 + $0x38] sm:$0xf]
      %v1013 = vld [vmem:[#allocation2] sm:$0xff]
      %v1014 = vld [vmem:[#allocation2 + $0x8] sm:$0xff]
      %v1015 = vld [vmem:[#allocation2 + $0x10] sm:$0xff]
      %v1016 = vld [vmem:[#allocation2 + $0x18] sm:$0xff]
      %v1017 = vld [vmem:[#allocation2 + $0x20] sm:$0xff]
      %v1018 = vld [vmem:[#allocation2 + $0x28] sm:$0xff]
      %v1019 = vld [vmem:[#allocation2 + $0x30] sm:$0xff]
      %v1020 = vld [vmem:[#allocation2 + $0x38] sm:$0xff]
      %s1021 = scalar_lea.vmem %s258, 192
      %v1022 = vld [vmem:[%s1021] sm:$0xf]
      %v1023 = vld [vmem:[%s1021 + $0x4] sm:$0xf]
      %v1024 = vld [vmem:[%s1021 + $0x8] sm:$0xf]
      %v1025 = vld [vmem:[%s1021 + $0xc] sm:$0xf]
      %v1026 = vld [vmem:[%s1021 + $0x10] sm:$0xf]
      %v1027 = vld [vmem:[%s1021 + $0x14] sm:$0xf]
      %v1028 = vld [vmem:[%s1021 + $0x18] sm:$0xf]
      %v1029 = vld [vmem:[%s1021 + $0x1c] sm:$0xf]
      %v1030 = vld [vmem:[%s1021 + $0x20] sm:$0xf]
      %v1031 = vld [vmem:[%s1021 + $0x24] sm:$0xf]
      %v1032 = vld [vmem:[%s1021 + $0x28] sm:$0xf]
      %v1033 = vld [vmem:[%s1021 + $0x2c] sm:$0xf]
      %v1034 = vld [vmem:[%s1021 + $0x30] sm:$0xf]
      %v1035 = vld [vmem:[%s1021 + $0x34] sm:$0xf]
      %v1036 = vld [vmem:[%s1021 + $0x38] sm:$0xf]
      %v1037 = vld [vmem:[%s1021 + $0x3c] sm:$0xf]
      %v1046 = vunpack.c.l.b16 %v1005
      %v1047 = vunpack.c.l.b16 %v1006
      %v1048 = vunpack.c.l.b16 %v1007
      %v1049 = vunpack.c.l.b16 %v1008
      %v1050 = vunpack.c.l.b16 %v1009
      %v1051 = vunpack.c.l.b16 %v1010
      %v1052 = vunpack.c.l.b16 %v1011
      %v1053 = vunpack.c.l.b16 %v1012
      %v1054 = vpack.c.b16 %v1047, %v1046
      %v1055 = vpack.c.b16 %v1049, %v1048
      %v1056 = vpack.c.b16 %v1051, %v1050
      %v1057 = vpack.c.b16 %v1053, %v1052
      %v1078 = vunpack.c.l.b16 %v1022
      %v1079 = vunpack.c.l.b16 %v1023
      %v1080 = vunpack.c.l.b16 %v1024
      %v1081 = vunpack.c.l.b16 %v1025
      %v1082 = vunpack.c.l.b16 %v1026
      %v1083 = vunpack.c.l.b16 %v1027
      %v1084 = vunpack.c.l.b16 %v1028
      %v1085 = vunpack.c.l.b16 %v1029
      %v1086 = vunpack.c.l.b16 %v1030
      %v1087 = vunpack.c.l.b16 %v1031
      %v1088 = vunpack.c.l.b16 %v1032
      %v1089 = vunpack.c.l.b16 %v1033
      %v1090 = vunpack.c.l.b16 %v1034
      %v1091 = vunpack.c.l.b16 %v1035
      %v1092 = vunpack.c.l.b16 %v1036
      %v1093 = vunpack.c.l.b16 %v1037
      %v1094 = vpack.c.b16 %v1079, %v1078
      %v1095 = vpack.c.b16 %v1081, %v1080
      %v1096 = vpack.c.b16 %v1083, %v1082
      %v1097 = vpack.c.b16 %v1085, %v1084
      %v1098 = vpack.c.b16 %v1087, %v1086
      %v1099 = vpack.c.b16 %v1089, %v1088
      %v1100 = vpack.c.b16 %v1091, %v1090
      %v1101 = vpack.c.b16 %v1093, %v1092
      %1110 = vmatprep.subr.bf16.mxu0 0
      %1111 = vmatpush1.bf16.msra.mxu0 %v1094
      %1112 = vmatprep.subr.bf16.mxu0 0
      %1113 = vmatpush1.bf16.msra.mxu0 %v1095
      %1114 = vmatprep.subr.bf16.mxu0 0
      %1115 = vmatpush1.bf16.msra.mxu0 %v1096
      %1116 = vmatprep.subr.bf16.mxu0 0
      %1117 = vmatpush1.bf16.msra.mxu0 %v1097
      %1118 = vmatprep.subr.bf16.mxu0 0
      %1119 = vmatpush1.bf16.msra.mxu0 %v1098
      %1120 = vmatprep.subr.bf16.mxu0 0
      %1121 = vmatpush1.bf16.msra.mxu0 %v1099
      %1122 = vmatprep.subr.bf16.mxu0 0
      %1123 = vmatpush1.bf16.msra.mxu0 %v1100
      %1124 = vmatprep.subr.bf16.mxu0 0
      %1125 = vmatpush1.bf16.msra.mxu0 %v1101
      %1126 = vmatprep.subr.bf16.mxu0 0
      %1127 = vmatpush1.bf16.msra.mxu0 0
      %1128 = vmatprep.subr.bf16.mxu0 0
      %1129 = vmatpush1.bf16.msra.mxu0 0
      %1130 = vmatprep.subr.bf16.mxu0 0
      %1131 = vmatpush1.bf16.msra.mxu0 0
      %1132 = vmatprep.subr.bf16.mxu0 0
      %1133 = vmatpush1.bf16.msra.mxu0 0
      %1134 = vmatprep.subr.bf16.mxu0 0
      %1135 = vmatpush1.bf16.msra.mxu0 0
      %1136 = vmatprep.subr.bf16.mxu0 0
      %1137 = vmatpush1.bf16.msra.mxu0 0
      %1138 = vmatprep.subr.bf16.mxu0 0
      %1139 = vmatpush1.bf16.msra.mxu0 0
      %1140 = vmatprep.subr.bf16.mxu0 0
      %1141 = vmatpush1.bf16.msra.mxu0 0
      %1142 = vmatprep.mubr.bf16.mxu0 0
      %1143 = vmatmul.mubr.bf16.gmra.mrb[0].mxu0 %v1054
      %v1144 = vpop.f32.mrb[0].mxu0
      %v1145 = vadd.f32 0.0, %v1144
      %v1146 = vpop.f32.mrb[0].mxu0
      %v1147 = vpop.f32.mrb[0].mxu0
      %v1148 = vadd.f32 0.0, %v1147
      %v1149 = vpop.f32.mrb[0].mxu0
      %1150 = vmatprep.mubr.bf16.mxu0 0
      %1151 = vmatmul.mubr.bf16.gmra.mrb[0].mxu0 %v1055
      %v1152 = vpop.f32.mrb[0].mxu0
      %v1153 = vadd.f32 0.0, %v1152
      %v1154 = vpop.f32.mrb[0].mxu0
      %v1155 = vpop.f32.mrb[0].mxu0
      %v1156 = vadd.f32 0.0, %v1155
      %v1157 = vpop.f32.mrb[0].mxu0
      %1158 = vmatprep.mubr.bf16.mxu0 0
      %1159 = vmatmul.mubr.bf16.gmra.mrb[0].mxu0 %v1056
      %v1160 = vpop.f32.mrb[0].mxu0
      %v1161 = vadd.f32 0.0, %v1160
      %v1162 = vpop.f32.mrb[0].mxu0
      %v1163 = vpop.f32.mrb[0].mxu0
      %v1164 = vadd.f32 0.0, %v1163
      %v1165 = vpop.f32.mrb[0].mxu0
      %1166 = vmatprep.mubr.bf16.mxu0 0
      %1167 = vmatmul.mubr.bf16.gmra.mrb[0].mxu0 %v1057
      %v1168 = vpop.f32.mrb[0].mxu0
      %v1169 = vadd.f32 0.0, %v1168
      %v1170 = vpop.f32.mrb[0].mxu0
      %v1171 = vpop.f32.mrb[0].mxu0
      %v1172 = vadd.f32 0.0, %v1171
      %v1173 = vpop.f32.mrb[0].mxu0
      %1174 = vdwg.mxu0
      %v1175 = vadd.f32 %v1013, %v1145
      %v1176 = vadd.f32 %v1014, %v1148
      %v1177 = vadd.f32 %v1015, %v1153
      %v1178 = vadd.f32 %v1016, %v1156
      %v1179 = vadd.f32 %v1017, %v1161
      %v1180 = vadd.f32 %v1018, %v1164
      %v1181 = vadd.f32 %v1019, %v1169
      %v1182 = vadd.f32 %v1020, %v1172
      %1183 = vst [vmem:[#allocation2] sm:$0xff] %v1175
      %1184 = vst [vmem:[#allocation2 + $0x8] sm:$0xff] %v1176
      %1185 = vst [vmem:[#allocation2 + $0x10] sm:$0xff] %v1177
      %1186 = vst [vmem:[#allocation2 + $0x18] sm:$0xff] %v1178
      %1187 = vst [vmem:[#allocation2 + $0x20] sm:$0xff] %v1179
      %1188 = vst [vmem:[#allocation2 + $0x28] sm:$0xff] %v1180
      %1189 = vst [vmem:[#allocation2 + $0x30] sm:$0xff] %v1181
      %1190 = vst [vmem:[#allocation2 + $0x38] sm:$0xff] %v1182
      %v1191 = vld [vmem:[%s1004] sm:$0xf]
      %v1192 = vld [vmem:[%s1004 + $0x4] sm:$0x1]
      %v1193 = vld [vmem:[%s1004 + $0x8] sm:$0xf]
      %v1194 = vld [vmem:[%s1004 + $0xc] sm:$0x1]
      %v1195 = vld [vmem:[%s1004 + $0x10] sm:$0xf]
      %v1196 = vld [vmem:[%s1004 + $0x14] sm:$0x1]
      %v1197 = vld [vmem:[%s1004 + $0x18] sm:$0xf]
      %v1198 = vld [vmem:[%s1004 + $0x1c] sm:$0x1]
      %v1199 = vld [vmem:[%s1004 + $0x20] sm:$0xf]
      %v1200 = vld [vmem:[%s1004 + $0x24] sm:$0x1]
      %v1201 = vld [vmem:[%s1004 + $0x28] sm:$0xf]
      %v1202 = vld [vmem:[%s1004 + $0x2c] sm:$0x1]
      %v1203 = vld [vmem:[%s1004 + $0x30] sm:$0xf]
      %v1204 = vld [vmem:[%s1004 + $0x34] sm:$0x1]
      %v1205 = vld [vmem:[%s1004 + $0x38] sm:$0xf]
      %v1206 = vld [vmem:[%s1004 + $0x3c] sm:$0x1]
      %v1208 = vshrl.u32 %v1191, 16
      %v1210 = vrot.slane %v1208, 4
      %v1211 = vshll.u32 %v1191, 16
      %v1213 = vrot.slane %v1211, 5
      %v1214 = vor.u32 %v1210, %v1213
      %v1215 = vrot.slane %v1214, 4
      %v1217 = vshll.u32 %v1192, 16
      %v1219 = vrot.slane %v1217, 5
      %v1220 = vsel %vm484, %v1215, %v1219
      %v1222 = vshrl.u32 %v1193, 16
      %v1224 = vrot.slane %v1222, 4
      %v1225 = vshll.u32 %v1193, 16
      %v1227 = vrot.slane %v1225, 5
      %v1228 = vor.u32 %v1224, %v1227
      %v1229 = vrot.slane %v1228, 4
      %v1231 = vshll.u32 %v1194, 16
      %v1233 = vrot.slane %v1231, 5
      %v1234 = vsel %vm484, %v1229, %v1233
      %v1236 = vshrl.u32 %v1195, 16
      %v1238 = vrot.slane %v1236, 4
      %v1239 = vshll.u32 %v1195, 16
      %v1241 = vrot.slane %v1239, 5
      %v1242 = vor.u32 %v1238, %v1241
      %v1243 = vrot.slane %v1242, 4
      %v1245 = vshll.u32 %v1196, 16
      %v1247 = vrot.slane %v1245, 5
      %v1248 = vsel %vm484, %v1243, %v1247
      %v1250 = vshrl.u32 %v1197, 16
      %v1252 = vrot.slane %v1250, 4
      %v1253 = vshll.u32 %v1197, 16
      %v1255 = vrot.slane %v1253, 5
      %v1256 = vor.u32 %v1252, %v1255
      %v1257 = vrot.slane %v1256, 4
      %v1259 = vshll.u32 %v1198, 16
      %v1261 = vrot.slane %v1259, 5
      %v1262 = vsel %vm484, %v1257, %v1261
      %v1264 = vshrl.u32 %v1199, 16
      %v1266 = vrot.slane %v1264, 4
      %v1267 = vshll.u32 %v1199, 16
      %v1269 = vrot.slane %v1267, 5
      %v1270 = vor.u32 %v1266, %v1269
      %v1271 = vrot.slane %v1270, 4
      %v1273 = vshll.u32 %v1200, 16
      %v1275 = vrot.slane %v1273, 5
      %v1276 = vsel %vm484, %v1271, %v1275
      %v1278 = vshrl.u32 %v1201, 16
      %v1280 = vrot.slane %v1278, 4
      %v1281 = vshll.u32 %v1201, 16
      %v1283 = vrot.slane %v1281, 5
      %v1284 = vor.u32 %v1280, %v1283
      %v1285 = vrot.slane %v1284, 4
      %v1287 = vshll.u32 %v1202, 16
      %v1289 = vrot.slane %v1287, 5
      %v1290 = vsel %vm484, %v1285, %v1289
      %v1292 = vshrl.u32 %v1203, 16
      %v1294 = vrot.slane %v1292, 4
      %v1295 = vshll.u32 %v1203, 16
      %v1297 = vrot.slane %v1295, 5
      %v1298 = vor.u32 %v1294, %v1297
      %v1299 = vrot.slane %v1298, 4
      %v1301 = vshll.u32 %v1204, 16
      %v1303 = vrot.slane %v1301, 5
      %v1304 = vsel %vm484, %v1299, %v1303
      %v1306 = vshrl.u32 %v1205, 16
      %v1308 = vrot.slane %v1306, 4
      %v1309 = vshll.u32 %v1205, 16
      %v1311 = vrot.slane %v1309, 5
      %v1312 = vor.u32 %v1308, %v1311
      %v1313 = vrot.slane %v1312, 4
      %v1315 = vshll.u32 %v1206, 16
      %v1317 = vrot.slane %v1315, 5
      %v1318 = vsel %vm484, %v1313, %v1317
      %v1319 = vld [vmem:[#allocation2] sm:$0xff]
      %v1320 = vld [vmem:[#allocation2 + $0x8] sm:$0xff]
      %v1321 = vld [vmem:[#allocation2 + $0x10] sm:$0xff]
      %v1322 = vld [vmem:[#allocation2 + $0x18] sm:$0xff]
      %v1323 = vld [vmem:[#allocation2 + $0x20] sm:$0xff]
      %v1324 = vld [vmem:[#allocation2 + $0x28] sm:$0xff]
      %v1325 = vld [vmem:[#allocation2 + $0x30] sm:$0xff]
      %v1326 = vld [vmem:[#allocation2 + $0x38] sm:$0xff]
      %s1327 = scalar_lea.vmem %s258, 256
      %v1328 = vld [vmem:[%s1327] sm:$0xf]
      %v1329 = vld [vmem:[%s1327 + $0x4] sm:$0xf]
      %v1330 = vld [vmem:[%s1327 + $0x8] sm:$0xf]
      %v1331 = vld [vmem:[%s1327 + $0xc] sm:$0xf]
      %v1332 = vld [vmem:[%s1327 + $0x10] sm:$0xf]
      %v1333 = vld [vmem:[%s1327 + $0x14] sm:$0xf]
      %v1334 = vld [vmem:[%s1327 + $0x18] sm:$0xf]
      %v1335 = vld [vmem:[%s1327 + $0x1c] sm:$0xf]
      %v1336 = vld [vmem:[%s1327 + $0x20] sm:$0xf]
      %v1337 = vld [vmem:[%s1327 + $0x24] sm:$0xf]
      %v1338 = vld [vmem:[%s1327 + $0x28] sm:$0xf]
      %v1339 = vld [vmem:[%s1327 + $0x2c] sm:$0xf]
      %v1340 = vld [vmem:[%s1327 + $0x30] sm:$0xf]
      %v1341 = vld [vmem:[%s1327 + $0x34] sm:$0xf]
      %v1342 = vld [vmem:[%s1327 + $0x38] sm:$0xf]
      %v1343 = vld [vmem:[%s1327 + $0x3c] sm:$0xf]
      %v1344 = vunpack.c.l.b16 %v1220
      %v1345 = vunpack.c.l.b16 %v1234
      %v1346 = vunpack.c.l.b16 %v1248
      %v1347 = vunpack.c.l.b16 %v1262
      %v1348 = vunpack.c.l.b16 %v1276
      %v1349 = vunpack.c.l.b16 %v1290
      %v1350 = vunpack.c.l.b16 %v1304
      %v1351 = vunpack.c.l.b16 %v1318
      %v1352 = vpack.c.b16 %v1345, %v1344
      %v1353 = vpack.c.b16 %v1347, %v1346
      %v1354 = vpack.c.b16 %v1349, %v1348
      %v1355 = vpack.c.b16 %v1351, %v1350
      %v1376 = vunpack.c.l.b16 %v1328
      %v1377 = vunpack.c.l.b16 %v1329
      %v1378 = vunpack.c.l.b16 %v1330
      %v1379 = vunpack.c.l.b16 %v1331
      %v1380 = vunpack.c.l.b16 %v1332
      %v1381 = vunpack.c.l.b16 %v1333
      %v1382 = vunpack.c.l.b16 %v1334
      %v1383 = vunpack.c.l.b16 %v1335
      %v1384 = vunpack.c.l.b16 %v1336
      %v1385 = vunpack.c.l.b16 %v1337
      %v1386 = vunpack.c.l.b16 %v1338
      %v1387 = vunpack.c.l.b16 %v1339
      %v1388 = vunpack.c.l.b16 %v1340
      %v1389 = vunpack.c.l.b16 %v1341
      %v1390 = vunpack.c.l.b16 %v1342
      %v1391 = vunpack.c.l.b16 %v1343
      %v1392 = vpack.c.b16 %v1377, %v1376
      %v1393 = vpack.c.b16 %v1379, %v1378
      %v1394 = vpack.c.b16 %v1381, %v1380
      %v1395 = vpack.c.b16 %v1383, %v1382
      %v1396 = vpack.c.b16 %v1385, %v1384
      %v1397 = vpack.c.b16 %v1387, %v1386
      %v1398 = vpack.c.b16 %v1389, %v1388
      %v1399 = vpack.c.b16 %v1391, %v1390
      %1408 = vmatprep.subr.bf16.mxu0 0
      %1409 = vmatpush1.bf16.msra.mxu0 %v1392
      %1410 = vmatprep.subr.bf16.mxu0 0
      %1411 = vmatpush1.bf16.msra.mxu0 %v1393
      %1412 = vmatprep.subr.bf16.mxu0 0
      %1413 = vmatpush1.bf16.msra.mxu0 %v1394
      %1414 = vmatprep.subr.bf16.mxu0 0
      %1415 = vmatpush1.bf16.msra.mxu0 %v1395
      %1416 = vmatprep.subr.bf16.mxu0 0
      %1417 = vmatpush1.bf16.msra.mxu0 %v1396
      %1418 = vmatprep.subr.bf16.mxu0 0
      %1419 = vmatpush1.bf16.msra.mxu0 %v1397
      %1420 = vmatprep.subr.bf16.mxu0 0
      %1421 = vmatpush1.bf16.msra.mxu0 %v1398
      %1422 = vmatprep.subr.bf16.mxu0 0
      %1423 = vmatpush1.bf16.msra.mxu0 %v1399
      %1424 = vmatprep.subr.bf16.mxu0 0
      %1425 = vmatpush1.bf16.msra.mxu0 0
      %1426 = vmatprep.subr.bf16.mxu0 0
      %1427 = vmatpush1.bf16.msra.mxu0 0
      %1428 = vmatprep.subr.bf16.mxu0 0
      %1429 = vmatpush1.bf16.msra.mxu0 0
      %1430 = vmatprep.subr.bf16.mxu0 0
      %1431 = vmatpush1.bf16.msra.mxu0 0
      %1432 = vmatprep.subr.bf16.mxu0 0
      %1433 = vmatpush1.bf16.msra.mxu0 0
      %1434 = vmatprep.subr.bf16.mxu0 0
      %1435 = vmatpush1.bf16.msra.mxu0 0
      %1436 = vmatprep.subr.bf16.mxu0 0
      %1437 = vmatpush1.bf16.msra.mxu0 0
      %1438 = vmatprep.subr.bf16.mxu0 0
      %1439 = vmatpush1.bf16.msra.mxu0 0
      %1440 = vmatprep.mubr.bf16.mxu0 0
      %1441 = vmatmul.mubr.bf16.gmra.mrb[0].mxu0 %v1352
      %v1442 = vpop.f32.mrb[0].mxu0
      %v1443 = vadd.f32 0.0, %v1442
      %v1444 = vpop.f32.mrb[0].mxu0
      %v1445 = vpop.f32.mrb[0].mxu0
      %v1446 = vadd.f32 0.0, %v1445
      %v1447 = vpop.f32.mrb[0].mxu0
      %1448 = vmatprep.mubr.bf16.mxu0 0
      %1449 = vmatmul.mubr.bf16.gmra.mrb[0].mxu0 %v1353
      %v1450 = vpop.f32.mrb[0].mxu0
      %v1451 = vadd.f32 0.0, %v1450
      %v1452 = vpop.f32.mrb[0].mxu0
      %v1453 = vpop.f32.mrb[0].mxu0
      %v1454 = vadd.f32 0.0, %v1453
      %v1455 = vpop.f32.mrb[0].mxu0
      %1456 = vmatprep.mubr.bf16.mxu0 0
      %1457 = vmatmul.mubr.bf16.gmra.mrb[0].mxu0 %v1354
      %v1458 = vpop.f32.mrb[0].mxu0
      %v1459 = vadd.f32 0.0, %v1458
      %v1460 = vpop.f32.mrb[0].mxu0
      %v1461 = vpop.f32.mrb[0].mxu0
      %v1462 = vadd.f32 0.0, %v1461
      %v1463 = vpop.f32.mrb[0].mxu0
      %1464 = vmatprep.mubr.bf16.mxu0 0
      %1465 = vmatmul.mubr.bf16.gmra.mrb[0].mxu0 %v1355
      %v1466 = vpop.f32.mrb[0].mxu0
      %v1467 = vadd.f32 0.0, %v1466
      %v1468 = vpop.f32.mrb[0].mxu0
      %v1469 = vpop.f32.mrb[0].mxu0
      %v1470 = vadd.f32 0.0, %v1469
      %v1471 = vpop.f32.mrb[0].mxu0
      %1472 = vdwg.mxu0
      %v1473 = vadd.f32 %v1319, %v1443
      %v1474 = vadd.f32 %v1320, %v1446
      %v1475 = vadd.f32 %v1321, %v1451
      %v1476 = vadd.f32 %v1322, %v1454
      %v1477 = vadd.f32 %v1323, %v1459
      %v1478 = vadd.f32 %v1324, %v1462
      %v1479 = vadd.f32 %v1325, %v1467
      %v1480 = vadd.f32 %v1326, %v1470
      %1481 = vst [vmem:[#allocation2] sm:$0xff] %v1473
      %1482 = vst [vmem:[#allocation2 + $0x8] sm:$0xff] %v1474
      %1483 = vst [vmem:[#allocation2 + $0x10] sm:$0xff] %v1475
      %1484 = vst [vmem:[#allocation2 + $0x18] sm:$0xff] %v1476
      %1485 = vst [vmem:[#allocation2 + $0x20] sm:$0xff] %v1477
      %1486 = vst [vmem:[#allocation2 + $0x28] sm:$0xff] %v1478
      %1487 = vst [vmem:[#allocation2 + $0x30] sm:$0xff] %v1479
      %1488 = vst [vmem:[#allocation2 + $0x38] sm:$0xff] %v1480
      %v1489 = vld [vmem:[%s1004] sm:$0xe]
      %v1490 = vld [vmem:[%s1004 + $0x4] sm:$0x1]
      %v1491 = vld [vmem:[%s1004 + $0x8] sm:$0xe]
      %v1492 = vld [vmem:[%s1004 + $0xc] sm:$0x1]
      %v1493 = vld [vmem:[%s1004 + $0x10] sm:$0xe]
      %v1494 = vld [vmem:[%s1004 + $0x14] sm:$0x1]
      %v1495 = vld [vmem:[%s1004 + $0x18] sm:$0xe]
      %v1496 = vld [vmem:[%s1004 + $0x1c] sm:$0x1]
      %v1497 = vld [vmem:[%s1004 + $0x20] sm:$0xe]
      %v1498 = vld [vmem:[%s1004 + $0x24] sm:$0x1]
      %v1499 = vld [vmem:[%s1004 + $0x28] sm:$0xe]
      %v1500 = vld [vmem:[%s1004 + $0x2c] sm:$0x1]
      %v1501 = vld [vmem:[%s1004 + $0x30] sm:$0xe]
      %v1502 = vld [vmem:[%s1004 + $0x34] sm:$0x1]
      %v1503 = vld [vmem:[%s1004 + $0x38] sm:$0xe]
      %v1504 = vld [vmem:[%s1004 + $0x3c] sm:$0x1]
      %v1521 = vrot.slane %v1489, 5
      %v1522 = vrot.slane %v1521, 4
      %v1523 = vrot.slane %v1490, 5
      %v1524 = vsel %vm801, %v1522, %v1523
      %v1525 = vrot.slane %v1491, 5
      %v1526 = vrot.slane %v1525, 4
      %v1527 = vrot.slane %v1492, 5
      %v1528 = vsel %vm801, %v1526, %v1527
      %v1529 = vrot.slane %v1493, 5
      %v1530 = vrot.slane %v1529, 4
      %v1531 = vrot.slane %v1494, 5
      %v1532 = vsel %vm801, %v1530, %v1531
      %v1533 = vrot.slane %v1495, 5
      %v1534 = vrot.slane %v1533, 4
      %v1535 = vrot.slane %v1496, 5
      %v1536 = vsel %vm801, %v1534, %v1535
      %v1537 = vrot.slane %v1497, 5
      %v1538 = vrot.slane %v1537, 4
      %v1539 = vrot.slane %v1498, 5
      %v1540 = vsel %vm801, %v1538, %v1539
      %v1541 = vrot.slane %v1499, 5
      %v1542 = vrot.slane %v1541, 4
      %v1543 = vrot.slane %v1500, 5
      %v1544 = vsel %vm801, %v1542, %v1543
      %v1545 = vrot.slane %v1501, 5
      %v1546 = vrot.slane %v1545, 4
      %v1547 = vrot.slane %v1502, 5
      %v1548 = vsel %vm801, %v1546, %v1547
      %v1549 = vrot.slane %v1503, 5
      %v1550 = vrot.slane %v1549, 4
      %v1551 = vrot.slane %v1504, 5
      %v1552 = vsel %vm801, %v1550, %v1551
      %v1553 = vld [vmem:[#allocation2] sm:$0xff]
      %v1554 = vld [vmem:[#allocation2 + $0x8] sm:$0xff]
      %v1555 = vld [vmem:[#allocation2 + $0x10] sm:$0xff]
      %v1556 = vld [vmem:[#allocation2 + $0x18] sm:$0xff]
      %v1557 = vld [vmem:[#allocation2 + $0x20] sm:$0xff]
      %v1558 = vld [vmem:[#allocation2 + $0x28] sm:$0xff]
      %v1559 = vld [vmem:[#allocation2 + $0x30] sm:$0xff]
      %v1560 = vld [vmem:[#allocation2 + $0x38] sm:$0xff]
      %s1561 = scalar_lea.vmem %s258, 320
      %v1562 = vld [vmem:[%s1561] sm:$0xf]
      %v1563 = vld [vmem:[%s1561 + $0x4] sm:$0xf]
      %v1564 = vld [vmem:[%s1561 + $0x8] sm:$0xf]
      %v1565 = vld [vmem:[%s1561 + $0xc] sm:$0xf]
      %v1566 = vld [vmem:[%s1561 + $0x10] sm:$0xf]
      %v1567 = vld [vmem:[%s1561 + $0x14] sm:$0xf]
      %v1568 = vld [vmem:[%s1561 + $0x18] sm:$0xf]
      %v1569 = vld [vmem:[%s1561 + $0x1c] sm:$0xf]
      %v1570 = vld [vmem:[%s1561 + $0x20] sm:$0xf]
      %v1571 = vld [vmem:[%s1561 + $0x24] sm:$0xf]
      %v1572 = vld [vmem:[%s1561 + $0x28] sm:$0xf]
      %v1573 = vld [vmem:[%s1561 + $0x2c] sm:$0xf]
      %v1574 = vld [vmem:[%s1561 + $0x30] sm:$0xf]
      %v1575 = vld [vmem:[%s1561 + $0x34] sm:$0xf]
      %v1576 = vld [vmem:[%s1561 + $0x38] sm:$0xf]
      %v1577 = vld [vmem:[%s1561 + $0x3c] sm:$0xf]
      %v1578 = vunpack.c.l.b16 %v1524
      %v1579 = vunpack.c.l.b16 %v1528
      %v1580 = vunpack.c.l.b16 %v1532
      %v1581 = vunpack.c.l.b16 %v1536
      %v1582 = vunpack.c.l.b16 %v1540
      %v1583 = vunpack.c.l.b16 %v1544
      %v1584 = vunpack.c.l.b16 %v1548
      %v1585 = vunpack.c.l.b16 %v1552
      %v1586 = vpack.c.b16 %v1579, %v1578
      %v1587 = vpack.c.b16 %v1581, %v1580
      %v1588 = vpack.c.b16 %v1583, %v1582
      %v1589 = vpack.c.b16 %v1585, %v1584
      %v1610 = vunpack.c.l.b16 %v1562
      %v1611 = vunpack.c.l.b16 %v1563
      %v1612 = vunpack.c.l.b16 %v1564
      %v1613 = vunpack.c.l.b16 %v1565
      %v1614 = vunpack.c.l.b16 %v1566
      %v1615 = vunpack.c.l.b16 %v1567
      %v1616 = vunpack.c.l.b16 %v1568
      %v1617 = vunpack.c.l.b16 %v1569
      %v1618 = vunpack.c.l.b16 %v1570
      %v1619 = vunpack.c.l.b16 %v1571
      %v1620 = vunpack.c.l.b16 %v1572
      %v1621 = vunpack.c.l.b16 %v1573
      %v1622 = vunpack.c.l.b16 %v1574
      %v1623 = vunpack.c.l.b16 %v1575
      %v1624 = vunpack.c.l.b16 %v1576
      %v1625 = vunpack.c.l.b16 %v1577
      %v1626 = vpack.c.b16 %v1611, %v1610
      %v1627 = vpack.c.b16 %v1613, %v1612
      %v1628 = vpack.c.b16 %v1615, %v1614
      %v1629 = vpack.c.b16 %v1617, %v1616
      %v1630 = vpack.c.b16 %v1619, %v1618
      %v1631 = vpack.c.b16 %v1621, %v1620
      %v1632 = vpack.c.b16 %v1623, %v1622
      %v1633 = vpack.c.b16 %v1625, %v1624
      %1642 = vmatprep.subr.bf16.mxu0 0
      %1643 = vmatpush1.bf16.msra.mxu0 %v1626
      %1644 = vmatprep.subr.bf16.mxu0 0
      %1645 = vmatpush1.bf16.msra.mxu0 %v1627
      %1646 = vmatprep.subr.bf16.mxu0 0
      %1647 = vmatpush1.bf16.msra.mxu0 %v1628
      %1648 = vmatprep.subr.bf16.mxu0 0
      %1649 = vmatpush1.bf16.msra.mxu0 %v1629
      %1650 = vmatprep.subr.bf16.mxu0 0
      %1651 = vmatpush1.bf16.msra.mxu0 %v1630
      %1652 = vmatprep.subr.bf16.mxu0 0
      %1653 = vmatpush1.bf16.msra.mxu0 %v1631
      %1654 = vmatprep.subr.bf16.mxu0 0
      %1655 = vmatpush1.bf16.msra.mxu0 %v1632
      %1656 = vmatprep.subr.bf16.mxu0 0
      %1657 = vmatpush1.bf16.msra.mxu0 %v1633
      %1658 = vmatprep.subr.bf16.mxu0 0
      %1659 = vmatpush1.bf16.msra.mxu0 0
      %1660 = vmatprep.subr.bf16.mxu0 0
      %1661 = vmatpush1.bf16.msra.mxu0 0
      %1662 = vmatprep.subr.bf16.mxu0 0
      %1663 = vmatpush1.bf16.msra.mxu0 0
      %1664 = vmatprep.subr.bf16.mxu0 0
      %1665 = vmatpush1.bf16.msra.mxu0 0
      %1666 = vmatprep.subr.bf16.mxu0 0
      %1667 = vmatpush1.bf16.msra.mxu0 0
      %1668 = vmatprep.subr.bf16.mxu0 0
      %1669 = vmatpush1.bf16.msra.mxu0 0
      %1670 = vmatprep.subr.bf16.mxu0 0
      %1671 = vmatpush1.bf16.msra.mxu0 0
      %1672 = vmatprep.subr.bf16.mxu0 0
      %1673 = vmatpush1.bf16.msra.mxu0 0
      %1674 = vmatprep.mubr.bf16.mxu0 0
      %1675 = vmatmul.mubr.bf16.gmra.mrb[0].mxu0 %v1586
      %v1676 = vpop.f32.mrb[0].mxu0
      %v1677 = vadd.f32 0.0, %v1676
      %v1678 = vpop.f32.mrb[0].mxu0
      %v1679 = vpop.f32.mrb[0].mxu0
      %v1680 = vadd.f32 0.0, %v1679
      %v1681 = vpop.f32.mrb[0].mxu0
      %1682 = vmatprep.mubr.bf16.mxu0 0
      %1683 = vmatmul.mubr.bf16.gmra.mrb[0].mxu0 %v1587
      %v1684 = vpop.f32.mrb[0].mxu0
      %v1685 = vadd.f32 0.0, %v1684
      %v1686 = vpop.f32.mrb[0].mxu0
      %v1687 = vpop.f32.mrb[0].mxu0
      %v1688 = vadd.f32 0.0, %v1687
      %v1689 = vpop.f32.mrb[0].mxu0
      %1690 = vmatprep.mubr.bf16.mxu0 0
      %1691 = vmatmul.mubr.bf16.gmra.mrb[0].mxu0 %v1588
      %v1692 = vpop.f32.mrb[0].mxu0
      %v1693 = vadd.f32 0.0, %v1692
      %v1694 = vpop.f32.mrb[0].mxu0
      %v1695 = vpop.f32.mrb[0].mxu0
      %v1696 = vadd.f32 0.0, %v1695
      %v1697 = vpop.f32.mrb[0].mxu0
      %1698 = vmatprep.mubr.bf16.mxu0 0
      %1699 = vmatmul.mubr.bf16.gmra.mrb[0].mxu0 %v1589
      %v1700 = vpop.f32.mrb[0].mxu0
      %v1701 = vadd.f32 0.0, %v1700
      %v1702 = vpop.f32.mrb[0].mxu0
      %v1703 = vpop.f32.mrb[0].mxu0
      %v1704 = vadd.f32 0.0, %v1703
      %v1705 = vpop.f32.mrb[0].mxu0
      %1706 = vdwg.mxu0
      %v1707 = vadd.f32 %v1553, %v1677
      %v1708 = vadd.f32 %v1554, %v1680
      %v1709 = vadd.f32 %v1555, %v1685
      %v1710 = vadd.f32 %v1556, %v1688
      %v1711 = vadd.f32 %v1557, %v1693
      %v1712 = vadd.f32 %v1558, %v1696
      %v1713 = vadd.f32 %v1559, %v1701
      %v1714 = vadd.f32 %v1560, %v1704
      %1715 = vst [vmem:[#allocation2] sm:$0xff] %v1707
      %1716 = vst [vmem:[#allocation2 + $0x8] sm:$0xff] %v1708
      %1717 = vst [vmem:[#allocation2 + $0x10] sm:$0xff] %v1709
      %1718 = vst [vmem:[#allocation2 + $0x18] sm:$0xff] %v1710
      %1719 = vst [vmem:[#allocation2 + $0x20] sm:$0xff] %v1711
      %1720 = vst [vmem:[#allocation2 + $0x28] sm:$0xff] %v1712
      %1721 = vst [vmem:[#allocation2 + $0x30] sm:$0xff] %v1713
      %1722 = vst [vmem:[#allocation2 + $0x38] sm:$0xff] %v1714
      %s1723 = scalar_lea.vmem %s250, 16
      %v1724 = vld [vmem:[%s1723] sm:$0xf]
      %v1725 = vld [vmem:[%s1723 + $0x8] sm:$0xf]
      %v1726 = vld [vmem:[%s1723 + $0x10] sm:$0xf]
      %v1727 = vld [vmem:[%s1723 + $0x18] sm:$0xf]
      %v1728 = vld [vmem:[%s1723 + $0x20] sm:$0xf]
      %v1729 = vld [vmem:[%s1723 + $0x28] sm:$0xf]
      %v1730 = vld [vmem:[%s1723 + $0x30] sm:$0xf]
      %v1731 = vld [vmem:[%s1723 + $0x38] sm:$0xf]
      %v1732 = vld [vmem:[#allocation2] sm:$0xff]
      %v1733 = vld [vmem:[#allocation2 + $0x8] sm:$0xff]
      %v1734 = vld [vmem:[#allocation2 + $0x10] sm:$0xff]
      %v1735 = vld [vmem:[#allocation2 + $0x18] sm:$0xff]
      %v1736 = vld [vmem:[#allocation2 + $0x20] sm:$0xff]
      %v1737 = vld [vmem:[#allocation2 + $0x28] sm:$0xff]
      %v1738 = vld [vmem:[#allocation2 + $0x30] sm:$0xff]
      %v1739 = vld [vmem:[#allocation2 + $0x38] sm:$0xff]
      %s1740 = scalar_lea.vmem %s258, 384
      %v1741 = vld [vmem:[%s1740] sm:$0xf]
      %v1742 = vld [vmem:[%s1740 + $0x4] sm:$0xf]
      %v1743 = vld [vmem:[%s1740 + $0x8] sm:$0xf]
      %v1744 = vld [vmem:[%s1740 + $0xc] sm:$0xf]
      %v1745 = vld [vmem:[%s1740 + $0x10] sm:$0xf]
      %v1746 = vld [vmem:[%s1740 + $0x14] sm:$0xf]
      %v1747 = vld [vmem:[%s1740 + $0x18] sm:$0xf]
      %v1748 = vld [vmem:[%s1740 + $0x1c] sm:$0xf]
      %v1749 = vld [vmem:[%s1740 + $0x20] sm:$0xf]
      %v1750 = vld [vmem:[%s1740 + $0x24] sm:$0xf]
      %v1751 = vld [vmem:[%s1740 + $0x28] sm:$0xf]
      %v1752 = vld [vmem:[%s1740 + $0x2c] sm:$0xf]
      %v1753 = vld [vmem:[%s1740 + $0x30] sm:$0xf]
      %v1754 = vld [vmem:[%s1740 + $0x34] sm:$0xf]
      %v1755 = vld [vmem:[%s1740 + $0x38] sm:$0xf]
      %v1756 = vld [vmem:[%s1740 + $0x3c] sm:$0xf]
      %v1765 = vunpack.c.l.b16 %v1724
      %v1766 = vunpack.c.l.b16 %v1725
      %v1767 = vunpack.c.l.b16 %v1726
      %v1768 = vunpack.c.l.b16 %v1727
      %v1769 = vunpack.c.l.b16 %v1728
      %v1770 = vunpack.c.l.b16 %v1729
      %v1771 = vunpack.c.l.b16 %v1730
      %v1772 = vunpack.c.l.b16 %v1731
      %v1773 = vpack.c.b16 %v1766, %v1765
      %v1774 = vpack.c.b16 %v1768, %v1767
      %v1775 = vpack.c.b16 %v1770, %v1769
      %v1776 = vpack.c.b16 %v1772, %v1771
      %v1797 = vunpack.c.l.b16 %v1741
      %v1798 = vunpack.c.l.b16 %v1742
      %v1799 = vunpack.c.l.b16 %v1743
      %v1800 = vunpack.c.l.b16 %v1744
      %v1801 = vunpack.c.l.b16 %v1745
      %v1802 = vunpack.c.l.b16 %v1746
      %v1803 = vunpack.c.l.b16 %v1747
      %v1804 = vunpack.c.l.b16 %v1748
      %v1805 = vunpack.c.l.b16 %v1749
      %v1806 = vunpack.c.l.b16 %v1750
      %v1807 = vunpack.c.l.b16 %v1751
      %v1808 = vunpack.c.l.b16 %v1752
      %v1809 = vunpack.c.l.b16 %v1753
      %v1810 = vunpack.c.l.b16 %v1754
      %v1811 = vunpack.c.l.b16 %v1755
      %v1812 = vunpack.c.l.b16 %v1756
      %v1813 = vpack.c.b16 %v1798, %v1797
      %v1814 = vpack.c.b16 %v1800, %v1799
      %v1815 = vpack.c.b16 %v1802, %v1801
      %v1816 = vpack.c.b16 %v1804, %v1803
      %v1817 = vpack.c.b16 %v1806, %v1805
      %v1818 = vpack.c.b16 %v1808, %v1807
      %v1819 = vpack.c.b16 %v1810, %v1809
      %v1820 = vpack.c.b16 %v1812, %v1811
      %1829 = vmatprep.subr.bf16.mxu0 0
      %1830 = vmatpush1.bf16.msra.mxu0 %v1813
      %1831 = vmatprep.subr.bf16.mxu0 0
      %1832 = vmatpush1.bf16.msra.mxu0 %v1814
      %1833 = vmatprep.subr.bf16.mxu0 0
      %1834 = vmatpush1.bf16.msra.mxu0 %v1815
      %1835 = vmatprep.subr.bf16.mxu0 0
      %1836 = vmatpush1.bf16.msra.mxu0 %v1816
      %1837 = vmatprep.subr.bf16.mxu0 0
      %1838 = vmatpush1.bf16.msra.mxu0 %v1817
      %1839 = vmatprep.subr.bf16.mxu0 0
      %1840 = vmatpush1.bf16.msra.mxu0 %v1818
      %1841 = vmatprep.subr.bf16.mxu0 0
      %1842 = vmatpush1.bf16.msra.mxu0 %v1819
      %1843 = vmatprep.subr.bf16.mxu0 0
      %1844 = vmatpush1.bf16.msra.mxu0 %v1820
      %1845 = vmatprep.subr.bf16.mxu0 0
      %1846 = vmatpush1.bf16.msra.mxu0 0
      %1847 = vmatprep.subr.bf16.mxu0 0
      %1848 = vmatpush1.bf16.msra.mxu0 0
      %1849 = vmatprep.subr.bf16.mxu0 0
      %1850 = vmatpush1.bf16.msra.mxu0 0
      %1851 = vmatprep.subr.bf16.mxu0 0
      %1852 = vmatpush1.bf16.msra.mxu0 0
      %1853 = vmatprep.subr.bf16.mxu0 0
      %1854 = vmatpush1.bf16.msra.mxu0 0
      %1855 = vmatprep.subr.bf16.mxu0 0
      %1856 = vmatpush1.bf16.msra.mxu0 0
      %1857 = vmatprep.subr.bf16.mxu0 0
      %1858 = vmatpush1.bf16.msra.mxu0 0
      %1859 = vmatprep.subr.bf16.mxu0 0
      %1860 = vmatpush1.bf16.msra.mxu0 0
      %1861 = vmatprep.mubr.bf16.mxu0 0
      %1862 = vmatmul.mubr.bf16.gmra.mrb[0].mxu0 %v1773
      %v1863 = vpop.f32.mrb[0].mxu0
      %v1864 = vadd.f32 0.0, %v1863
      %v1865 = vpop.f32.mrb[0].mxu0
      %v1866 = vpop.f32.mrb[0].mxu0
      %v1867 = vadd.f32 0.0, %v1866
      %v1868 = vpop.f32.mrb[0].mxu0
      %1869 = vmatprep.mubr.bf16.mxu0 0
      %1870 = vmatmul.mubr.bf16.gmra.mrb[0].mxu0 %v1774
      %v1871 = vpop.f32.mrb[0].mxu0
      %v1872 = vadd.f32 0.0, %v1871
      %v1873 = vpop.f32.mrb[0].mxu0
      %v1874 = vpop.f32.mrb[0].mxu0
      %v1875 = vadd.f32 0.0, %v1874
      %v1876 = vpop.f32.mrb[0].mxu0
      %1877 = vmatprep.mubr.bf16.mxu0 0
      %1878 = vmatmul.mubr.bf16.gmra.mrb[0].mxu0 %v1775
      %v1879 = vpop.f32.mrb[0].mxu0
      %v1880 = vadd.f32 0.0, %v1879
      %v1881 = vpop.f32.mrb[0].mxu0
      %v1882 = vpop.f32.mrb[0].mxu0
      %v1883 = vadd.f32 0.0, %v1882
      %v1884 = vpop.f32.mrb[0].mxu0
      %1885 = vmatprep.mubr.bf16.mxu0 0
      %1886 = vmatmul.mubr.bf16.gmra.mrb[0].mxu0 %v1776
      %v1887 = vpop.f32.mrb[0].mxu0
      %v1888 = vadd.f32 0.0, %v1887
      %v1889 = vpop.f32.mrb[0].mxu0
      %v1890 = vpop.f32.mrb[0].mxu0
      %v1891 = vadd.f32 0.0, %v1890
      %v1892 = vpop.f32.mrb[0].mxu0
      %1893 = vdwg.mxu0
      %v1894 = vadd.f32 %v1732, %v1864
      %v1895 = vadd.f32 %v1733, %v1867
      %v1896 = vadd.f32 %v1734, %v1872
      %v1897 = vadd.f32 %v1735, %v1875
      %v1898 = vadd.f32 %v1736, %v1880
      %v1899 = vadd.f32 %v1737, %v1883
      %v1900 = vadd.f32 %v1738, %v1888
      %v1901 = vadd.f32 %v1739, %v1891
      %1902 = vst [vmem:[#allocation2] sm:$0xff] %v1894
      %1903 = vst [vmem:[#allocation2 + $0x8] sm:$0xff] %v1895
      %1904 = vst [vmem:[#allocation2 + $0x10] sm:$0xff] %v1896
      %1905 = vst [vmem:[#allocation2 + $0x18] sm:$0xff] %v1897
      %1906 = vst [vmem:[#allocation2 + $0x20] sm:$0xff] %v1898
      %1907 = vst [vmem:[#allocation2 + $0x28] sm:$0xff] %v1899
      %1908 = vst [vmem:[#allocation2 + $0x30] sm:$0xff] %v1900
      %1909 = vst [vmem:[#allocation2 + $0x38] sm:$0xff] %v1901
      %v1910 = vld [vmem:[%s1723] sm:$0xf]
      %v1911 = vld [vmem:[%s1723 + $0x4] sm:$0x1]
      %v1912 = vld [vmem:[%s1723 + $0x8] sm:$0xf]
      %v1913 = vld [vmem:[%s1723 + $0xc] sm:$0x1]
      %v1914 = vld [vmem:[%s1723 + $0x10] sm:$0xf]
      %v1915 = vld [vmem:[%s1723 + $0x14] sm:$0x1]
      %v1916 = vld [vmem:[%s1723 + $0x18] sm:$0xf]
      %v1917 = vld [vmem:[%s1723 + $0x1c] sm:$0x1]
      %v1918 = vld [vmem:[%s1723 + $0x20] sm:$0xf]
      %v1919 = vld [vmem:[%s1723 + $0x24] sm:$0x1]
      %v1920 = vld [vmem:[%s1723 + $0x28] sm:$0xf]
      %v1921 = vld [vmem:[%s1723 + $0x2c] sm:$0x1]
      %v1922 = vld [vmem:[%s1723 + $0x30] sm:$0xf]
      %v1923 = vld [vmem:[%s1723 + $0x34] sm:$0x1]
      %v1924 = vld [vmem:[%s1723 + $0x38] sm:$0xf]
      %v1925 = vld [vmem:[%s1723 + $0x3c] sm:$0x1]
      %v1927 = vshrl.u32 %v1910, 16
      %v1929 = vrot.slane %v1927, 4
      %v1930 = vshll.u32 %v1910, 16
      %v1932 = vrot.slane %v1930, 5
      %v1933 = vor.u32 %v1929, %v1932
      %v1934 = vrot.slane %v1933, 4
      %v1936 = vshll.u32 %v1911, 16
      %v1938 = vrot.slane %v1936, 5
      %v1939 = vsel %vm484, %v1934, %v1938
      %v1941 = vshrl.u32 %v1912, 16
      %v1943 = vrot.slane %v1941, 4
      %v1944 = vshll.u32 %v1912, 16
      %v1946 = vrot.slane %v1944, 5
      %v1947 = vor.u32 %v1943, %v1946
      %v1948 = vrot.slane %v1947, 4
      %v1950 = vshll.u32 %v1913, 16
      %v1952 = vrot.slane %v1950, 5
      %v1953 = vsel %vm484, %v1948, %v1952
      %v1955 = vshrl.u32 %v1914, 16
      %v1957 = vrot.slane %v1955, 4
      %v1958 = vshll.u32 %v1914, 16
      %v1960 = vrot.slane %v1958, 5
      %v1961 = vor.u32 %v1957, %v1960
      %v1962 = vrot.slane %v1961, 4
      %v1964 = vshll.u32 %v1915, 16
      %v1966 = vrot.slane %v1964, 5
      %v1967 = vsel %vm484, %v1962, %v1966
      %v1969 = vshrl.u32 %v1916, 16
      %v1971 = vrot.slane %v1969, 4
      %v1972 = vshll.u32 %v1916, 16
      %v1974 = vrot.slane %v1972, 5
      %v1975 = vor.u32 %v1971, %v1974
      %v1976 = vrot.slane %v1975, 4
      %v1978 = vshll.u32 %v1917, 16
      %v1980 = vrot.slane %v1978, 5
      %v1981 = vsel %vm484, %v1976, %v1980
      %v1983 = vshrl.u32 %v1918, 16
      %v1985 = vrot.slane %v1983, 4
      %v1986 = vshll.u32 %v1918, 16
      %v1988 = vrot.slane %v1986, 5
      %v1989 = vor.u32 %v1985, %v1988
      %v1990 = vrot.slane %v1989, 4
      %v1992 = vshll.u32 %v1919, 16
      %v1994 = vrot.slane %v1992, 5
      %v1995 = vsel %vm484, %v1990, %v1994
      %v1997 = vshrl.u32 %v1920, 16
      %v1999 = vrot.slane %v1997, 4
      %v2000 = vshll.u32 %v1920, 16
      %v2002 = vrot.slane %v2000, 5
      %v2003 = vor.u32 %v1999, %v2002
      %v2004 = vrot.slane %v2003, 4
      %v2006 = vshll.u32 %v1921, 16
      %v2008 = vrot.slane %v2006, 5
      %v2009 = vsel %vm484, %v2004, %v2008
      %v2011 = vshrl.u32 %v1922, 16
      %v2013 = vrot.slane %v2011, 4
      %v2014 = vshll.u32 %v1922, 16
      %v2016 = vrot.slane %v2014, 5
      %v2017 = vor.u32 %v2013, %v2016
      %v2018 = vrot.slane %v2017, 4
      %v2020 = vshll.u32 %v1923, 16
      %v2022 = vrot.slane %v2020, 5
      %v2023 = vsel %vm484, %v2018, %v2022
      %v2025 = vshrl.u32 %v1924, 16
      %v2027 = vrot.slane %v2025, 4
      %v2028 = vshll.u32 %v1924, 16
      %v2030 = vrot.slane %v2028, 5
      %v2031 = vor.u32 %v2027, %v2030
      %v2032 = vrot.slane %v2031, 4
      %v2034 = vshll.u32 %v1925, 16
      %v2036 = vrot.slane %v2034, 5
      %v2037 = vsel %vm484, %v2032, %v2036
      %v2038 = vld [vmem:[#allocation2] sm:$0xff]
      %v2039 = vld [vmem:[#allocation2 + $0x8] sm:$0xff]
      %v2040 = vld [vmem:[#allocation2 + $0x10] sm:$0xff]
      %v2041 = vld [vmem:[#allocation2 + $0x18] sm:$0xff]
      %v2042 = vld [vmem:[#allocation2 + $0x20] sm:$0xff]
      %v2043 = vld [vmem:[#allocation2 + $0x28] sm:$0xff]
      %v2044 = vld [vmem:[#allocation2 + $0x30] sm:$0xff]
      %v2045 = vld [vmem:[#allocation2 + $0x38] sm:$0xff]
      %s2046 = scalar_lea.vmem %s258, 448
      %v2047 = vld [vmem:[%s2046] sm:$0xf]
      %v2048 = vld [vmem:[%s2046 + $0x4] sm:$0xf]
      %v2049 = vld [vmem:[%s2046 + $0x8] sm:$0xf]
      %v2050 = vld [vmem:[%s2046 + $0xc] sm:$0xf]
      %v2051 = vld [vmem:[%s2046 + $0x10] sm:$0xf]
      %v2052 = vld [vmem:[%s2046 + $0x14] sm:$0xf]
      %v2053 = vld [vmem:[%s2046 + $0x18] sm:$0xf]
      %v2054 = vld [vmem:[%s2046 + $0x1c] sm:$0xf]
      %v2055 = vld [vmem:[%s2046 + $0x20] sm:$0xf]
      %v2056 = vld [vmem:[%s2046 + $0x24] sm:$0xf]
      %v2057 = vld [vmem:[%s2046 + $0x28] sm:$0xf]
      %v2058 = vld [vmem:[%s2046 + $0x2c] sm:$0xf]
      %v2059 = vld [vmem:[%s2046 + $0x30] sm:$0xf]
      %v2060 = vld [vmem:[%s2046 + $0x34] sm:$0xf]
      %v2061 = vld [vmem:[%s2046 + $0x38] sm:$0xf]
      %v2062 = vld [vmem:[%s2046 + $0x3c] sm:$0xf]
      %v2063 = vunpack.c.l.b16 %v1939
      %v2064 = vunpack.c.l.b16 %v1953
      %v2065 = vunpack.c.l.b16 %v1967
      %v2066 = vunpack.c.l.b16 %v1981
      %v2067 = vunpack.c.l.b16 %v1995
      %v2068 = vunpack.c.l.b16 %v2009
      %v2069 = vunpack.c.l.b16 %v2023
      %v2070 = vunpack.c.l.b16 %v2037
      %v2071 = vpack.c.b16 %v2064, %v2063
      %v2072 = vpack.c.b16 %v2066, %v2065
      %v2073 = vpack.c.b16 %v2068, %v2067
      %v2074 = vpack.c.b16 %v2070, %v2069
      %v2095 = vunpack.c.l.b16 %v2047
      %v2096 = vunpack.c.l.b16 %v2048
      %v2097 = vunpack.c.l.b16 %v2049
      %v2098 = vunpack.c.l.b16 %v2050
      %v2099 = vunpack.c.l.b16 %v2051
      %v2100 = vunpack.c.l.b16 %v2052
      %v2101 = vunpack.c.l.b16 %v2053
      %v2102 = vunpack.c.l.b16 %v2054
      %v2103 = vunpack.c.l.b16 %v2055
      %v2104 = vunpack.c.l.b16 %v2056
      %v2105 = vunpack.c.l.b16 %v2057
      %v2106 = vunpack.c.l.b16 %v2058
      %v2107 = vunpack.c.l.b16 %v2059
      %v2108 = vunpack.c.l.b16 %v2060
      %v2109 = vunpack.c.l.b16 %v2061
      %v2110 = vunpack.c.l.b16 %v2062
      %v2111 = vpack.c.b16 %v2096, %v2095
      %v2112 = vpack.c.b16 %v2098, %v2097
      %v2113 = vpack.c.b16 %v2100, %v2099
      %v2114 = vpack.c.b16 %v2102, %v2101
      %v2115 = vpack.c.b16 %v2104, %v2103
      %v2116 = vpack.c.b16 %v2106, %v2105
      %v2117 = vpack.c.b16 %v2108, %v2107
      %v2118 = vpack.c.b16 %v2110, %v2109
      %2127 = vmatprep.subr.bf16.mxu0 0
      %2128 = vmatpush1.bf16.msra.mxu0 %v2111
      %2129 = vmatprep.subr.bf16.mxu0 0
      %2130 = vmatpush1.bf16.msra.mxu0 %v2112
      %2131 = vmatprep.subr.bf16.mxu0 0
      %2132 = vmatpush1.bf16.msra.mxu0 %v2113
      %2133 = vmatprep.subr.bf16.mxu0 0
      %2134 = vmatpush1.bf16.msra.mxu0 %v2114
      %2135 = vmatprep.subr.bf16.mxu0 0
      %2136 = vmatpush1.bf16.msra.mxu0 %v2115
      %2137 = vmatprep.subr.bf16.mxu0 0
      %2138 = vmatpush1.bf16.msra.mxu0 %v2116
      %2139 = vmatprep.subr.bf16.mxu0 0
      %2140 = vmatpush1.bf16.msra.mxu0 %v2117
      %2141 = vmatprep.subr.bf16.mxu0 0
      %2142 = vmatpush1.bf16.msra.mxu0 %v2118
      %2143 = vmatprep.subr.bf16.mxu0 0
      %2144 = vmatpush1.bf16.msra.mxu0 0
      %2145 = vmatprep.subr.bf16.mxu0 0
      %2146 = vmatpush1.bf16.msra.mxu0 0
      %2147 = vmatprep.subr.bf16.mxu0 0
      %2148 = vmatpush1.bf16.msra.mxu0 0
      %2149 = vmatprep.subr.bf16.mxu0 0
      %2150 = vmatpush1.bf16.msra.mxu0 0
      %2151 = vmatprep.subr.bf16.mxu0 0
      %2152 = vmatpush1.bf16.msra.mxu0 0
      %2153 = vmatprep.subr.bf16.mxu0 0
      %2154 = vmatpush1.bf16.msra.mxu0 0
      %2155 = vmatprep.subr.bf16.mxu0 0
      %2156 = vmatpush1.bf16.msra.mxu0 0
      %2157 = vmatprep.subr.bf16.mxu0 0
      %2158 = vmatpush1.bf16.msra.mxu0 0
      %2159 = vmatprep.mubr.bf16.mxu0 0
      %2160 = vmatmul.mubr.bf16.gmra.mrb[0].mxu0 %v2071
      %v2161 = vpop.f32.mrb[0].mxu0
      %v2162 = vadd.f32 0.0, %v2161
      %v2163 = vpop.f32.mrb[0].mxu0
      %v2164 = vpop.f32.mrb[0].mxu0
      %v2165 = vadd.f32 0.0, %v2164
      %v2166 = vpop.f32.mrb[0].mxu0
      %2167 = vmatprep.mubr.bf16.mxu0 0
      %2168 = vmatmul.mubr.bf16.gmra.mrb[0].mxu0 %v2072
      %v2169 = vpop.f32.mrb[0].mxu0
      %v2170 = vadd.f32 0.0, %v2169
      %v2171 = vpop.f32.mrb[0].mxu0
      %v2172 = vpop.f32.mrb[0].mxu0
      %v2173 = vadd.f32 0.0, %v2172
      %v2174 = vpop.f32.mrb[0].mxu0
      %2175 = vmatprep.mubr.bf16.mxu0 0
      %2176 = vmatmul.mubr.bf16.gmra.mrb[0].mxu0 %v2073
      %v2177 = vpop.f32.mrb[0].mxu0
      %v2178 = vadd.f32 0.0, %v2177
      %v2179 = vpop.f32.mrb[0].mxu0
      %v2180 = vpop.f32.mrb[0].mxu0
      %v2181 = vadd.f32 0.0, %v2180
      %v2182 = vpop.f32.mrb[0].mxu0
      %2183 = vmatprep.mubr.bf16.mxu0 0
      %2184 = vmatmul.mubr.bf16.gmra.mrb[0].mxu0 %v2074
      %v2185 = vpop.f32.mrb[0].mxu0
      %v2186 = vadd.f32 0.0, %v2185
      %v2187 = vpop.f32.mrb[0].mxu0
      %v2188 = vpop.f32.mrb[0].mxu0
      %v2189 = vadd.f32 0.0, %v2188
      %v2190 = vpop.f32.mrb[0].mxu0
      %2191 = vdwg.mxu0
      %v2192 = vadd.f32 %v2038, %v2162
      %v2193 = vadd.f32 %v2039, %v2165
      %v2194 = vadd.f32 %v2040, %v2170
      %v2195 = vadd.f32 %v2041, %v2173
      %v2196 = vadd.f32 %v2042, %v2178
      %v2197 = vadd.f32 %v2043, %v2181
      %v2198 = vadd.f32 %v2044, %v2186
      %v2199 = vadd.f32 %v2045, %v2189
      %2200 = vst [vmem:[#allocation2] sm:$0xff] %v2192
      %2201 = vst [vmem:[#allocation2 + $0x8] sm:$0xff] %v2193
      %2202 = vst [vmem:[#allocation2 + $0x10] sm:$0xff] %v2194
      %2203 = vst [vmem:[#allocation2 + $0x18] sm:$0xff] %v2195
      %2204 = vst [vmem:[#allocation2 + $0x20] sm:$0xff] %v2196
      %2205 = vst [vmem:[#allocation2 + $0x28] sm:$0xff] %v2197
      %2206 = vst [vmem:[#allocation2 + $0x30] sm:$0xff] %v2198
      %2207 = vst [vmem:[#allocation2 + $0x38] sm:$0xff] %v2199
      %v2208 = vld [vmem:[%s1723] sm:$0xe]
      %v2209 = vld [vmem:[%s1723 + $0x4] sm:$0x1]
      %v2210 = vld [vmem:[%s1723 + $0x8] sm:$0xe]
      %v2211 = vld [vmem:[%s1723 + $0xc] sm:$0x1]
      %v2212 = vld [vmem:[%s1723 + $0x10] sm:$0xe]
      %v2213 = vld [vmem:[%s1723 + $0x14] sm:$0x1]
      %v2214 = vld [vmem:[%s1723 + $0x18] sm:$0xe]
      %v2215 = vld [vmem:[%s1723 + $0x1c] sm:$0x1]
      %v2216 = vld [vmem:[%s1723 + $0x20] sm:$0xe]
      %v2217 = vld [vmem:[%s1723 + $0x24] sm:$0x1]
      %v2218 = vld [vmem:[%s1723 + $0x28] sm:$0xe]
      %v2219 = vld [vmem:[%s1723 + $0x2c] sm:$0x1]
      %v2220 = vld [vmem:[%s1723 + $0x30] sm:$0xe]
      %v2221 = vld [vmem:[%s1723 + $0x34] sm:$0x1]
      %v2222 = vld [vmem:[%s1723 + $0x38] sm:$0xe]
      %v2223 = vld [vmem:[%s1723 + $0x3c] sm:$0x1]
      %v2240 = vrot.slane %v2208, 5
      %v2241 = vrot.slane %v2240, 4
      %v2242 = vrot.slane %v2209, 5
      %v2243 = vsel %vm801, %v2241, %v2242
      %v2244 = vrot.slane %v2210, 5
      %v2245 = vrot.slane %v2244, 4
      %v2246 = vrot.slane %v2211, 5
      %v2247 = vsel %vm801, %v2245, %v2246
      %v2248 = vrot.slane %v2212, 5
      %v2249 = vrot.slane %v2248, 4
      %v2250 = vrot.slane %v2213, 5
      %v2251 = vsel %vm801, %v2249, %v2250
      %v2252 = vrot.slane %v2214, 5
      %v2253 = vrot.slane %v2252, 4
      %v2254 = vrot.slane %v2215, 5
      %v2255 = vsel %vm801, %v2253, %v2254
      %v2256 = vrot.slane %v2216, 5
      %v2257 = vrot.slane %v2256, 4
      %v2258 = vrot.slane %v2217, 5
      %v2259 = vsel %vm801, %v2257, %v2258
      %v2260 = vrot.slane %v2218, 5
      %v2261 = vrot.slane %v2260, 4
      %v2262 = vrot.slane %v2219, 5
      %v2263 = vsel %vm801, %v2261, %v2262
      %v2264 = vrot.slane %v2220, 5
      %v2265 = vrot.slane %v2264, 4
      %v2266 = vrot.slane %v2221, 5
      %v2267 = vsel %vm801, %v2265, %v2266
      %v2268 = vrot.slane %v2222, 5
      %v2269 = vrot.slane %v2268, 4
      %v2270 = vrot.slane %v2223, 5
      %v2271 = vsel %vm801, %v2269, %v2270
      %v2272 = vld [vmem:[#allocation2] sm:$0xff]
      %v2273 = vld [vmem:[#allocation2 + $0x8] sm:$0xff]
      %v2274 = vld [vmem:[#allocation2 + $0x10] sm:$0xff]
      %v2275 = vld [vmem:[#allocation2 + $0x18] sm:$0xff]
      %v2276 = vld [vmem:[#allocation2 + $0x20] sm:$0xff]
      %v2277 = vld [vmem:[#allocation2 + $0x28] sm:$0xff]
      %v2278 = vld [vmem:[#allocation2 + $0x30] sm:$0xff]
      %v2279 = vld [vmem:[#allocation2 + $0x38] sm:$0xff]
      %s2280 = scalar_lea.vmem %s258, 512
      %v2281 = vld [vmem:[%s2280] sm:$0xf]
      %v2282 = vld [vmem:[%s2280 + $0x4] sm:$0xf]
      %v2283 = vld [vmem:[%s2280 + $0x8] sm:$0xf]
      %v2284 = vld [vmem:[%s2280 + $0xc] sm:$0xf]
      %v2285 = vld [vmem:[%s2280 + $0x10] sm:$0xf]
      %v2286 = vld [vmem:[%s2280 + $0x14] sm:$0xf]
      %v2287 = vld [vmem:[%s2280 + $0x18] sm:$0xf]
      %v2288 = vld [vmem:[%s2280 + $0x1c] sm:$0xf]
      %v2289 = vld [vmem:[%s2280 + $0x20] sm:$0xf]
      %v2290 = vld [vmem:[%s2280 + $0x24] sm:$0xf]
      %v2291 = vld [vmem:[%s2280 + $0x28] sm:$0xf]
      %v2292 = vld [vmem:[%s2280 + $0x2c] sm:$0xf]
      %v2293 = vld [vmem:[%s2280 + $0x30] sm:$0xf]
      %v2294 = vld [vmem:[%s2280 + $0x34] sm:$0xf]
      %v2295 = vld [vmem:[%s2280 + $0x38] sm:$0xf]
      %v2296 = vld [vmem:[%s2280 + $0x3c] sm:$0xf]
      %v2297 = vunpack.c.l.b16 %v2243
      %v2298 = vunpack.c.l.b16 %v2247
      %v2299 = vunpack.c.l.b16 %v2251
      %v2300 = vunpack.c.l.b16 %v2255
      %v2301 = vunpack.c.l.b16 %v2259
      %v2302 = vunpack.c.l.b16 %v2263
      %v2303 = vunpack.c.l.b16 %v2267
      %v2304 = vunpack.c.l.b16 %v2271
      %v2305 = vpack.c.b16 %v2298, %v2297
      %v2306 = vpack.c.b16 %v2300, %v2299
      %v2307 = vpack.c.b16 %v2302, %v2301
      %v2308 = vpack.c.b16 %v2304, %v2303
      %v2329 = vunpack.c.l.b16 %v2281
      %v2330 = vunpack.c.l.b16 %v2282
      %v2331 = vunpack.c.l.b16 %v2283
      %v2332 = vunpack.c.l.b16 %v2284
      %v2333 = vunpack.c.l.b16 %v2285
      %v2334 = vunpack.c.l.b16 %v2286
      %v2335 = vunpack.c.l.b16 %v2287
      %v2336 = vunpack.c.l.b16 %v2288
      %v2337 = vunpack.c.l.b16 %v2289
      %v2338 = vunpack.c.l.b16 %v2290
      %v2339 = vunpack.c.l.b16 %v2291
      %v2340 = vunpack.c.l.b16 %v2292
      %v2341 = vunpack.c.l.b16 %v2293
      %v2342 = vunpack.c.l.b16 %v2294
      %v2343 = vunpack.c.l.b16 %v2295
      %v2344 = vunpack.c.l.b16 %v2296
      %v2345 = vpack.c.b16 %v2330, %v2329
      %v2346 = vpack.c.b16 %v2332, %v2331
      %v2347 = vpack.c.b16 %v2334, %v2333
      %v2348 = vpack.c.b16 %v2336, %v2335
      %v2349 = vpack.c.b16 %v2338, %v2337
      %v2350 = vpack.c.b16 %v2340, %v2339
      %v2351 = vpack.c.b16 %v2342, %v2341
      %v2352 = vpack.c.b16 %v2344, %v2343
      %2361 = vmatprep.subr.bf16.mxu0 0
      %2362 = vmatpush1.bf16.msra.mxu0 %v2345
      %2363 = vmatprep.subr.bf16.mxu0 0
      %2364 = vmatpush1.bf16.msra.mxu0 %v2346
      %2365 = vmatprep.subr.bf16.mxu0 0
      %2366 = vmatpush1.bf16.msra.mxu0 %v2347
      %2367 = vmatprep.subr.bf16.mxu0 0
      %2368 = vmatpush1.bf16.msra.mxu0 %v2348
      %2369 = vmatprep.subr.bf16.mxu0 0
      %2370 = vmatpush1.bf16.msra.mxu0 %v2349
      %2371 = vmatprep.subr.bf16.mxu0 0
      %2372 = vmatpush1.bf16.msra.mxu0 %v2350
      %2373 = vmatprep.subr.bf16.mxu0 0
      %2374 = vmatpush1.bf16.msra.mxu0 %v2351
      %2375 = vmatprep.subr.bf16.mxu0 0
      %2376 = vmatpush1.bf16.msra.mxu0 %v2352
      %2377 = vmatprep.subr.bf16.mxu0 0
      %2378 = vmatpush1.bf16.msra.mxu0 0
      %2379 = vmatprep.subr.bf16.mxu0 0
      %2380 = vmatpush1.bf16.msra.mxu0 0
      %2381 = vmatprep.subr.bf16.mxu0 0
      %2382 = vmatpush1.bf16.msra.mxu0 0
      %2383 = vmatprep.subr.bf16.mxu0 0
      %2384 = vmatpush1.bf16.msra.mxu0 0
      %2385 = vmatprep.subr.bf16.mxu0 0
      %2386 = vmatpush1.bf16.msra.mxu0 0
      %2387 = vmatprep.subr.bf16.mxu0 0
      %2388 = vmatpush1.bf16.msra.mxu0 0
      %2389 = vmatprep.subr.bf16.mxu0 0
      %2390 = vmatpush1.bf16.msra.mxu0 0
      %2391 = vmatprep.subr.bf16.mxu0 0
      %2392 = vmatpush1.bf16.msra.mxu0 0
      %2393 = vmatprep.mubr.bf16.mxu0 0
      %2394 = vmatmul.mubr.bf16.gmra.mrb[0].mxu0 %v2305
      %v2395 = vpop.f32.mrb[0].mxu0
      %v2396 = vadd.f32 0.0, %v2395
      %v2397 = vpop.f32.mrb[0].mxu0
      %v2398 = vpop.f32.mrb[0].mxu0
      %v2399 = vadd.f32 0.0, %v2398
      %v2400 = vpop.f32.mrb[0].mxu0
      %2401 = vmatprep.mubr.bf16.mxu0 0
      %2402 = vmatmul.mubr.bf16.gmra.mrb[0].mxu0 %v2306
      %v2403 = vpop.f32.mrb[0].mxu0
      %v2404 = vadd.f32 0.0, %v2403
      %v2405 = vpop.f32.mrb[0].mxu0
      %v2406 = vpop.f32.mrb[0].mxu0
      %v2407 = vadd.f32 0.0, %v2406
      %v2408 = vpop.f32.mrb[0].mxu0
      %2409 = vmatprep.mubr.bf16.mxu0 0
      %2410 = vmatmul.mubr.bf16.gmra.mrb[0].mxu0 %v2307
      %v2411 = vpop.f32.mrb[0].mxu0
      %v2412 = vadd.f32 0.0, %v2411
      %v2413 = vpop.f32.mrb[0].mxu0
      %v2414 = vpop.f32.mrb[0].mxu0
      %v2415 = vadd.f32 0.0, %v2414
      %v2416 = vpop.f32.mrb[0].mxu0
      %2417 = vmatprep.mubr.bf16.mxu0 0
      %2418 = vmatmul.mubr.bf16.gmra.mrb[0].mxu0 %v2308
      %v2419 = vpop.f32.mrb[0].mxu0
      %v2420 = vadd.f32 0.0, %v2419
      %v2421 = vpop.f32.mrb[0].mxu0
      %v2422 = vpop.f32.mrb[0].mxu0
      %v2423 = vadd.f32 0.0, %v2422
      %v2424 = vpop.f32.mrb[0].mxu0
      %2425 = vdwg.mxu0
      %v2426 = vadd.f32 %v2272, %v2396
      %v2427 = vadd.f32 %v2273, %v2399
      %v2428 = vadd.f32 %v2274, %v2404
      %v2429 = vadd.f32 %v2275, %v2407
      %v2430 = vadd.f32 %v2276, %v2412
      %v2431 = vadd.f32 %v2277, %v2415
      %v2432 = vadd.f32 %v2278, %v2420
      %v2433 = vadd.f32 %v2279, %v2423
      %2434 = vst [vmem:[#allocation2] sm:$0xff] %v2426
      %2435 = vst [vmem:[#allocation2 + $0x8] sm:$0xff] %v2427
      %2436 = vst [vmem:[#allocation2 + $0x10] sm:$0xff] %v2428
      %2437 = vst [vmem:[#allocation2 + $0x18] sm:$0xff] %v2429
      %2438 = vst [vmem:[#allocation2 + $0x20] sm:$0xff] %v2430
      %2439 = vst [vmem:[#allocation2 + $0x28] sm:$0xff] %v2431
      %2440 = vst [vmem:[#allocation2 + $0x30] sm:$0xff] %v2432
      %2441 = vst [vmem:[#allocation2 + $0x38] sm:$0xff] %v2433
      %p2442 = scmp.eq.s32.totalorder %s22, 2
      // Predicated region
      $region41: #{up_forward.5} parent=35 // pred_check
        %p2443 = pneg %p2442
      $region42: #{up_forward.5} parent=35 // pred_check_branch
        %2445 = sbr.rel (%p2443) target = $region44
      $region43: #{up_forward.5} parent=35 // pred_region
        %v2446 = vld [vmem:[#allocation2] sm:$0xff]
        %v2447 = vld [vmem:[#allocation2 + $0x8] sm:$0xff]
        %v2448 = vld [vmem:[#allocation2 + $0x10] sm:$0xff]
        %v2449 = vld [vmem:[#allocation2 + $0x18] sm:$0xff]
        %v2450 = vld [vmem:[#allocation2 + $0x20] sm:$0xff]
        %v2451 = vld [vmem:[#allocation2 + $0x28] sm:$0xff]
        %v2452 = vld [vmem:[#allocation2 + $0x30] sm:$0xff]
        %v2453 = vld [vmem:[#allocation2 + $0x38] sm:$0xff]
        %v2454 = vld [vmem:[%s2] sm:$0x1]
        %v2456 = vlaneseq
        %v2457 = vshrl.u32 %v2456, 7
        %v2458 = vsub.s32 0, %v2457
        %v2459 = vrot.slane %v2454, %v2458
        %v2461 = vmul.f32 %v2446, %v2459
        %v2462 = vmul.f32 %v2447, %v2459
        %v2463 = vmul.f32 %v2448, %v2459
        %v2464 = vmul.f32 %v2449, %v2459
        %v2465 = vmul.f32 %v2450, %v2459
        %v2466 = vmul.f32 %v2451, %v2459
        %v2467 = vmul.f32 %v2452, %v2459
        %v2468 = vmul.f32 %v2453, %v2459
        %v2469 = vld [vmem:[%s3] sm:$0x1]
        %v2471 = vlaneseq
        %v2472 = vshrl.u32 %v2471, 7
        %v2473 = vsub.s32 0, %v2472
        %v2474 = vrot.slane %v2469, %v2473
        %v2476 = vadd.f32 %v2461, %v2474
        %v2477 = vadd.f32 %v2462, %v2474
        %v2478 = vadd.f32 %v2463, %v2474
        %v2479 = vadd.f32 %v2464, %v2474
        %v2480 = vadd.f32 %v2465, %v2474
        %v2481 = vadd.f32 %v2466, %v2474
        %v2482 = vadd.f32 %v2467, %v2474
        %v2483 = vadd.f32 %v2468, %v2474
        %v2484 = vmax.f32 %v2476, 0.0
        %v2485 = vmax.f32 %v2477, 0.0
        %v2486 = vmax.f32 %v2478, 0.0
        %v2487 = vmax.f32 %v2479, 0.0
        %v2488 = vmax.f32 %v2480, 0.0
        %v2489 = vmax.f32 %v2481, 0.0
        %v2490 = vmax.f32 %v2482, 0.0
        %v2491 = vmax.f32 %v2483, 0.0
        %2492 = vst [vmem:[%s265] sm:$0xff] %v2484
        %2493 = vst [vmem:[%s265 + $0x8] sm:$0xff] %v2485
        %2494 = vst [vmem:[%s265 + $0x10] sm:$0xff] %v2486
        %2495 = vst [vmem:[%s265 + $0x18] sm:$0xff] %v2487
        %2496 = vst [vmem:[%s265 + $0x20] sm:$0xff] %v2488
        %2497 = vst [vmem:[%s265 + $0x28] sm:$0xff] %v2489
        %2498 = vst [vmem:[%s265 + $0x30] sm:$0xff] %v2490
        %2499 = vst [vmem:[%s265 + $0x38] sm:$0xff] %v2491
      $region44: #{up_forward.5} parent=35 // pred_fallthru
        _
      %s2500 = smul.u32 %s20, 8
      %s2501 = sadd.s32 %s2500, %s21
      %p2502 = scmp.lt.s32.totalorder %s2501, 15
      %s2503 = scalar_select %p2502, %s2501, 15
      %s2504 = smul.addr %s2503, 8
      %s2505 = smul.addr %s2504, 8
      %s2506 = scalar_lea.vmem %s4, %s2505
      // Predicated region
      $region45: #{up_forward.5} parent=35 // pred_check
        %p2507 = pneg %p156
      $region46: #{up_forward.5} parent=35 // pred_check_branch
        %2509 = sbr.rel (%p2507) target = $region48
      $region47: #{up_forward.5} parent=35 // pred_region
        %s2510 = smul.u32 %s20, 8
        %s2511 = sadd.s32 %s2510, %s21
      $region48: #{up_forward.5} parent=35 // pred_fallthru
        _
    $region36: #{up_forward.5} parent=5 // pred_fallthru
      _
    %p2512 = scmp.le.s32.totalorder 2, %s10
    // Predicated region
    $region49: #{up_forward.5} parent=5 // pred_check
      %p2513 = pneg %p2512
    $region50: #{up_forward.5} parent=5 // pred_check_branch
      %2515 = sbr.rel (%p2513) target = $region52
    $region51: #{up_forward.5} parent=5 // pred_region
      %s2516 = ssub.s32 %s10, 2
      // Predicated region
      $region53: #{up_forward.5} parent=51 // pred_check
        %p2517 = pneg %p162
      $region54: #{up_forward.5} parent=51 // pred_check_branch
        %2519 = sbr.rel (%p2517) target = $region56
      $region55: #{up_forward.5} parent=51 // pred_region
        %s2520 = smul.u32 %s23, 8
        %s2521 = sadd.s32 %s2520, %s24
        %p2522 = scmp.lt.s32.totalorder %s2521, 15
        %s2523 = scalar_select %p2522, %s2521, 15
        %s2524 = smul.addr %s2523, 8
        %s2525 = smul.addr %s2524, 8
        %s2526 = scalar_lea.vmem %s4, %s2525
      $region56: #{up_forward.5} parent=51 // pred_fallthru
        _
    $region52: #{up_forward.5} parent=5 // pred_fallthru
      _
  $region6: #{up_forward.5} parent=0 // loop_footer
    %s14 = sadd.s32 1, %s10
  $region7: #{up_forward.5} parent=0 // loop_footer_branch
    %9 = sbr.rel target = $region3
  $region8: #{up_forward.5} parent=0 // loop_exit
    _

</llo_original>
